<compile_context>
chip_gen: v5e
topology: v5e:2x2
jax: 0.10.0
libtpu: 0.0.40
codegen_flags: <defaults>
</compile_context>

<pallas_src>
import functools

import jax
import jax.numpy as jnp
from jax.experimental import pallas as pl
from jax.experimental.pallas import tpu as pltpu


# ----------------------------- Pallas kernel --------------------------------


def _gru_hofw_kernel(x_ref, wih1_ref, whh1_ref, b1_ref, bn1_ref,
                     wih2_ref, whh2_ref, b2_ref, bn2_ref,
                     wa1_ref, ba1_ref, lng_ref, lnb_ref, wa2_ref, ba2_ref,
                     xfw_ref, wfw_ref, bfw_ref,
                     y_ho_ref, y_fw_ref,
                     seq1_scr, seq2_scr, w_scr,
                     *, T, B):
    """Fused: GRU_D1 -> LN -> GRU_D2 -> LN -> Temp_AT softmax -> ReLU  (ho)
              Linear(T -> To) -> ReLU                                   (fw)

    All sequence data is flattened time-major: row index = t*B + b.
    """
    H1 = whh1_ref.shape[0]
    H2 = whh2_ref.shape[0]
    eps = 1e-5

    def layer_norm(v):
        mu = jnp.mean(v, axis=-1, keepdims=True)
        var = jnp.mean((v - mu) ** 2, axis=-1, keepdims=True)
        return (v - mu) * jax.lax.rsqrt(var + eps)

    # ---------------- MLP_fw branch (independent, fused in this call) -------
    y_fw_ref[...] = jnp.maximum(
        jnp.dot(xfw_ref[...], wfw_ref[...], preferred_element_type=jnp.float32)
        + bfw_ref[...], 0.0)

    # ---------------- GRU_D1: hoisted input projection (one tall matmul) ----
    gi1 = (jnp.dot(x_ref[...], wih1_ref[...],
                   preferred_element_type=jnp.float32) + b1_ref[...])   # (T*B, 3H1)

    whh1 = whh1_ref[...]
    bn1_b = jnp.broadcast_to(bn1_ref[...], (B, H1))    # hoisted broadcast
    h = jnp.zeros((B, H1), jnp.float32)
    for t in range(T):                                 # static unroll, T small
        gi = gi1[t * B:(t + 1) * B, :]
        gh = jnp.dot(h, whh1, preferred_element_type=jnp.float32)
        r = jax.nn.sigmoid(gi[:, 0:H1] + gh[:, 0:H1])
        zg = jax.nn.sigmoid(gi[:, H1:2 * H1] + gh[:, H1:2 * H1])
        n = jnp.tanh(gi[:, 2 * H1:] + r * (gh[:, 2 * H1:] + bn1_b))
        h = (1.0 - zg) * n + zg * h
        seq1_scr[pl.ds(t * B, B), :] = layer_norm(h)

    # ---------------- GRU_D2: hoisted input projection -----------------------
    gi2 = (jnp.dot(seq1_scr[...], wih2_ref[...],
                   preferred_element_type=jnp.float32) + b2_ref[...])   # (T*B, 3H2)

    whh2 = whh2_ref[...]
    bn2_b = jnp.broadcast_to(bn2_ref[...], (B, H2))    # hoisted broadcast
    h = jnp.zeros((B, H2), jnp.float32)
    for t in range(T):
        gi = gi2[t * B:(t + 1) * B, :]
        gh = jnp.dot(h, whh2, preferred_element_type=jnp.float32)
        r = jax.nn.sigmoid(gi[:, 0:H2] + gh[:, 0:H2])
        zg = jax.nn.sigmoid(gi[:, H2:2 * H2] + gh[:, H2:2 * H2])
        n = jnp.tanh(gi[:, 2 * H2:] + r * (gh[:, 2 * H2:] + bn2_b))
        h = (1.0 - zg) * n + zg * h
        seq2_scr[pl.ds(t * B, B), :] = layer_norm(h)

    # ------------- Temp_AT scoring MLP (one batched matmul, all timesteps) ---
    a = (jnp.dot(seq2_scr[...], wa1_ref[...],
                 preferred_element_type=jnp.float32) + ba1_ref[...])     # (T*B, Ca)
    a = layer_norm(a) * lng_ref[...] + lnb_ref[...]
    a = jnp.tanh(a)
    s = jnp.sum(a * wa2_ref[...], axis=-1, keepdims=True) + ba2_ref[...]  # (T*B, 1)

    # ------------- softmax over T, per batch row (kept in vregs) -------------
    m = s[0:B, :]
    for t in range(1, T):
        m = jnp.maximum(m, s[t * B:(t + 1) * B, :])
    zsum = jnp.zeros((B, 1), jnp.float32)
    e_list = []
    for t in range(T):
        e_t = jnp.exp(s[t * B:(t + 1) * B, :] - m)
        e_list.append(e_t)
        zsum = zsum + e_t
    zinv = 1.0 / zsum
    # tiny (B,1) scatter of the normalized weights (broadcast over time), then
    # one dense lane-broadcast multiply + ReLU store.
    for t in range(T):
        w_scr[pl.ds(t * B, B), :] = e_list[t] * zinv
    y_ho_ref[...] = jnp.maximum(w_scr[...] * seq2_scr[...], 0.0)


# ------------------------------ wrappers ------------------------------------


def _full_spec(shape):
    nd = len(shape)
    return pl.BlockSpec(tuple(shape), lambda i, nd=nd: (0,) * nd)


def _fold_gru_bias(bih, bhh, H):
    """Fold b_hh of the r/z gates into the hoisted input bias."""
    b = jnp.concatenate([bih[:, :2 * H] + bhh[:, :2 * H], bih[:, 2 * H:]], axis=-1)
    return b, bhh[:, 2 * H:]          # (1, 3H) hoisted bias, (1, H) n-gate hidden bias


def gru_hofw_forward(x_rec, x_rec_trsp, p):
    B, T, C = x_rec.shape
    Co = p['whh2'].shape[0]
    To = p['wfw'].shape[1]

    # time-major flatten (rows = t*B + b) so hoisted projections are 2-D matmuls
    x_flat = jnp.transpose(x_rec, (1, 0, 2)).reshape(T * B, C).astype(jnp.float32)
    # fw branch operates on (B*C, T) rows; the reshape is free (contiguous)
    x_fw = x_rec_trsp.reshape(B * C, T).astype(jnp.float32)

    b1, bn1 = _fold_gru_bias(p['bih1'], p['bhh1'], C)
    b2, bn2 = _fold_gru_bias(p['bih2'], p['bhh2'], Co)

    args = (x_flat, p['wih1'], p['whh1'], b1, bn1,
            p['wih2'], p['whh2'], b2, bn2,
            p['wa1'], p['ba1'], p['lng'], p['lnb'], p['wa2'], p['ba2'],
            x_fw, p['wfw'], p['bfw'])

    kernel = functools.partial(_gru_hofw_kernel, T=T, B=B)
    y_ho_flat, y_fw_flat = pl.pallas_call(
        kernel,
        out_shape=(jax.ShapeDtypeStruct((T * B, Co), jnp.float32),
                   jax.ShapeDtypeStruct((B * C, To), jnp.float32)),
        grid_spec=pltpu.PrefetchScalarGridSpec(
            num_scalar_prefetch=0,
            grid=(1,),
            in_specs=[_full_spec(a.shape) for a in args],
            out_specs=[_full_spec((T * B, Co)), _full_spec((B * C, To))],
            scratch_shapes=[
                pltpu.VMEM((T * B, C), jnp.float32),   # GRU_D1 output (post-LN)
                pltpu.VMEM((T * B, Co), jnp.float32),  # GRU_D2 output (post-LN)
                pltpu.VMEM((T * B, 1), jnp.float32),   # normalized attention weights
            ]),
        compiler_params=pltpu.CompilerParams(dimension_semantics=("arbitrary",)),
    )(*args)

    # back to PyTorch layouts (tiny wrapper-side copies at these shapes)
    x_rec_ho = jnp.transpose(y_ho_flat.reshape(T, B, Co), (1, 0, 2))   # (B, T, Co)
    x_rec_fw = y_fw_flat.reshape(B, C, To).transpose(0, 2, 1)          # (B, To, C)
    return x_rec_ho, x_rec_fw


# ------------------------- params + pure-JAX reference ----------------------


def init_params(key, T, C, To, Co):
    Ca = Co // 4
    ks = jax.random.split(key, 16)

    def u(k, shape, scale):
        return jax.random.uniform(k, shape, jnp.float32, -scale, scale)

    s1, s2 = C ** -0.5, Co ** -0.5
    return dict(
        wih1=u(ks[0], (C, 3 * C), s1), whh1=u(ks[1], (C, 3 * C), s1),
        bih1=u(ks[2], (1, 3 * C), s1), bhh1=u(ks[3], (1, 3 * C), s1),
        wih2=u(ks[4], (C, 3 * Co), s2), whh2=u(ks[5], (Co, 3 * Co), s2),
        bih2=u(ks[6], (1, 3 * Co), s2), bhh2=u(ks[7], (1, 3 * Co), s2),
        wa1=u(ks[8], (Co, Ca), s2), ba1=u(ks[9], (1, Ca), s2),
        lng=jnp.ones((1, Ca), jnp.float32), lnb=jnp.zeros((1, Ca), jnp.float32),
        wa2=u(ks[10], (1, Ca), Ca ** -0.5), ba2=u(ks[11], (1, 1), Ca ** -0.5),
        wfw=u(ks[12], (T, To), T ** -0.5), bfw=u(ks[13], (1, To), T ** -0.5),
    )


def _ref_gru(x, wih, whh, bih, bhh):
    B, T, _ = x.shape
    H = whh.shape[0]
    h = jnp.zeros((B, H), jnp.float32)
    outs = []
    for t in range(T):
        gi = x[:, t, :] @ wih + bih
        gh = h @ whh + bhh
        r = jax.nn.sigmoid(gi[:, :H] + gh[:, :H])
        z = jax.nn.sigmoid(gi[:, H:2 * H] + gh[:, H:2 * H])
        n = jnp.tanh(gi[:, 2 * H:] + r * gh[:, 2 * H:])
        h = (1.0 - z) * n + z * h
        outs.append(h)
    return jnp.stack(outs, axis=1)


def _ref_ln(v):
    mu = jnp.mean(v, axis=-1, keepdims=True)
    var = jnp.mean((v - mu) ** 2, axis=-1, keepdims=True)
    return (v - mu) / jnp.sqrt(var + 1e-5)


def ref_forward(x_rec, x_trsp, p):
    h1 = _ref_ln(_ref_gru(x_rec, p['wih1'], p['whh1'], p['bih1'], p['bhh1']))
    h2 = _ref_ln(_ref_gru(h1, p['wih2'], p['whh2'], p['bih2'], p['bhh2']))
    a = jnp.tanh(_ref_ln(h2 @ p['wa1'] + p['ba1']) * p['lng'] + p['lnb'])
    s = jnp.sum(a * p['wa2'][None, :, :], axis=-1) + p['ba2'][0, 0]      # (B, T)
    at = jax.nn.softmax(s, axis=-1)[..., None]
    ho = jnp.maximum(at * h2, 0.0)
    fw = jnp.maximum(x_trsp @ p['wfw'] + p['bfw'], 0.0).transpose(0, 2, 1)
    return ho, fw


# --------------------------------- main --------------------------------------


if __name__ == "__main__":
    B, T, C, To, Co, hT = 2, 8, 4, 6, 8, 16   # Co // 4 == 2 for Temp_AT hidden

    key = jax.random.PRNGKey(0)
    kx, kp = jax.random.split(key)
    x_rec = jax.random.normal(kx, (B, T, C), jnp.float32)          # (B, T, C)
    x_rec_trsp = jnp.transpose(x_rec, (0, 2, 1))                   # (B, C, T)
    params = init_params(kp, T, C, To, Co)

    ho, fw = gru_hofw_forward(x_rec, x_rec_trsp, params)
    jax.block_until_ready((ho, fw))

    ho_ref, fw_ref = ref_forward(x_rec, x_rec_trsp, params)
    assert ho.shape == (B, T, Co), ho.shape
    assert fw.shape == (B, To, C), fw.shape
    assert jnp.allclose(ho, ho_ref, atol=1e-4, rtol=1e-4), "ho branch mismatch"
    assert jnp.allclose(fw, fw_ref, atol=1e-4, rtol=1e-4), "fw branch mismatch"

    print("KERNEL_OK")
</pallas_src>

<mosaic_0001>
module attributes {stable_mosaic.version = 11 : i64} {
  func.func @_gru_hofw_kernel(%arg0: i32, %arg1: memref<16x4xf32, #tpu.memory_space<vmem>>, %arg2: memref<4x12xf32, #tpu.memory_space<vmem>>, %arg3: memref<4x12xf32, #tpu.memory_space<vmem>>, %arg4: memref<1x12xf32, #tpu.memory_space<vmem>>, %arg5: memref<1x4xf32, #tpu.memory_space<vmem>>, %arg6: memref<4x24xf32, #tpu.memory_space<vmem>>, %arg7: memref<8x24xf32, #tpu.memory_space<vmem>>, %arg8: memref<1x24xf32, #tpu.memory_space<vmem>>, %arg9: memref<1x8xf32, #tpu.memory_space<vmem>>, %arg10: memref<8x2xf32, #tpu.memory_space<vmem>>, %arg11: memref<1x2xf32, #tpu.memory_space<vmem>>, %arg12: memref<1x2xf32, #tpu.memory_space<vmem>>, %arg13: memref<1x2xf32, #tpu.memory_space<vmem>>, %arg14: memref<1x2xf32, #tpu.memory_space<vmem>>, %arg15: memref<1x1xf32, #tpu.memory_space<vmem>>, %arg16: memref<8x8xf32, #tpu.memory_space<vmem>>, %arg17: memref<8x6xf32, #tpu.memory_space<vmem>>, %arg18: memref<1x6xf32, #tpu.memory_space<vmem>>, %arg19: memref<16x8xf32, #tpu.memory_space<vmem>>, %arg20: memref<8x6xf32, #tpu.memory_space<vmem>>, %arg21: memref<16x4xf32, #tpu.memory_space<vmem>>, %arg22: memref<16x8xf32, #tpu.memory_space<vmem>>, %arg23: memref<16x1xf32, #tpu.memory_space<vmem>>) attributes {dimension_semantics = [#tpu.dimension_semantics<arbitrary>], iteration_bounds = array<i64: 1>, scalar_prefetch = 0 : i64, scratch_operands = 3 : i64, tpu.core_type = #tpu.core_type<tc>, window_params = [{pipeline_mode = #tpu.pipeline_mode<synchronous>, transform_indices = @transform_0, window_bounds = array<i64: 16, 4>}, {pipeline_mode = #tpu.pipeline_mode<synchronous>, transform_indices = @transform_1, window_bounds = array<i64: 4, 12>}, {pipeline_mode = #tpu.pipeline_mode<synchronous>, transform_indices = @transform_2, window_bounds = array<i64: 4, 12>}, {pipeline_mode = #tpu.pipeline_mode<synchronous>, transform_indices = @transform_3, window_bounds = array<i64: 1, 12>}, {pipeline_mode = #tpu.pipeline_mode<synchronous>, transform_indices = @transform_4, window_bounds = array<i64: 1, 4>}, {pipeline_mode = #tpu.pipeline_mode<synchronous>, transform_indices = @transform_5, window_bounds = array<i64: 4, 24>}, {pipeline_mode = #tpu.pipeline_mode<synchronous>, transform_indices = @transform_6, window_bounds = array<i64: 8, 24>}, {pipeline_mode = #tpu.pipeline_mode<synchronous>, transform_indices = @transform_7, window_bounds = array<i64: 1, 24>}, {pipeline_mode = #tpu.pipeline_mode<synchronous>, transform_indices = @transform_8, window_bounds = array<i64: 1, 8>}, {pipeline_mode = #tpu.pipeline_mode<synchronous>, transform_indices = @transform_9, window_bounds = array<i64: 8, 2>}, {pipeline_mode = #tpu.pipeline_mode<synchronous>, transform_indices = @transform_10, window_bounds = array<i64: 1, 2>}, {pipeline_mode = #tpu.pipeline_mode<synchronous>, transform_indices = @transform_11, window_bounds = array<i64: 1, 2>}, {pipeline_mode = #tpu.pipeline_mode<synchronous>, transform_indices = @transform_12, window_bounds = array<i64: 1, 2>}, {pipeline_mode = #tpu.pipeline_mode<synchronous>, transform_indices = @transform_13, window_bounds = array<i64: 1, 2>}, {pipeline_mode = #tpu.pipeline_mode<synchronous>, transform_indices = @transform_14, window_bounds = array<i64: 1, 1>}, {pipeline_mode = #tpu.pipeline_mode<synchronous>, transform_indices = @transform_15, window_bounds = array<i64: 8, 8>}, {pipeline_mode = #tpu.pipeline_mode<synchronous>, transform_indices = @transform_16, window_bounds = array<i64: 8, 6>}, {pipeline_mode = #tpu.pipeline_mode<synchronous>, transform_indices = @transform_17, window_bounds = array<i64: 1, 6>}, {pipeline_mode = #tpu.pipeline_mode<synchronous>, transform_indices = @transform_18, window_bounds = array<i64: 16, 8>}, {pipeline_mode = #tpu.pipeline_mode<synchronous>, transform_indices = @transform_19, window_bounds = array<i64: 8, 6>}]} {
    %c0 = arith.constant 0 : index
    %c0_0 = arith.constant 0 : index
    %0 = vector.load %arg16[%c0, %c0_0] : memref<8x8xf32, #tpu.memory_space<vmem>>, vector<8x8xf32>
    %c0_1 = arith.constant 0 : index
    %c0_2 = arith.constant 0 : index
    %1 = vector.load %arg17[%c0_1, %c0_2] : memref<8x6xf32, #tpu.memory_space<vmem>>, vector<8x6xf32>
    %cst = arith.constant dense<0.000000e+00> : vector<8x6xf32>
    %2 = tpu.matmul %0, %1, %cst {dimension_numbers = #tpu.dot_dimension_numbers<[1], [0], [0], [1], [0, 0, 1, 1], [], []>} : vector<8x8xf32>, vector<8x6xf32>, vector<8x6xf32> -> vector<8x6xf32>
    %c0_3 = arith.constant 0 : index
    %c0_4 = arith.constant 0 : index
    %3 = vector.load %arg18[%c0_3, %c0_4] : memref<1x6xf32, #tpu.memory_space<vmem>>, vector<1x6xf32>
    %4 = vector.broadcast %3 : vector<1x6xf32> to vector<8x6xf32>
    %5 = arith.addf %2, %4 : vector<8x6xf32>
    %cst_5 = arith.constant 0.000000e+00 : f32
    %6 = vector.broadcast %cst_5 : f32 to vector<8x6xf32>
    %7 = arith.maximumf %5, %6 : vector<8x6xf32>
    %c0_6 = arith.constant 0 : index
    %c0_7 = arith.constant 0 : index
    %8 = vector.load %arg20[%c0_6, %c0_7] : memref<8x6xf32, #tpu.memory_space<vmem>>, vector<8x6xf32>
    tpu.vector_store %arg20[%c0_6, %c0_7], %7 {strides = array<i32>} : memref<8x6xf32, #tpu.memory_space<vmem>>, vector<8x6xf32>,
    %c0_8 = arith.constant 0 : index
    %c0_9 = arith.constant 0 : index
    %9 = vector.load %arg1[%c0_8, %c0_9] : memref<16x4xf32, #tpu.memory_space<vmem>>, vector<16x4xf32>
    %c0_10 = arith.constant 0 : index
    %c0_11 = arith.constant 0 : index
    %10 = vector.load %arg2[%c0_10, %c0_11] : memref<4x12xf32, #tpu.memory_space<vmem>>, vector<4x12xf32>
    %cst_12 = arith.constant dense<0.000000e+00> : vector<16x12xf32>
    %11 = tpu.matmul %9, %10, %cst_12 {dimension_numbers = #tpu.dot_dimension_numbers<[1], [0], [0], [1], [0, 0, 1, 1], [], []>} : vector<16x4xf32>, vector<4x12xf32>, vector<16x12xf32> -> vector<16x12xf32>
    %c0_13 = arith.constant 0 : index
    %c0_14 = arith.constant 0 : index
    %12 = vector.load %arg4[%c0_13, %c0_14] : memref<1x12xf32, #tpu.memory_space<vmem>>, vector<1x12xf32>
    %13 = vector.broadcast %12 : vector<1x12xf32> to vector<16x12xf32>
    %14 = arith.addf %11, %13 : vector<16x12xf32>
    %c0_15 = arith.constant 0 : index
    %c0_16 = arith.constant 0 : index
    %15 = vector.load %arg3[%c0_15, %c0_16] : memref<4x12xf32, #tpu.memory_space<vmem>>, vector<4x12xf32>
    %c0_17 = arith.constant 0 : index
    %c0_18 = arith.constant 0 : index
    %16 = vector.load %arg5[%c0_17, %c0_18] : memref<1x4xf32, #tpu.memory_space<vmem>>, vector<1x4xf32>
    %17 = vector.shape_cast %16 : vector<1x4xf32> to vector<1x4xf32>
    %18 = vector.broadcast %17 : vector<1x4xf32> to vector<2x4xf32>
    %cst_19 = arith.constant 0.000000e+00 : f32
    %19 = vector.broadcast %cst_19 : f32 to vector<2x4xf32>
    %20 = vector.extract_strided_slice %14 {offsets = [0, 0], sizes = [2, 12], strides = [1, 1]} : vector<16x12xf32> to vector<2x12xf32>
    %cst_20 = arith.constant dense<0.000000e+00> : vector<2x12xf32>
    %21 = tpu.matmul %19, %15, %cst_20 {dimension_numbers = #tpu.dot_dimension_numbers<[1], [0], [0], [1], [0, 0, 1, 1], [], []>} : vector<2x4xf32>, vector<4x12xf32>, vector<2x12xf32> -> vector<2x12xf32>
    %22 = vector.extract_strided_slice %20 {offsets = [0, 0], sizes = [2, 4], strides = [1, 1]} : vector<2x12xf32> to vector<2x4xf32>
    %23 = vector.extract_strided_slice %21 {offsets = [0, 0], sizes = [2, 4], strides = [1, 1]} : vector<2x12xf32> to vector<2x4xf32>
    %24 = arith.addf %22, %23 : vector<2x4xf32>
    %25 = arith.negf %24 : vector<2x4xf32>
    %26 = math.exp %25 : vector<2x4xf32>
    %cst_21 = arith.constant 1.000000e+00 : f32
    %27 = vector.broadcast %cst_21 : f32 to vector<2x4xf32>
    %28 = arith.addf %27, %26 : vector<2x4xf32>
    %29 = arith.divf %27, %28 : vector<2x4xf32>
    %30 = vector.extract_strided_slice %20 {offsets = [0, 4], sizes = [2, 4], strides = [1, 1]} : vector<2x12xf32> to vector<2x4xf32>
    %31 = vector.extract_strided_slice %21 {offsets = [0, 4], sizes = [2, 4], strides = [1, 1]} : vector<2x12xf32> to vector<2x4xf32>
    %32 = arith.addf %30, %31 : vector<2x4xf32>
    %33 = arith.negf %32 : vector<2x4xf32>
    %34 = math.exp %33 : vector<2x4xf32>
    %cst_22 = arith.constant 1.000000e+00 : f32
    %35 = vector.broadcast %cst_22 : f32 to vector<2x4xf32>
    %36 = arith.addf %35, %34 : vector<2x4xf32>
    %37 = arith.divf %35, %36 : vector<2x4xf32>
    %38 = vector.extract_strided_slice %20 {offsets = [0, 8], sizes = [2, 4], strides = [1, 1]} : vector<2x12xf32> to vector<2x4xf32>
    %39 = vector.extract_strided_slice %21 {offsets = [0, 8], sizes = [2, 4], strides = [1, 1]} : vector<2x12xf32> to vector<2x4xf32>
    %40 = arith.addf %39, %18 : vector<2x4xf32>
    %41 = arith.mulf %29, %40 : vector<2x4xf32>
    %42 = arith.addf %38, %41 : vector<2x4xf32>
    %43 = math.tanh %42 : vector<2x4xf32>
    %cst_23 = arith.constant 1.000000e+00 : f32
    %44 = vector.broadcast %cst_23 : f32 to vector<2x4xf32>
    %45 = arith.subf %44, %37 : vector<2x4xf32>
    %46 = arith.mulf %45, %43 : vector<2x4xf32>
    %47 = arith.mulf %37, %19 : vector<2x4xf32>
    %48 = arith.addf %46, %47 : vector<2x4xf32>
    %cst_24 = arith.constant dense<0.000000e+00> : vector<2xf32>
    %49 = vector.multi_reduction <add>, %48, %cst_24 [1] : vector<2x4xf32> to vector<2xf32>
    %50 = vector.shape_cast %49 : vector<2xf32> to vector<2x1xf32>
    %cst_25 = arith.constant 4.000000e+00 : f32
    %51 = vector.broadcast %cst_25 : f32 to vector<2x1xf32>
    %52 = arith.divf %50, %51 : vector<2x1xf32>
    %53 = vector.broadcast %52 : vector<2x1xf32> to vector<2x4xf32>
    %54 = arith.subf %48, %53 : vector<2x4xf32>
    %55 = arith.mulf %54, %54 : vector<2x4xf32>
    %cst_26 = arith.constant dense<0.000000e+00> : vector<2xf32>
    %56 = vector.multi_reduction <add>, %55, %cst_26 [1] : vector<2x4xf32> to vector<2xf32>
    %57 = vector.shape_cast %56 : vector<2xf32> to vector<2x1xf32>
    %cst_27 = arith.constant 4.000000e+00 : f32
    %58 = vector.broadcast %cst_27 : f32 to vector<2x1xf32>
    %59 = arith.divf %57, %58 : vector<2x1xf32>
    %60 = vector.broadcast %52 : vector<2x1xf32> to vector<2x4xf32>
    %61 = arith.subf %48, %60 : vector<2x4xf32>
    %cst_28 = arith.constant 9.99999974E-6 : f32
    %62 = vector.broadcast %cst_28 : f32 to vector<2x1xf32>
    %63 = arith.addf %59, %62 : vector<2x1xf32>
    %64 = math.rsqrt %63 : vector<2x1xf32>
    %65 = vector.broadcast %64 : vector<2x1xf32> to vector<2x4xf32>
    %66 = arith.mulf %61, %65 : vector<2x4xf32>
    %c0_29 = arith.constant 0 : index
    %c0_30 = arith.constant 0 : index
    %67 = vector.load %arg21[%c0_29, %c0_30] : memref<16x4xf32, #tpu.memory_space<vmem>>, vector<2x4xf32>
    tpu.vector_store %arg21[%c0_29, %c0_30], %66 {strides = array<i32>} : memref<16x4xf32, #tpu.memory_space<vmem>>, vector<2x4xf32>,
    %68 = vector.extract_strided_slice %14 {offsets = [2, 0], sizes = [2, 12], strides = [1, 1]} : vector<16x12xf32> to vector<2x12xf32>
    %cst_31 = arith.constant dense<0.000000e+00> : vector<2x12xf32>
    %69 = tpu.matmul %48, %15, %cst_31 {dimension_numbers = #tpu.dot_dimension_numbers<[1], [0], [0], [1], [0, 0, 1, 1], [], []>} : vector<2x4xf32>, vector<4x12xf32>, vector<2x12xf32> -> vector<2x12xf32>
    %70 = vector.extract_strided_slice %68 {offsets = [0, 0], sizes = [2, 4], strides = [1, 1]} : vector<2x12xf32> to vector<2x4xf32>
    %71 = vector.extract_strided_slice %69 {offsets = [0, 0], sizes = [2, 4], strides = [1, 1]} : vector<2x12xf32> to vector<2x4xf32>
    %72 = arith.addf %70, %71 : vector<2x4xf32>
    %73 = arith.negf %72 : vector<2x4xf32>
    %74 = math.exp %73 : vector<2x4xf32>
    %cst_32 = arith.constant 1.000000e+00 : f32
    %75 = vector.broadcast %cst_32 : f32 to vector<2x4xf32>
    %76 = arith.addf %75, %74 : vector<2x4xf32>
    %77 = arith.divf %75, %76 : vector<2x4xf32>
    %78 = vector.extract_strided_slice %68 {offsets = [0, 4], sizes = [2, 4], strides = [1, 1]} : vector<2x12xf32> to vector<2x4xf32>
    %79 = vector.extract_strided_slice %69 {offsets = [0, 4], sizes = [2, 4], strides = [1, 1]} : vector<2x12xf32> to vector<2x4xf32>
    %80 = arith.addf %78, %79 : vector<2x4xf32>
    %81 = arith.negf %80 : vector<2x4xf32>
    %82 = math.exp %81 : vector<2x4xf32>
    %cst_33 = arith.constant 1.000000e+00 : f32
    %83 = vector.broadcast %cst_33 : f32 to vector<2x4xf32>
    %84 = arith.addf %83, %82 : vector<2x4xf32>
    %85 = arith.divf %83, %84 : vector<2x4xf32>
    %86 = vector.extract_strided_slice %68 {offsets = [0, 8], sizes = [2, 4], strides = [1, 1]} : vector<2x12xf32> to vector<2x4xf32>
    %87 = vector.extract_strided_slice %69 {offsets = [0, 8], sizes = [2, 4], strides = [1, 1]} : vector<2x12xf32> to vector<2x4xf32>
    %88 = arith.addf %87, %18 : vector<2x4xf32>
    %89 = arith.mulf %77, %88 : vector<2x4xf32>
    %90 = arith.addf %86, %89 : vector<2x4xf32>
    %91 = math.tanh %90 : vector<2x4xf32>
    %cst_34 = arith.constant 1.000000e+00 : f32
    %92 = vector.broadcast %cst_34 : f32 to vector<2x4xf32>
    %93 = arith.subf %92, %85 : vector<2x4xf32>
    %94 = arith.mulf %93, %91 : vector<2x4xf32>
    %95 = arith.mulf %85, %48 : vector<2x4xf32>
    %96 = arith.addf %94, %95 : vector<2x4xf32>
    %cst_35 = arith.constant dense<0.000000e+00> : vector<2xf32>
    %97 = vector.multi_reduction <add>, %96, %cst_35 [1] : vector<2x4xf32> to vector<2xf32>
    %98 = vector.shape_cast %97 : vector<2xf32> to vector<2x1xf32>
    %cst_36 = arith.constant 4.000000e+00 : f32
    %99 = vector.broadcast %cst_36 : f32 to vector<2x1xf32>
    %100 = arith.divf %98, %99 : vector<2x1xf32>
    %101 = vector.broadcast %100 : vector<2x1xf32> to vector<2x4xf32>
    %102 = arith.subf %96, %101 : vector<2x4xf32>
    %103 = arith.mulf %102, %102 : vector<2x4xf32>
    %cst_37 = arith.constant dense<0.000000e+00> : vector<2xf32>
    %104 = vector.multi_reduction <add>, %103, %cst_37 [1] : vector<2x4xf32> to vector<2xf32>
    %105 = vector.shape_cast %104 : vector<2xf32> to vector<2x1xf32>
    %cst_38 = arith.constant 4.000000e+00 : f32
    %106 = vector.broadcast %cst_38 : f32 to vector<2x1xf32>
    %107 = arith.divf %105, %106 : vector<2x1xf32>
    %108 = vector.broadcast %100 : vector<2x1xf32> to vector<2x4xf32>
    %109 = arith.subf %96, %108 : vector<2x4xf32>
    %cst_39 = arith.constant 9.99999974E-6 : f32
    %110 = vector.broadcast %cst_39 : f32 to vector<2x1xf32>
    %111 = arith.addf %107, %110 : vector<2x1xf32>
    %112 = math.rsqrt %111 : vector<2x1xf32>
    %113 = vector.broadcast %112 : vector<2x1xf32> to vector<2x4xf32>
    %114 = arith.mulf %109, %113 : vector<2x4xf32>
    %c2 = arith.constant 2 : index
    %c0_40 = arith.constant 0 : index
    %115 = vector.load %arg21[%c2, %c0_40] : memref<16x4xf32, #tpu.memory_space<vmem>>, vector<2x4xf32>
    tpu.vector_store %arg21[%c2, %c0_40], %114 {strides = array<i32>} : memref<16x4xf32, #tpu.memory_space<vmem>>, vector<2x4xf32>,
    %116 = vector.extract_strided_slice %14 {offsets = [4, 0], sizes = [2, 12], strides = [1, 1]} : vector<16x12xf32> to vector<2x12xf32>
    %cst_41 = arith.constant dense<0.000000e+00> : vector<2x12xf32>
    %117 = tpu.matmul %96, %15, %cst_41 {dimension_numbers = #tpu.dot_dimension_numbers<[1], [0], [0], [1], [0, 0, 1, 1], [], []>} : vector<2x4xf32>, vector<4x12xf32>, vector<2x12xf32> -> vector<2x12xf32>
    %118 = vector.extract_strided_slice %116 {offsets = [0, 0], sizes = [2, 4], strides = [1, 1]} : vector<2x12xf32> to vector<2x4xf32>
    %119 = vector.extract_strided_slice %117 {offsets = [0, 0], sizes = [2, 4], strides = [1, 1]} : vector<2x12xf32> to vector<2x4xf32>
    %120 = arith.addf %118, %119 : vector<2x4xf32>
    %121 = arith.negf %120 : vector<2x4xf32>
    %122 = math.exp %121 : vector<2x4xf32>
    %cst_42 = arith.constant 1.000000e+00 : f32
    %123 = vector.broadcast %cst_42 : f32 to vector<2x4xf32>
    %124 = arith.addf %123, %122 : vector<2x4xf32>
    %125 = arith.divf %123, %124 : vector<2x4xf32>
    %126 = vector.extract_strided_slice %116 {offsets = [0, 4], sizes = [2, 4], strides = [1, 1]} : vector<2x12xf32> to vector<2x4xf32>
    %127 = vector.extract_strided_slice %117 {offsets = [0, 4], sizes = [2, 4], strides = [1, 1]} : vector<2x12xf32> to vector<2x4xf32>
    %128 = arith.addf %126, %127 : vector<2x4xf32>
    %129 = arith.negf %128 : vector<2x4xf32>
    %130 = math.exp %129 : vector<2x4xf32>
    %cst_43 = arith.constant 1.000000e+00 : f32
    %131 = vector.broadcast %cst_43 : f32 to vector<2x4xf32>
    %132 = arith.addf %131, %130 : vector<2x4xf32>
    %133 = arith.divf %131, %132 : vector<2x4xf32>
    %134 = vector.extract_strided_slice %116 {offsets = [0, 8], sizes = [2, 4], strides = [1, 1]} : vector<2x12xf32> to vector<2x4xf32>
    %135 = vector.extract_strided_slice %117 {offsets = [0, 8], sizes = [2, 4], strides = [1, 1]} : vector<2x12xf32> to vector<2x4xf32>
    %136 = arith.addf %135, %18 : vector<2x4xf32>
    %137 = arith.mulf %125, %136 : vector<2x4xf32>
    %138 = arith.addf %134, %137 : vector<2x4xf32>
    %139 = math.tanh %138 : vector<2x4xf32>
    %cst_44 = arith.constant 1.000000e+00 : f32
    %140 = vector.broadcast %cst_44 : f32 to vector<2x4xf32>
    %141 = arith.subf %140, %133 : vector<2x4xf32>
    %142 = arith.mulf %141, %139 : vector<2x4xf32>
    %143 = arith.mulf %133, %96 : vector<2x4xf32>
    %144 = arith.addf %142, %143 : vector<2x4xf32>
    %cst_45 = arith.constant dense<0.000000e+00> : vector<2xf32>
    %145 = vector.multi_reduction <add>, %144, %cst_45 [1] : vector<2x4xf32> to vector<2xf32>
    %146 = vector.shape_cast %145 : vector<2xf32> to vector<2x1xf32>
    %cst_46 = arith.constant 4.000000e+00 : f32
    %147 = vector.broadcast %cst_46 : f32 to vector<2x1xf32>
    %148 = arith.divf %146, %147 : vector<2x1xf32>
    %149 = vector.broadcast %148 : vector<2x1xf32> to vector<2x4xf32>
    %150 = arith.subf %144, %149 : vector<2x4xf32>
    %151 = arith.mulf %150, %150 : vector<2x4xf32>
    %cst_47 = arith.constant dense<0.000000e+00> : vector<2xf32>
    %152 = vector.multi_reduction <add>, %151, %cst_47 [1] : vector<2x4xf32> to vector<2xf32>
    %153 = vector.shape_cast %152 : vector<2xf32> to vector<2x1xf32>
    %cst_48 = arith.constant 4.000000e+00 : f32
    %154 = vector.broadcast %cst_48 : f32 to vector<2x1xf32>
    %155 = arith.divf %153, %154 : vector<2x1xf32>
    %156 = vector.broadcast %148 : vector<2x1xf32> to vector<2x4xf32>
    %157 = arith.subf %144, %156 : vector<2x4xf32>
    %cst_49 = arith.constant 9.99999974E-6 : f32
    %158 = vector.broadcast %cst_49 : f32 to vector<2x1xf32>
    %159 = arith.addf %155, %158 : vector<2x1xf32>
    %160 = math.rsqrt %159 : vector<2x1xf32>
    %161 = vector.broadcast %160 : vector<2x1xf32> to vector<2x4xf32>
    %162 = arith.mulf %157, %161 : vector<2x4xf32>
    %c4 = arith.constant 4 : index
    %c0_50 = arith.constant 0 : index
    %163 = vector.load %arg21[%c4, %c0_50] : memref<16x4xf32, #tpu.memory_space<vmem>>, vector<2x4xf32>
    tpu.vector_store %arg21[%c4, %c0_50], %162 {strides = array<i32>} : memref<16x4xf32, #tpu.memory_space<vmem>>, vector<2x4xf32>,
    %164 = vector.extract_strided_slice %14 {offsets = [6, 0], sizes = [2, 12], strides = [1, 1]} : vector<16x12xf32> to vector<2x12xf32>
    %cst_51 = arith.constant dense<0.000000e+00> : vector<2x12xf32>
    %165 = tpu.matmul %144, %15, %cst_51 {dimension_numbers = #tpu.dot_dimension_numbers<[1], [0], [0], [1], [0, 0, 1, 1], [], []>} : vector<2x4xf32>, vector<4x12xf32>, vector<2x12xf32> -> vector<2x12xf32>
    %166 = vector.extract_strided_slice %164 {offsets = [0, 0], sizes = [2, 4], strides = [1, 1]} : vector<2x12xf32> to vector<2x4xf32>
    %167 = vector.extract_strided_slice %165 {offsets = [0, 0], sizes = [2, 4], strides = [1, 1]} : vector<2x12xf32> to vector<2x4xf32>
    %168 = arith.addf %166, %167 : vector<2x4xf32>
    %169 = arith.negf %168 : vector<2x4xf32>
    %170 = math.exp %169 : vector<2x4xf32>
    %cst_52 = arith.constant 1.000000e+00 : f32
    %171 = vector.broadcast %cst_52 : f32 to vector<2x4xf32>
    %172 = arith.addf %171, %170 : vector<2x4xf32>
    %173 = arith.divf %171, %172 : vector<2x4xf32>
    %174 = vector.extract_strided_slice %164 {offsets = [0, 4], sizes = [2, 4], strides = [1, 1]} : vector<2x12xf32> to vector<2x4xf32>
    %175 = vector.extract_strided_slice %165 {offsets = [0, 4], sizes = [2, 4], strides = [1, 1]} : vector<2x12xf32> to vector<2x4xf32>
    %176 = arith.addf %174, %175 : vector<2x4xf32>
    %177 = arith.negf %176 : vector<2x4xf32>
    %178 = math.exp %177 : vector<2x4xf32>
    %cst_53 = arith.constant 1.000000e+00 : f32
    %179 = vector.broadcast %cst_53 : f32 to vector<2x4xf32>
    %180 = arith.addf %179, %178 : vector<2x4xf32>
    %181 = arith.divf %179, %180 : vector<2x4xf32>
    %182 = vector.extract_strided_slice %164 {offsets = [0, 8], sizes = [2, 4], strides = [1, 1]} : vector<2x12xf32> to vector<2x4xf32>
    %183 = vector.extract_strided_slice %165 {offsets = [0, 8], sizes = [2, 4], strides = [1, 1]} : vector<2x12xf32> to vector<2x4xf32>
    %184 = arith.addf %183, %18 : vector<2x4xf32>
    %185 = arith.mulf %173, %184 : vector<2x4xf32>
    %186 = arith.addf %182, %185 : vector<2x4xf32>
    %187 = math.tanh %186 : vector<2x4xf32>
    %cst_54 = arith.constant 1.000000e+00 : f32
    %188 = vector.broadcast %cst_54 : f32 to vector<2x4xf32>
    %189 = arith.subf %188, %181 : vector<2x4xf32>
    %190 = arith.mulf %189, %187 : vector<2x4xf32>
    %191 = arith.mulf %181, %144 : vector<2x4xf32>
    %192 = arith.addf %190, %191 : vector<2x4xf32>
    %cst_55 = arith.constant dense<0.000000e+00> : vector<2xf32>
    %193 = vector.multi_reduction <add>, %192, %cst_55 [1] : vector<2x4xf32> to vector<2xf32>
    %194 = vector.shape_cast %193 : vector<2xf32> to vector<2x1xf32>
    %cst_56 = arith.constant 4.000000e+00 : f32
    %195 = vector.broadcast %cst_56 : f32 to vector<2x1xf32>
    %196 = arith.divf %194, %195 : vector<2x1xf32>
    %197 = vector.broadcast %196 : vector<2x1xf32> to vector<2x4xf32>
    %198 = arith.subf %192, %197 : vector<2x4xf32>
    %199 = arith.mulf %198, %198 : vector<2x4xf32>
    %cst_57 = arith.constant dense<0.000000e+00> : vector<2xf32>
    %200 = vector.multi_reduction <add>, %199, %cst_57 [1] : vector<2x4xf32> to vector<2xf32>
    %201 = vector.shape_cast %200 : vector<2xf32> to vector<2x1xf32>
    %cst_58 = arith.constant 4.000000e+00 : f32
    %202 = vector.broadcast %cst_58 : f32 to vector<2x1xf32>
    %203 = arith.divf %201, %202 : vector<2x1xf32>
    %204 = vector.broadcast %196 : vector<2x1xf32> to vector<2x4xf32>
    %205 = arith.subf %192, %204 : vector<2x4xf32>
    %cst_59 = arith.constant 9.99999974E-6 : f32
    %206 = vector.broadcast %cst_59 : f32 to vector<2x1xf32>
    %207 = arith.addf %203, %206 : vector<2x1xf32>
    %208 = math.rsqrt %207 : vector<2x1xf32>
    %209 = vector.broadcast %208 : vector<2x1xf32> to vector<2x4xf32>
    %210 = arith.mulf %205, %209 : vector<2x4xf32>
    %c6 = arith.constant 6 : index
    %c0_60 = arith.constant 0 : index
    %211 = vector.load %arg21[%c6, %c0_60] : memref<16x4xf32, #tpu.memory_space<vmem>>, vector<2x4xf32>
    tpu.vector_store %arg21[%c6, %c0_60], %210 {strides = array<i32>} : memref<16x4xf32, #tpu.memory_space<vmem>>, vector<2x4xf32>,
    %212 = vector.extract_strided_slice %14 {offsets = [8, 0], sizes = [2, 12], strides = [1, 1]} : vector<16x12xf32> to vector<2x12xf32>
    %cst_61 = arith.constant dense<0.000000e+00> : vector<2x12xf32>
    %213 = tpu.matmul %192, %15, %cst_61 {dimension_numbers = #tpu.dot_dimension_numbers<[1], [0], [0], [1], [0, 0, 1, 1], [], []>} : vector<2x4xf32>, vector<4x12xf32>, vector<2x12xf32> -> vector<2x12xf32>
    %214 = vector.extract_strided_slice %212 {offsets = [0, 0], sizes = [2, 4], strides = [1, 1]} : vector<2x12xf32> to vector<2x4xf32>
    %215 = vector.extract_strided_slice %213 {offsets = [0, 0], sizes = [2, 4], strides = [1, 1]} : vector<2x12xf32> to vector<2x4xf32>
    %216 = arith.addf %214, %215 : vector<2x4xf32>
    %217 = arith.negf %216 : vector<2x4xf32>
    %218 = math.exp %217 : vector<2x4xf32>
    %cst_62 = arith.constant 1.000000e+00 : f32
    %219 = vector.broadcast %cst_62 : f32 to vector<2x4xf32>
    %220 = arith.addf %219, %218 : vector<2x4xf32>
    %221 = arith.divf %219, %220 : vector<2x4xf32>
    %222 = vector.extract_strided_slice %212 {offsets = [0, 4], sizes = [2, 4], strides = [1, 1]} : vector<2x12xf32> to vector<2x4xf32>
    %223 = vector.extract_strided_slice %213 {offsets = [0, 4], sizes = [2, 4], strides = [1, 1]} : vector<2x12xf32> to vector<2x4xf32>
    %224 = arith.addf %222, %223 : vector<2x4xf32>
    %225 = arith.negf %224 : vector<2x4xf32>
    %226 = math.exp %225 : vector<2x4xf32>
    %cst_63 = arith.constant 1.000000e+00 : f32
    %227 = vector.broadcast %cst_63 : f32 to vector<2x4xf32>
    %228 = arith.addf %227, %226 : vector<2x4xf32>
    %229 = arith.divf %227, %228 : vector<2x4xf32>
    %230 = vector.extract_strided_slice %212 {offsets = [0, 8], sizes = [2, 4], strides = [1, 1]} : vector<2x12xf32> to vector<2x4xf32>
    %231 = vector.extract_strided_slice %213 {offsets = [0, 8], sizes = [2, 4], strides = [1, 1]} : vector<2x12xf32> to vector<2x4xf32>
    %232 = arith.addf %231, %18 : vector<2x4xf32>
    %233 = arith.mulf %221, %232 : vector<2x4xf32>
    %234 = arith.addf %230, %233 : vector<2x4xf32>
    %235 = math.tanh %234 : vector<2x4xf32>
    %cst_64 = arith.constant 1.000000e+00 : f32
    %236 = vector.broadcast %cst_64 : f32 to vector<2x4xf32>
    %237 = arith.subf %236, %229 : vector<2x4xf32>
    %238 = arith.mulf %237, %235 : vector<2x4xf32>
    %239 = arith.mulf %229, %192 : vector<2x4xf32>
    %240 = arith.addf %238, %239 : vector<2x4xf32>
    %cst_65 = arith.constant dense<0.000000e+00> : vector<2xf32>
    %241 = vector.multi_reduction <add>, %240, %cst_65 [1] : vector<2x4xf32> to vector<2xf32>
    %242 = vector.shape_cast %241 : vector<2xf32> to vector<2x1xf32>
    %cst_66 = arith.constant 4.000000e+00 : f32
    %243 = vector.broadcast %cst_66 : f32 to vector<2x1xf32>
    %244 = arith.divf %242, %243 : vector<2x1xf32>
    %245 = vector.broadcast %244 : vector<2x1xf32> to vector<2x4xf32>
    %246 = arith.subf %240, %245 : vector<2x4xf32>
    %247 = arith.mulf %246, %246 : vector<2x4xf32>
    %cst_67 = arith.constant dense<0.000000e+00> : vector<2xf32>
    %248 = vector.multi_reduction <add>, %247, %cst_67 [1] : vector<2x4xf32> to vector<2xf32>
    %249 = vector.shape_cast %248 : vector<2xf32> to vector<2x1xf32>
    %cst_68 = arith.constant 4.000000e+00 : f32
    %250 = vector.broadcast %cst_68 : f32 to vector<2x1xf32>
    %251 = arith.divf %249, %250 : vector<2x1xf32>
    %252 = vector.broadcast %244 : vector<2x1xf32> to vector<2x4xf32>
    %253 = arith.subf %240, %252 : vector<2x4xf32>
    %cst_69 = arith.constant 9.99999974E-6 : f32
    %254 = vector.broadcast %cst_69 : f32 to vector<2x1xf32>
    %255 = arith.addf %251, %254 : vector<2x1xf32>
    %256 = math.rsqrt %255 : vector<2x1xf32>
    %257 = vector.broadcast %256 : vector<2x1xf32> to vector<2x4xf32>
    %258 = arith.mulf %253, %257 : vector<2x4xf32>
    %c8 = arith.constant 8 : index
    %c0_70 = arith.constant 0 : index
    %259 = vector.load %arg21[%c8, %c0_70] : memref<16x4xf32, #tpu.memory_space<vmem>>, vector<2x4xf32>
    tpu.vector_store %arg21[%c8, %c0_70], %258 {strides = array<i32>} : memref<16x4xf32, #tpu.memory_space<vmem>>, vector<2x4xf32>,
    %260 = vector.extract_strided_slice %14 {offsets = [10, 0], sizes = [2, 12], strides = [1, 1]} : vector<16x12xf32> to vector<2x12xf32>
    %cst_71 = arith.constant dense<0.000000e+00> : vector<2x12xf32>
    %261 = tpu.matmul %240, %15, %cst_71 {dimension_numbers = #tpu.dot_dimension_numbers<[1], [0], [0], [1], [0, 0, 1, 1], [], []>} : vector<2x4xf32>, vector<4x12xf32>, vector<2x12xf32> -> vector<2x12xf32>
    %262 = vector.extract_strided_slice %260 {offsets = [0, 0], sizes = [2, 4], strides = [1, 1]} : vector<2x12xf32> to vector<2x4xf32>
    %263 = vector.extract_strided_slice %261 {offsets = [0, 0], sizes = [2, 4], strides = [1, 1]} : vector<2x12xf32> to vector<2x4xf32>
    %264 = arith.addf %262, %263 : vector<2x4xf32>
    %265 = arith.negf %264 : vector<2x4xf32>
    %266 = math.exp %265 : vector<2x4xf32>
    %cst_72 = arith.constant 1.000000e+00 : f32
    %267 = vector.broadcast %cst_72 : f32 to vector<2x4xf32>
    %268 = arith.addf %267, %266 : vector<2x4xf32>
    %269 = arith.divf %267, %268 : vector<2x4xf32>
    %270 = vector.extract_strided_slice %260 {offsets = [0, 4], sizes = [2, 4], strides = [1, 1]} : vector<2x12xf32> to vector<2x4xf32>
    %271 = vector.extract_strided_slice %261 {offsets = [0, 4], sizes = [2, 4], strides = [1, 1]} : vector<2x12xf32> to vector<2x4xf32>
    %272 = arith.addf %270, %271 : vector<2x4xf32>
    %273 = arith.negf %272 : vector<2x4xf32>
    %274 = math.exp %273 : vector<2x4xf32>
    %cst_73 = arith.constant 1.000000e+00 : f32
    %275 = vector.broadcast %cst_73 : f32 to vector<2x4xf32>
    %276 = arith.addf %275, %274 : vector<2x4xf32>
    %277 = arith.divf %275, %276 : vector<2x4xf32>
    %278 = vector.extract_strided_slice %260 {offsets = [0, 8], sizes = [2, 4], strides = [1, 1]} : vector<2x12xf32> to vector<2x4xf32>
    %279 = vector.extract_strided_slice %261 {offsets = [0, 8], sizes = [2, 4], strides = [1, 1]} : vector<2x12xf32> to vector<2x4xf32>
    %280 = arith.addf %279, %18 : vector<2x4xf32>
    %281 = arith.mulf %269, %280 : vector<2x4xf32>
    %282 = arith.addf %278, %281 : vector<2x4xf32>
    %283 = math.tanh %282 : vector<2x4xf32>
    %cst_74 = arith.constant 1.000000e+00 : f32
    %284 = vector.broadcast %cst_74 : f32 to vector<2x4xf32>
    %285 = arith.subf %284, %277 : vector<2x4xf32>
    %286 = arith.mulf %285, %283 : vector<2x4xf32>
    %287 = arith.mulf %277, %240 : vector<2x4xf32>
    %288 = arith.addf %286, %287 : vector<2x4xf32>
    %cst_75 = arith.constant dense<0.000000e+00> : vector<2xf32>
    %289 = vector.multi_reduction <add>, %288, %cst_75 [1] : vector<2x4xf32> to vector<2xf32>
    %290 = vector.shape_cast %289 : vector<2xf32> to vector<2x1xf32>
    %cst_76 = arith.constant 4.000000e+00 : f32
    %291 = vector.broadcast %cst_76 : f32 to vector<2x1xf32>
    %292 = arith.divf %290, %291 : vector<2x1xf32>
    %293 = vector.broadcast %292 : vector<2x1xf32> to vector<2x4xf32>
    %294 = arith.subf %288, %293 : vector<2x4xf32>
    %295 = arith.mulf %294, %294 : vector<2x4xf32>
    %cst_77 = arith.constant dense<0.000000e+00> : vector<2xf32>
    %296 = vector.multi_reduction <add>, %295, %cst_77 [1] : vector<2x4xf32> to vector<2xf32>
    %297 = vector.shape_cast %296 : vector<2xf32> to vector<2x1xf32>
    %cst_78 = arith.constant 4.000000e+00 : f32
    %298 = vector.broadcast %cst_78 : f32 to vector<2x1xf32>
    %299 = arith.divf %297, %298 : vector<2x1xf32>
    %300 = vector.broadcast %292 : vector<2x1xf32> to vector<2x4xf32>
    %301 = arith.subf %288, %300 : vector<2x4xf32>
    %cst_79 = arith.constant 9.99999974E-6 : f32
    %302 = vector.broadcast %cst_79 : f32 to vector<2x1xf32>
    %303 = arith.addf %299, %302 : vector<2x1xf32>
    %304 = math.rsqrt %303 : vector<2x1xf32>
    %305 = vector.broadcast %304 : vector<2x1xf32> to vector<2x4xf32>
    %306 = arith.mulf %301, %305 : vector<2x4xf32>
    %c10 = arith.constant 10 : index
    %c0_80 = arith.constant 0 : index
    %307 = vector.load %arg21[%c10, %c0_80] : memref<16x4xf32, #tpu.memory_space<vmem>>, vector<2x4xf32>
    tpu.vector_store %arg21[%c10, %c0_80], %306 {strides = array<i32>} : memref<16x4xf32, #tpu.memory_space<vmem>>, vector<2x4xf32>,
    %308 = vector.extract_strided_slice %14 {offsets = [12, 0], sizes = [2, 12], strides = [1, 1]} : vector<16x12xf32> to vector<2x12xf32>
    %cst_81 = arith.constant dense<0.000000e+00> : vector<2x12xf32>
    %309 = tpu.matmul %288, %15, %cst_81 {dimension_numbers = #tpu.dot_dimension_numbers<[1], [0], [0], [1], [0, 0, 1, 1], [], []>} : vector<2x4xf32>, vector<4x12xf32>, vector<2x12xf32> -> vector<2x12xf32>
    %310 = vector.extract_strided_slice %308 {offsets = [0, 0], sizes = [2, 4], strides = [1, 1]} : vector<2x12xf32> to vector<2x4xf32>
    %311 = vector.extract_strided_slice %309 {offsets = [0, 0], sizes = [2, 4], strides = [1, 1]} : vector<2x12xf32> to vector<2x4xf32>
    %312 = arith.addf %310, %311 : vector<2x4xf32>
    %313 = arith.negf %312 : vector<2x4xf32>
    %314 = math.exp %313 : vector<2x4xf32>
    %cst_82 = arith.constant 1.000000e+00 : f32
    %315 = vector.broadcast %cst_82 : f32 to vector<2x4xf32>
    %316 = arith.addf %315, %314 : vector<2x4xf32>
    %317 = arith.divf %315, %316 : vector<2x4xf32>
    %318 = vector.extract_strided_slice %308 {offsets = [0, 4], sizes = [2, 4], strides = [1, 1]} : vector<2x12xf32> to vector<2x4xf32>
    %319 = vector.extract_strided_slice %309 {offsets = [0, 4], sizes = [2, 4], strides = [1, 1]} : vector<2x12xf32> to vector<2x4xf32>
    %320 = arith.addf %318, %319 : vector<2x4xf32>
    %321 = arith.negf %320 : vector<2x4xf32>
    %322 = math.exp %321 : vector<2x4xf32>
    %cst_83 = arith.constant 1.000000e+00 : f32
    %323 = vector.broadcast %cst_83 : f32 to vector<2x4xf32>
    %324 = arith.addf %323, %322 : vector<2x4xf32>
    %325 = arith.divf %323, %324 : vector<2x4xf32>
    %326 = vector.extract_strided_slice %308 {offsets = [0, 8], sizes = [2, 4], strides = [1, 1]} : vector<2x12xf32> to vector<2x4xf32>
    %327 = vector.extract_strided_slice %309 {offsets = [0, 8], sizes = [2, 4], strides = [1, 1]} : vector<2x12xf32> to vector<2x4xf32>
    %328 = arith.addf %327, %18 : vector<2x4xf32>
    %329 = arith.mulf %317, %328 : vector<2x4xf32>
    %330 = arith.addf %326, %329 : vector<2x4xf32>
    %331 = math.tanh %330 : vector<2x4xf32>
    %cst_84 = arith.constant 1.000000e+00 : f32
    %332 = vector.broadcast %cst_84 : f32 to vector<2x4xf32>
    %333 = arith.subf %332, %325 : vector<2x4xf32>
    %334 = arith.mulf %333, %331 : vector<2x4xf32>
    %335 = arith.mulf %325, %288 : vector<2x4xf32>
    %336 = arith.addf %334, %335 : vector<2x4xf32>
    %cst_85 = arith.constant dense<0.000000e+00> : vector<2xf32>
    %337 = vector.multi_reduction <add>, %336, %cst_85 [1] : vector<2x4xf32> to vector<2xf32>
    %338 = vector.shape_cast %337 : vector<2xf32> to vector<2x1xf32>
    %cst_86 = arith.constant 4.000000e+00 : f32
    %339 = vector.broadcast %cst_86 : f32 to vector<2x1xf32>
    %340 = arith.divf %338, %339 : vector<2x1xf32>
    %341 = vector.broadcast %340 : vector<2x1xf32> to vector<2x4xf32>
    %342 = arith.subf %336, %341 : vector<2x4xf32>
    %343 = arith.mulf %342, %342 : vector<2x4xf32>
    %cst_87 = arith.constant dense<0.000000e+00> : vector<2xf32>
    %344 = vector.multi_reduction <add>, %343, %cst_87 [1] : vector<2x4xf32> to vector<2xf32>
    %345 = vector.shape_cast %344 : vector<2xf32> to vector<2x1xf32>
    %cst_88 = arith.constant 4.000000e+00 : f32
    %346 = vector.broadcast %cst_88 : f32 to vector<2x1xf32>
    %347 = arith.divf %345, %346 : vector<2x1xf32>
    %348 = vector.broadcast %340 : vector<2x1xf32> to vector<2x4xf32>
    %349 = arith.subf %336, %348 : vector<2x4xf32>
    %cst_89 = arith.constant 9.99999974E-6 : f32
    %350 = vector.broadcast %cst_89 : f32 to vector<2x1xf32>
    %351 = arith.addf %347, %350 : vector<2x1xf32>
    %352 = math.rsqrt %351 : vector<2x1xf32>
    %353 = vector.broadcast %352 : vector<2x1xf32> to vector<2x4xf32>
    %354 = arith.mulf %349, %353 : vector<2x4xf32>
    %c12 = arith.constant 12 : index
    %c0_90 = arith.constant 0 : index
    %355 = vector.load %arg21[%c12, %c0_90] : memref<16x4xf32, #tpu.memory_space<vmem>>, vector<2x4xf32>
    tpu.vector_store %arg21[%c12, %c0_90], %354 {strides = array<i32>} : memref<16x4xf32, #tpu.memory_space<vmem>>, vector<2x4xf32>,
    %356 = vector.extract_strided_slice %14 {offsets = [14, 0], sizes = [2, 12], strides = [1, 1]} : vector<16x12xf32> to vector<2x12xf32>
    %cst_91 = arith.constant dense<0.000000e+00> : vector<2x12xf32>
    %357 = tpu.matmul %336, %15, %cst_91 {dimension_numbers = #tpu.dot_dimension_numbers<[1], [0], [0], [1], [0, 0, 1, 1], [], []>} : vector<2x4xf32>, vector<4x12xf32>, vector<2x12xf32> -> vector<2x12xf32>
    %358 = vector.extract_strided_slice %356 {offsets = [0, 0], sizes = [2, 4], strides = [1, 1]} : vector<2x12xf32> to vector<2x4xf32>
    %359 = vector.extract_strided_slice %357 {offsets = [0, 0], sizes = [2, 4], strides = [1, 1]} : vector<2x12xf32> to vector<2x4xf32>
    %360 = arith.addf %358, %359 : vector<2x4xf32>
    %361 = arith.negf %360 : vector<2x4xf32>
    %362 = math.exp %361 : vector<2x4xf32>
    %cst_92 = arith.constant 1.000000e+00 : f32
    %363 = vector.broadcast %cst_92 : f32 to vector<2x4xf32>
    %364 = arith.addf %363, %362 : vector<2x4xf32>
    %365 = arith.divf %363, %364 : vector<2x4xf32>
    %366 = vector.extract_strided_slice %356 {offsets = [0, 4], sizes = [2, 4], strides = [1, 1]} : vector<2x12xf32> to vector<2x4xf32>
    %367 = vector.extract_strided_slice %357 {offsets = [0, 4], sizes = [2, 4], strides = [1, 1]} : vector<2x12xf32> to vector<2x4xf32>
    %368 = arith.addf %366, %367 : vector<2x4xf32>
    %369 = arith.negf %368 : vector<2x4xf32>
    %370 = math.exp %369 : vector<2x4xf32>
    %cst_93 = arith.constant 1.000000e+00 : f32
    %371 = vector.broadcast %cst_93 : f32 to vector<2x4xf32>
    %372 = arith.addf %371, %370 : vector<2x4xf32>
    %373 = arith.divf %371, %372 : vector<2x4xf32>
    %374 = vector.extract_strided_slice %356 {offsets = [0, 8], sizes = [2, 4], strides = [1, 1]} : vector<2x12xf32> to vector<2x4xf32>
    %375 = vector.extract_strided_slice %357 {offsets = [0, 8], sizes = [2, 4], strides = [1, 1]} : vector<2x12xf32> to vector<2x4xf32>
    %376 = arith.addf %375, %18 : vector<2x4xf32>
    %377 = arith.mulf %365, %376 : vector<2x4xf32>
    %378 = arith.addf %374, %377 : vector<2x4xf32>
    %379 = math.tanh %378 : vector<2x4xf32>
    %cst_94 = arith.constant 1.000000e+00 : f32
    %380 = vector.broadcast %cst_94 : f32 to vector<2x4xf32>
    %381 = arith.subf %380, %373 : vector<2x4xf32>
    %382 = arith.mulf %381, %379 : vector<2x4xf32>
    %383 = arith.mulf %373, %336 : vector<2x4xf32>
    %384 = arith.addf %382, %383 : vector<2x4xf32>
    %cst_95 = arith.constant dense<0.000000e+00> : vector<2xf32>
    %385 = vector.multi_reduction <add>, %384, %cst_95 [1] : vector<2x4xf32> to vector<2xf32>
    %386 = vector.shape_cast %385 : vector<2xf32> to vector<2x1xf32>
    %cst_96 = arith.constant 4.000000e+00 : f32
    %387 = vector.broadcast %cst_96 : f32 to vector<2x1xf32>
    %388 = arith.divf %386, %387 : vector<2x1xf32>
    %389 = vector.broadcast %388 : vector<2x1xf32> to vector<2x4xf32>
    %390 = arith.subf %384, %389 : vector<2x4xf32>
    %391 = arith.mulf %390, %390 : vector<2x4xf32>
    %cst_97 = arith.constant dense<0.000000e+00> : vector<2xf32>
    %392 = vector.multi_reduction <add>, %391, %cst_97 [1] : vector<2x4xf32> to vector<2xf32>
    %393 = vector.shape_cast %392 : vector<2xf32> to vector<2x1xf32>
    %cst_98 = arith.constant 4.000000e+00 : f32
    %394 = vector.broadcast %cst_98 : f32 to vector<2x1xf32>
    %395 = arith.divf %393, %394 : vector<2x1xf32>
    %396 = vector.broadcast %388 : vector<2x1xf32> to vector<2x4xf32>
    %397 = arith.subf %384, %396 : vector<2x4xf32>
    %cst_99 = arith.constant 9.99999974E-6 : f32
    %398 = vector.broadcast %cst_99 : f32 to vector<2x1xf32>
    %399 = arith.addf %395, %398 : vector<2x1xf32>
    %400 = math.rsqrt %399 : vector<2x1xf32>
    %401 = vector.broadcast %400 : vector<2x1xf32> to vector<2x4xf32>
    %402 = arith.mulf %397, %401 : vector<2x4xf32>
    %c14 = arith.constant 14 : index
    %c0_100 = arith.constant 0 : index
    %403 = vector.load %arg21[%c14, %c0_100] : memref<16x4xf32, #tpu.memory_space<vmem>>, vector<2x4xf32>
    tpu.vector_store %arg21[%c14, %c0_100], %402 {strides = array<i32>} : memref<16x4xf32, #tpu.memory_space<vmem>>, vector<2x4xf32>,
    %c0_101 = arith.constant 0 : index
    %c0_102 = arith.constant 0 : index
    %404 = vector.load %arg21[%c0_101, %c0_102] : memref<16x4xf32, #tpu.memory_space<vmem>>, vector<16x4xf32>
    %c0_103 = arith.constant 0 : index
    %c0_104 = arith.constant 0 : index
    %405 = vector.load %arg6[%c0_103, %c0_104] : memref<4x24xf32, #tpu.memory_space<vmem>>, vector<4x24xf32>
    %cst_105 = arith.constant dense<0.000000e+00> : vector<16x24xf32>
    %406 = tpu.matmul %404, %405, %cst_105 {dimension_numbers = #tpu.dot_dimension_numbers<[1], [0], [0], [1], [0, 0, 1, 1], [], []>} : vector<16x4xf32>, vector<4x24xf32>, vector<16x24xf32> -> vector<16x24xf32>
    %c0_106 = arith.constant 0 : index
    %c0_107 = arith.constant 0 : index
    %407 = vector.load %arg8[%c0_106, %c0_107] : memref<1x24xf32, #tpu.memory_space<vmem>>, vector<1x24xf32>
    %408 = vector.broadcast %407 : vector<1x24xf32> to vector<16x24xf32>
    %409 = arith.addf %406, %408 : vector<16x24xf32>
    %c0_108 = arith.constant 0 : index
    %c0_109 = arith.constant 0 : index
    %410 = vector.load %arg7[%c0_108, %c0_109] : memref<8x24xf32, #tpu.memory_space<vmem>>, vector<8x24xf32>
    %c0_110 = arith.constant 0 : index
    %c0_111 = arith.constant 0 : index
    %411 = vector.load %arg9[%c0_110, %c0_111] : memref<1x8xf32, #tpu.memory_space<vmem>>, vector<1x8xf32>
    %412 = vector.shape_cast %411 : vector<1x8xf32> to vector<1x8xf32>
    %413 = vector.broadcast %412 : vector<1x8xf32> to vector<2x8xf32>
    %cst_112 = arith.constant 0.000000e+00 : f32
    %414 = vector.broadcast %cst_112 : f32 to vector<2x8xf32>
    %415 = vector.extract_strided_slice %409 {offsets = [0, 0], sizes = [2, 24], strides = [1, 1]} : vector<16x24xf32> to vector<2x24xf32>
    %cst_113 = arith.constant dense<0.000000e+00> : vector<2x24xf32>
    %416 = tpu.matmul %414, %410, %cst_113 {dimension_numbers = #tpu.dot_dimension_numbers<[1], [0], [0], [1], [0, 0, 1, 1], [], []>} : vector<2x8xf32>, vector<8x24xf32>, vector<2x24xf32> -> vector<2x24xf32>
    %417 = vector.extract_strided_slice %415 {offsets = [0, 0], sizes = [2, 8], strides = [1, 1]} : vector<2x24xf32> to vector<2x8xf32>
    %418 = vector.extract_strided_slice %416 {offsets = [0, 0], sizes = [2, 8], strides = [1, 1]} : vector<2x24xf32> to vector<2x8xf32>
    %419 = arith.addf %417, %418 : vector<2x8xf32>
    %420 = arith.negf %419 : vector<2x8xf32>
    %421 = math.exp %420 : vector<2x8xf32>
    %cst_114 = arith.constant 1.000000e+00 : f32
    %422 = vector.broadcast %cst_114 : f32 to vector<2x8xf32>
    %423 = arith.addf %422, %421 : vector<2x8xf32>
    %424 = arith.divf %422, %423 : vector<2x8xf32>
    %425 = vector.extract_strided_slice %415 {offsets = [0, 8], sizes = [2, 8], strides = [1, 1]} : vector<2x24xf32> to vector<2x8xf32>
    %426 = vector.extract_strided_slice %416 {offsets = [0, 8], sizes = [2, 8], strides = [1, 1]} : vector<2x24xf32> to vector<2x8xf32>
    %427 = arith.addf %425, %426 : vector<2x8xf32>
    %428 = arith.negf %427 : vector<2x8xf32>
    %429 = math.exp %428 : vector<2x8xf32>
    %cst_115 = arith.constant 1.000000e+00 : f32
    %430 = vector.broadcast %cst_115 : f32 to vector<2x8xf32>
    %431 = arith.addf %430, %429 : vector<2x8xf32>
    %432 = arith.divf %430, %431 : vector<2x8xf32>
    %433 = vector.extract_strided_slice %415 {offsets = [0, 16], sizes = [2, 8], strides = [1, 1]} : vector<2x24xf32> to vector<2x8xf32>
    %434 = vector.extract_strided_slice %416 {offsets = [0, 16], sizes = [2, 8], strides = [1, 1]} : vector<2x24xf32> to vector<2x8xf32>
    %435 = arith.addf %434, %413 : vector<2x8xf32>
    %436 = arith.mulf %424, %435 : vector<2x8xf32>
    %437 = arith.addf %433, %436 : vector<2x8xf32>
    %438 = math.tanh %437 : vector<2x8xf32>
    %cst_116 = arith.constant 1.000000e+00 : f32
    %439 = vector.broadcast %cst_116 : f32 to vector<2x8xf32>
    %440 = arith.subf %439, %432 : vector<2x8xf32>
    %441 = arith.mulf %440, %438 : vector<2x8xf32>
    %442 = arith.mulf %432, %414 : vector<2x8xf32>
    %443 = arith.addf %441, %442 : vector<2x8xf32>
    %cst_117 = arith.constant dense<0.000000e+00> : vector<2xf32>
    %444 = vector.multi_reduction <add>, %443, %cst_117 [1] : vector<2x8xf32> to vector<2xf32>
    %445 = vector.shape_cast %444 : vector<2xf32> to vector<2x1xf32>
    %cst_118 = arith.constant 8.000000e+00 : f32
    %446 = vector.broadcast %cst_118 : f32 to vector<2x1xf32>
    %447 = arith.divf %445, %446 : vector<2x1xf32>
    %448 = vector.broadcast %447 : vector<2x1xf32> to vector<2x8xf32>
    %449 = arith.subf %443, %448 : vector<2x8xf32>
    %450 = arith.mulf %449, %449 : vector<2x8xf32>
    %cst_119 = arith.constant dense<0.000000e+00> : vector<2xf32>
    %451 = vector.multi_reduction <add>, %450, %cst_119 [1] : vector<2x8xf32> to vector<2xf32>
    %452 = vector.shape_cast %451 : vector<2xf32> to vector<2x1xf32>
    %cst_120 = arith.constant 8.000000e+00 : f32
    %453 = vector.broadcast %cst_120 : f32 to vector<2x1xf32>
    %454 = arith.divf %452, %453 : vector<2x1xf32>
    %455 = vector.broadcast %447 : vector<2x1xf32> to vector<2x8xf32>
    %456 = arith.subf %443, %455 : vector<2x8xf32>
    %cst_121 = arith.constant 9.99999974E-6 : f32
    %457 = vector.broadcast %cst_121 : f32 to vector<2x1xf32>
    %458 = arith.addf %454, %457 : vector<2x1xf32>
    %459 = math.rsqrt %458 : vector<2x1xf32>
    %460 = vector.broadcast %459 : vector<2x1xf32> to vector<2x8xf32>
    %461 = arith.mulf %456, %460 : vector<2x8xf32>
    %c0_122 = arith.constant 0 : index
    %c0_123 = arith.constant 0 : index
    %462 = vector.load %arg22[%c0_122, %c0_123] : memref<16x8xf32, #tpu.memory_space<vmem>>, vector<2x8xf32>
    tpu.vector_store %arg22[%c0_122, %c0_123], %461 {strides = array<i32>} : memref<16x8xf32, #tpu.memory_space<vmem>>, vector<2x8xf32>,
    %463 = vector.extract_strided_slice %409 {offsets = [2, 0], sizes = [2, 24], strides = [1, 1]} : vector<16x24xf32> to vector<2x24xf32>
    %cst_124 = arith.constant dense<0.000000e+00> : vector<2x24xf32>
    %464 = tpu.matmul %443, %410, %cst_124 {dimension_numbers = #tpu.dot_dimension_numbers<[1], [0], [0], [1], [0, 0, 1, 1], [], []>} : vector<2x8xf32>, vector<8x24xf32>, vector<2x24xf32> -> vector<2x24xf32>
    %465 = vector.extract_strided_slice %463 {offsets = [0, 0], sizes = [2, 8], strides = [1, 1]} : vector<2x24xf32> to vector<2x8xf32>
    %466 = vector.extract_strided_slice %464 {offsets = [0, 0], sizes = [2, 8], strides = [1, 1]} : vector<2x24xf32> to vector<2x8xf32>
    %467 = arith.addf %465, %466 : vector<2x8xf32>
    %468 = arith.negf %467 : vector<2x8xf32>
    %469 = math.exp %468 : vector<2x8xf32>
    %cst_125 = arith.constant 1.000000e+00 : f32
    %470 = vector.broadcast %cst_125 : f32 to vector<2x8xf32>
    %471 = arith.addf %470, %469 : vector<2x8xf32>
    %472 = arith.divf %470, %471 : vector<2x8xf32>
    %473 = vector.extract_strided_slice %463 {offsets = [0, 8], sizes = [2, 8], strides = [1, 1]} : vector<2x24xf32> to vector<2x8xf32>
    %474 = vector.extract_strided_slice %464 {offsets = [0, 8], sizes = [2, 8], strides = [1, 1]} : vector<2x24xf32> to vector<2x8xf32>
    %475 = arith.addf %473, %474 : vector<2x8xf32>
    %476 = arith.negf %475 : vector<2x8xf32>
    %477 = math.exp %476 : vector<2x8xf32>
    %cst_126 = arith.constant 1.000000e+00 : f32
    %478 = vector.broadcast %cst_126 : f32 to vector<2x8xf32>
    %479 = arith.addf %478, %477 : vector<2x8xf32>
    %480 = arith.divf %478, %479 : vector<2x8xf32>
    %481 = vector.extract_strided_slice %463 {offsets = [0, 16], sizes = [2, 8], strides = [1, 1]} : vector<2x24xf32> to vector<2x8xf32>
    %482 = vector.extract_strided_slice %464 {offsets = [0, 16], sizes = [2, 8], strides = [1, 1]} : vector<2x24xf32> to vector<2x8xf32>
    %483 = arith.addf %482, %413 : vector<2x8xf32>
    %484 = arith.mulf %472, %483 : vector<2x8xf32>
    %485 = arith.addf %481, %484 : vector<2x8xf32>
    %486 = math.tanh %485 : vector<2x8xf32>
    %cst_127 = arith.constant 1.000000e+00 : f32
    %487 = vector.broadcast %cst_127 : f32 to vector<2x8xf32>
    %488 = arith.subf %487, %480 : vector<2x8xf32>
    %489 = arith.mulf %488, %486 : vector<2x8xf32>
    %490 = arith.mulf %480, %443 : vector<2x8xf32>
    %491 = arith.addf %489, %490 : vector<2x8xf32>
    %cst_128 = arith.constant dense<0.000000e+00> : vector<2xf32>
    %492 = vector.multi_reduction <add>, %491, %cst_128 [1] : vector<2x8xf32> to vector<2xf32>
    %493 = vector.shape_cast %492 : vector<2xf32> to vector<2x1xf32>
    %cst_129 = arith.constant 8.000000e+00 : f32
    %494 = vector.broadcast %cst_129 : f32 to vector<2x1xf32>
    %495 = arith.divf %493, %494 : vector<2x1xf32>
    %496 = vector.broadcast %495 : vector<2x1xf32> to vector<2x8xf32>
    %497 = arith.subf %491, %496 : vector<2x8xf32>
    %498 = arith.mulf %497, %497 : vector<2x8xf32>
    %cst_130 = arith.constant dense<0.000000e+00> : vector<2xf32>
    %499 = vector.multi_reduction <add>, %498, %cst_130 [1] : vector<2x8xf32> to vector<2xf32>
    %500 = vector.shape_cast %499 : vector<2xf32> to vector<2x1xf32>
    %cst_131 = arith.constant 8.000000e+00 : f32
    %501 = vector.broadcast %cst_131 : f32 to vector<2x1xf32>
    %502 = arith.divf %500, %501 : vector<2x1xf32>
    %503 = vector.broadcast %495 : vector<2x1xf32> to vector<2x8xf32>
    %504 = arith.subf %491, %503 : vector<2x8xf32>
    %cst_132 = arith.constant 9.99999974E-6 : f32
    %505 = vector.broadcast %cst_132 : f32 to vector<2x1xf32>
    %506 = arith.addf %502, %505 : vector<2x1xf32>
    %507 = math.rsqrt %506 : vector<2x1xf32>
    %508 = vector.broadcast %507 : vector<2x1xf32> to vector<2x8xf32>
    %509 = arith.mulf %504, %508 : vector<2x8xf32>
    %c2_133 = arith.constant 2 : index
    %c0_134 = arith.constant 0 : index
    %510 = vector.load %arg22[%c2_133, %c0_134] : memref<16x8xf32, #tpu.memory_space<vmem>>, vector<2x8xf32>
    tpu.vector_store %arg22[%c2_133, %c0_134], %509 {strides = array<i32>} : memref<16x8xf32, #tpu.memory_space<vmem>>, vector<2x8xf32>,
    %511 = vector.extract_strided_slice %409 {offsets = [4, 0], sizes = [2, 24], strides = [1, 1]} : vector<16x24xf32> to vector<2x24xf32>
    %cst_135 = arith.constant dense<0.000000e+00> : vector<2x24xf32>
    %512 = tpu.matmul %491, %410, %cst_135 {dimension_numbers = #tpu.dot_dimension_numbers<[1], [0], [0], [1], [0, 0, 1, 1], [], []>} : vector<2x8xf32>, vector<8x24xf32>, vector<2x24xf32> -> vector<2x24xf32>
    %513 = vector.extract_strided_slice %511 {offsets = [0, 0], sizes = [2, 8], strides = [1, 1]} : vector<2x24xf32> to vector<2x8xf32>
    %514 = vector.extract_strided_slice %512 {offsets = [0, 0], sizes = [2, 8], strides = [1, 1]} : vector<2x24xf32> to vector<2x8xf32>
    %515 = arith.addf %513, %514 : vector<2x8xf32>
    %516 = arith.negf %515 : vector<2x8xf32>
    %517 = math.exp %516 : vector<2x8xf32>
    %cst_136 = arith.constant 1.000000e+00 : f32
    %518 = vector.broadcast %cst_136 : f32 to vector<2x8xf32>
    %519 = arith.addf %518, %517 : vector<2x8xf32>
    %520 = arith.divf %518, %519 : vector<2x8xf32>
    %521 = vector.extract_strided_slice %511 {offsets = [0, 8], sizes = [2, 8], strides = [1, 1]} : vector<2x24xf32> to vector<2x8xf32>
    %522 = vector.extract_strided_slice %512 {offsets = [0, 8], sizes = [2, 8], strides = [1, 1]} : vector<2x24xf32> to vector<2x8xf32>
    %523 = arith.addf %521, %522 : vector<2x8xf32>
    %524 = arith.negf %523 : vector<2x8xf32>
    %525 = math.exp %524 : vector<2x8xf32>
    %cst_137 = arith.constant 1.000000e+00 : f32
    %526 = vector.broadcast %cst_137 : f32 to vector<2x8xf32>
    %527 = arith.addf %526, %525 : vector<2x8xf32>
    %528 = arith.divf %526, %527 : vector<2x8xf32>
    %529 = vector.extract_strided_slice %511 {offsets = [0, 16], sizes = [2, 8], strides = [1, 1]} : vector<2x24xf32> to vector<2x8xf32>
    %530 = vector.extract_strided_slice %512 {offsets = [0, 16], sizes = [2, 8], strides = [1, 1]} : vector<2x24xf32> to vector<2x8xf32>
    %531 = arith.addf %530, %413 : vector<2x8xf32>
    %532 = arith.mulf %520, %531 : vector<2x8xf32>
    %533 = arith.addf %529, %532 : vector<2x8xf32>
    %534 = math.tanh %533 : vector<2x8xf32>
    %cst_138 = arith.constant 1.000000e+00 : f32
    %535 = vector.broadcast %cst_138 : f32 to vector<2x8xf32>
    %536 = arith.subf %535, %528 : vector<2x8xf32>
    %537 = arith.mulf %536, %534 : vector<2x8xf32>
    %538 = arith.mulf %528, %491 : vector<2x8xf32>
    %539 = arith.addf %537, %538 : vector<2x8xf32>
    %cst_139 = arith.constant dense<0.000000e+00> : vector<2xf32>
    %540 = vector.multi_reduction <add>, %539, %cst_139 [1] : vector<2x8xf32> to vector<2xf32>
    %541 = vector.shape_cast %540 : vector<2xf32> to vector<2x1xf32>
    %cst_140 = arith.constant 8.000000e+00 : f32
    %542 = vector.broadcast %cst_140 : f32 to vector<2x1xf32>
    %543 = arith.divf %541, %542 : vector<2x1xf32>
    %544 = vector.broadcast %543 : vector<2x1xf32> to vector<2x8xf32>
    %545 = arith.subf %539, %544 : vector<2x8xf32>
    %546 = arith.mulf %545, %545 : vector<2x8xf32>
    %cst_141 = arith.constant dense<0.000000e+00> : vector<2xf32>
    %547 = vector.multi_reduction <add>, %546, %cst_141 [1] : vector<2x8xf32> to vector<2xf32>
    %548 = vector.shape_cast %547 : vector<2xf32> to vector<2x1xf32>
    %cst_142 = arith.constant 8.000000e+00 : f32
    %549 = vector.broadcast %cst_142 : f32 to vector<2x1xf32>
    %550 = arith.divf %548, %549 : vector<2x1xf32>
    %551 = vector.broadcast %543 : vector<2x1xf32> to vector<2x8xf32>
    %552 = arith.subf %539, %551 : vector<2x8xf32>
    %cst_143 = arith.constant 9.99999974E-6 : f32
    %553 = vector.broadcast %cst_143 : f32 to vector<2x1xf32>
    %554 = arith.addf %550, %553 : vector<2x1xf32>
    %555 = math.rsqrt %554 : vector<2x1xf32>
    %556 = vector.broadcast %555 : vector<2x1xf32> to vector<2x8xf32>
    %557 = arith.mulf %552, %556 : vector<2x8xf32>
    %c4_144 = arith.constant 4 : index
    %c0_145 = arith.constant 0 : index
    %558 = vector.load %arg22[%c4_144, %c0_145] : memref<16x8xf32, #tpu.memory_space<vmem>>, vector<2x8xf32>
    tpu.vector_store %arg22[%c4_144, %c0_145], %557 {strides = array<i32>} : memref<16x8xf32, #tpu.memory_space<vmem>>, vector<2x8xf32>,
    %559 = vector.extract_strided_slice %409 {offsets = [6, 0], sizes = [2, 24], strides = [1, 1]} : vector<16x24xf32> to vector<2x24xf32>
    %cst_146 = arith.constant dense<0.000000e+00> : vector<2x24xf32>
    %560 = tpu.matmul %539, %410, %cst_146 {dimension_numbers = #tpu.dot_dimension_numbers<[1], [0], [0], [1], [0, 0, 1, 1], [], []>} : vector<2x8xf32>, vector<8x24xf32>, vector<2x24xf32> -> vector<2x24xf32>
    %561 = vector.extract_strided_slice %559 {offsets = [0, 0], sizes = [2, 8], strides = [1, 1]} : vector<2x24xf32> to vector<2x8xf32>
    %562 = vector.extract_strided_slice %560 {offsets = [0, 0], sizes = [2, 8], strides = [1, 1]} : vector<2x24xf32> to vector<2x8xf32>
    %563 = arith.addf %561, %562 : vector<2x8xf32>
    %564 = arith.negf %563 : vector<2x8xf32>
    %565 = math.exp %564 : vector<2x8xf32>
    %cst_147 = arith.constant 1.000000e+00 : f32
    %566 = vector.broadcast %cst_147 : f32 to vector<2x8xf32>
    %567 = arith.addf %566, %565 : vector<2x8xf32>
    %568 = arith.divf %566, %567 : vector<2x8xf32>
    %569 = vector.extract_strided_slice %559 {offsets = [0, 8], sizes = [2, 8], strides = [1, 1]} : vector<2x24xf32> to vector<2x8xf32>
    %570 = vector.extract_strided_slice %560 {offsets = [0, 8], sizes = [2, 8], strides = [1, 1]} : vector<2x24xf32> to vector<2x8xf32>
    %571 = arith.addf %569, %570 : vector<2x8xf32>
    %572 = arith.negf %571 : vector<2x8xf32>
    %573 = math.exp %572 : vector<2x8xf32>
    %cst_148 = arith.constant 1.000000e+00 : f32
    %574 = vector.broadcast %cst_148 : f32 to vector<2x8xf32>
    %575 = arith.addf %574, %573 : vector<2x8xf32>
    %576 = arith.divf %574, %575 : vector<2x8xf32>
    %577 = vector.extract_strided_slice %559 {offsets = [0, 16], sizes = [2, 8], strides = [1, 1]} : vector<2x24xf32> to vector<2x8xf32>
    %578 = vector.extract_strided_slice %560 {offsets = [0, 16], sizes = [2, 8], strides = [1, 1]} : vector<2x24xf32> to vector<2x8xf32>
    %579 = arith.addf %578, %413 : vector<2x8xf32>
    %580 = arith.mulf %568, %579 : vector<2x8xf32>
    %581 = arith.addf %577, %580 : vector<2x8xf32>
    %582 = math.tanh %581 : vector<2x8xf32>
    %cst_149 = arith.constant 1.000000e+00 : f32
    %583 = vector.broadcast %cst_149 : f32 to vector<2x8xf32>
    %584 = arith.subf %583, %576 : vector<2x8xf32>
    %585 = arith.mulf %584, %582 : vector<2x8xf32>
    %586 = arith.mulf %576, %539 : vector<2x8xf32>
    %587 = arith.addf %585, %586 : vector<2x8xf32>
    %cst_150 = arith.constant dense<0.000000e+00> : vector<2xf32>
    %588 = vector.multi_reduction <add>, %587, %cst_150 [1] : vector<2x8xf32> to vector<2xf32>
    %589 = vector.shape_cast %588 : vector<2xf32> to vector<2x1xf32>
    %cst_151 = arith.constant 8.000000e+00 : f32
    %590 = vector.broadcast %cst_151 : f32 to vector<2x1xf32>
    %591 = arith.divf %589, %590 : vector<2x1xf32>
    %592 = vector.broadcast %591 : vector<2x1xf32> to vector<2x8xf32>
    %593 = arith.subf %587, %592 : vector<2x8xf32>
    %594 = arith.mulf %593, %593 : vector<2x8xf32>
    %cst_152 = arith.constant dense<0.000000e+00> : vector<2xf32>
    %595 = vector.multi_reduction <add>, %594, %cst_152 [1] : vector<2x8xf32> to vector<2xf32>
    %596 = vector.shape_cast %595 : vector<2xf32> to vector<2x1xf32>
    %cst_153 = arith.constant 8.000000e+00 : f32
    %597 = vector.broadcast %cst_153 : f32 to vector<2x1xf32>
    %598 = arith.divf %596, %597 : vector<2x1xf32>
    %599 = vector.broadcast %591 : vector<2x1xf32> to vector<2x8xf32>
    %600 = arith.subf %587, %599 : vector<2x8xf32>
    %cst_154 = arith.constant 9.99999974E-6 : f32
    %601 = vector.broadcast %cst_154 : f32 to vector<2x1xf32>
    %602 = arith.addf %598, %601 : vector<2x1xf32>
    %603 = math.rsqrt %602 : vector<2x1xf32>
    %604 = vector.broadcast %603 : vector<2x1xf32> to vector<2x8xf32>
    %605 = arith.mulf %600, %604 : vector<2x8xf32>
    %c6_155 = arith.constant 6 : index
    %c0_156 = arith.constant 0 : index
    %606 = vector.load %arg22[%c6_155, %c0_156] : memref<16x8xf32, #tpu.memory_space<vmem>>, vector<2x8xf32>
    tpu.vector_store %arg22[%c6_155, %c0_156], %605 {strides = array<i32>} : memref<16x8xf32, #tpu.memory_space<vmem>>, vector<2x8xf32>,
    %607 = vector.extract_strided_slice %409 {offsets = [8, 0], sizes = [2, 24], strides = [1, 1]} : vector<16x24xf32> to vector<2x24xf32>
    %cst_157 = arith.constant dense<0.000000e+00> : vector<2x24xf32>
    %608 = tpu.matmul %587, %410, %cst_157 {dimension_numbers = #tpu.dot_dimension_numbers<[1], [0], [0], [1], [0, 0, 1, 1], [], []>} : vector<2x8xf32>, vector<8x24xf32>, vector<2x24xf32> -> vector<2x24xf32>
    %609 = vector.extract_strided_slice %607 {offsets = [0, 0], sizes = [2, 8], strides = [1, 1]} : vector<2x24xf32> to vector<2x8xf32>
    %610 = vector.extract_strided_slice %608 {offsets = [0, 0], sizes = [2, 8], strides = [1, 1]} : vector<2x24xf32> to vector<2x8xf32>
    %611 = arith.addf %609, %610 : vector<2x8xf32>
    %612 = arith.negf %611 : vector<2x8xf32>
    %613 = math.exp %612 : vector<2x8xf32>
    %cst_158 = arith.constant 1.000000e+00 : f32
    %614 = vector.broadcast %cst_158 : f32 to vector<2x8xf32>
    %615 = arith.addf %614, %613 : vector<2x8xf32>
    %616 = arith.divf %614, %615 : vector<2x8xf32>
    %617 = vector.extract_strided_slice %607 {offsets = [0, 8], sizes = [2, 8], strides = [1, 1]} : vector<2x24xf32> to vector<2x8xf32>
    %618 = vector.extract_strided_slice %608 {offsets = [0, 8], sizes = [2, 8], strides = [1, 1]} : vector<2x24xf32> to vector<2x8xf32>
    %619 = arith.addf %617, %618 : vector<2x8xf32>
    %620 = arith.negf %619 : vector<2x8xf32>
    %621 = math.exp %620 : vector<2x8xf32>
    %cst_159 = arith.constant 1.000000e+00 : f32
    %622 = vector.broadcast %cst_159 : f32 to vector<2x8xf32>
    %623 = arith.addf %622, %621 : vector<2x8xf32>
    %624 = arith.divf %622, %623 : vector<2x8xf32>
    %625 = vector.extract_strided_slice %607 {offsets = [0, 16], sizes = [2, 8], strides = [1, 1]} : vector<2x24xf32> to vector<2x8xf32>
    %626 = vector.extract_strided_slice %608 {offsets = [0, 16], sizes = [2, 8], strides = [1, 1]} : vector<2x24xf32> to vector<2x8xf32>
    %627 = arith.addf %626, %413 : vector<2x8xf32>
    %628 = arith.mulf %616, %627 : vector<2x8xf32>
    %629 = arith.addf %625, %628 : vector<2x8xf32>
    %630 = math.tanh %629 : vector<2x8xf32>
    %cst_160 = arith.constant 1.000000e+00 : f32
    %631 = vector.broadcast %cst_160 : f32 to vector<2x8xf32>
    %632 = arith.subf %631, %624 : vector<2x8xf32>
    %633 = arith.mulf %632, %630 : vector<2x8xf32>
    %634 = arith.mulf %624, %587 : vector<2x8xf32>
    %635 = arith.addf %633, %634 : vector<2x8xf32>
    %cst_161 = arith.constant dense<0.000000e+00> : vector<2xf32>
    %636 = vector.multi_reduction <add>, %635, %cst_161 [1] : vector<2x8xf32> to vector<2xf32>
    %637 = vector.shape_cast %636 : vector<2xf32> to vector<2x1xf32>
    %cst_162 = arith.constant 8.000000e+00 : f32
    %638 = vector.broadcast %cst_162 : f32 to vector<2x1xf32>
    %639 = arith.divf %637, %638 : vector<2x1xf32>
    %640 = vector.broadcast %639 : vector<2x1xf32> to vector<2x8xf32>
    %641 = arith.subf %635, %640 : vector<2x8xf32>
    %642 = arith.mulf %641, %641 : vector<2x8xf32>
    %cst_163 = arith.constant dense<0.000000e+00> : vector<2xf32>
    %643 = vector.multi_reduction <add>, %642, %cst_163 [1] : vector<2x8xf32> to vector<2xf32>
    %644 = vector.shape_cast %643 : vector<2xf32> to vector<2x1xf32>
    %cst_164 = arith.constant 8.000000e+00 : f32
    %645 = vector.broadcast %cst_164 : f32 to vector<2x1xf32>
    %646 = arith.divf %644, %645 : vector<2x1xf32>
    %647 = vector.broadcast %639 : vector<2x1xf32> to vector<2x8xf32>
    %648 = arith.subf %635, %647 : vector<2x8xf32>
    %cst_165 = arith.constant 9.99999974E-6 : f32
    %649 = vector.broadcast %cst_165 : f32 to vector<2x1xf32>
    %650 = arith.addf %646, %649 : vector<2x1xf32>
    %651 = math.rsqrt %650 : vector<2x1xf32>
    %652 = vector.broadcast %651 : vector<2x1xf32> to vector<2x8xf32>
    %653 = arith.mulf %648, %652 : vector<2x8xf32>
    %c8_166 = arith.constant 8 : index
    %c0_167 = arith.constant 0 : index
    %654 = vector.load %arg22[%c8_166, %c0_167] : memref<16x8xf32, #tpu.memory_space<vmem>>, vector<2x8xf32>
    tpu.vector_store %arg22[%c8_166, %c0_167], %653 {strides = array<i32>} : memref<16x8xf32, #tpu.memory_space<vmem>>, vector<2x8xf32>,
    %655 = vector.extract_strided_slice %409 {offsets = [10, 0], sizes = [2, 24], strides = [1, 1]} : vector<16x24xf32> to vector<2x24xf32>
    %cst_168 = arith.constant dense<0.000000e+00> : vector<2x24xf32>
    %656 = tpu.matmul %635, %410, %cst_168 {dimension_numbers = #tpu.dot_dimension_numbers<[1], [0], [0], [1], [0, 0, 1, 1], [], []>} : vector<2x8xf32>, vector<8x24xf32>, vector<2x24xf32> -> vector<2x24xf32>
    %657 = vector.extract_strided_slice %655 {offsets = [0, 0], sizes = [2, 8], strides = [1, 1]} : vector<2x24xf32> to vector<2x8xf32>
    %658 = vector.extract_strided_slice %656 {offsets = [0, 0], sizes = [2, 8], strides = [1, 1]} : vector<2x24xf32> to vector<2x8xf32>
    %659 = arith.addf %657, %658 : vector<2x8xf32>
    %660 = arith.negf %659 : vector<2x8xf32>
    %661 = math.exp %660 : vector<2x8xf32>
    %cst_169 = arith.constant 1.000000e+00 : f32
    %662 = vector.broadcast %cst_169 : f32 to vector<2x8xf32>
    %663 = arith.addf %662, %661 : vector<2x8xf32>
    %664 = arith.divf %662, %663 : vector<2x8xf32>
    %665 = vector.extract_strided_slice %655 {offsets = [0, 8], sizes = [2, 8], strides = [1, 1]} : vector<2x24xf32> to vector<2x8xf32>
    %666 = vector.extract_strided_slice %656 {offsets = [0, 8], sizes = [2, 8], strides = [1, 1]} : vector<2x24xf32> to vector<2x8xf32>
    %667 = arith.addf %665, %666 : vector<2x8xf32>
    %668 = arith.negf %667 : vector<2x8xf32>
    %669 = math.exp %668 : vector<2x8xf32>
    %cst_170 = arith.constant 1.000000e+00 : f32
    %670 = vector.broadcast %cst_170 : f32 to vector<2x8xf32>
    %671 = arith.addf %670, %669 : vector<2x8xf32>
    %672 = arith.divf %670, %671 : vector<2x8xf32>
    %673 = vector.extract_strided_slice %655 {offsets = [0, 16], sizes = [2, 8], strides = [1, 1]} : vector<2x24xf32> to vector<2x8xf32>
    %674 = vector.extract_strided_slice %656 {offsets = [0, 16], sizes = [2, 8], strides = [1, 1]} : vector<2x24xf32> to vector<2x8xf32>
    %675 = arith.addf %674, %413 : vector<2x8xf32>
    %676 = arith.mulf %664, %675 : vector<2x8xf32>
    %677 = arith.addf %673, %676 : vector<2x8xf32>
    %678 = math.tanh %677 : vector<2x8xf32>
    %cst_171 = arith.constant 1.000000e+00 : f32
    %679 = vector.broadcast %cst_171 : f32 to vector<2x8xf32>
    %680 = arith.subf %679, %672 : vector<2x8xf32>
    %681 = arith.mulf %680, %678 : vector<2x8xf32>
    %682 = arith.mulf %672, %635 : vector<2x8xf32>
    %683 = arith.addf %681, %682 : vector<2x8xf32>
    %cst_172 = arith.constant dense<0.000000e+00> : vector<2xf32>
    %684 = vector.multi_reduction <add>, %683, %cst_172 [1] : vector<2x8xf32> to vector<2xf32>
    %685 = vector.shape_cast %684 : vector<2xf32> to vector<2x1xf32>
    %cst_173 = arith.constant 8.000000e+00 : f32
    %686 = vector.broadcast %cst_173 : f32 to vector<2x1xf32>
    %687 = arith.divf %685, %686 : vector<2x1xf32>
    %688 = vector.broadcast %687 : vector<2x1xf32> to vector<2x8xf32>
    %689 = arith.subf %683, %688 : vector<2x8xf32>
    %690 = arith.mulf %689, %689 : vector<2x8xf32>
    %cst_174 = arith.constant dense<0.000000e+00> : vector<2xf32>
    %691 = vector.multi_reduction <add>, %690, %cst_174 [1] : vector<2x8xf32> to vector<2xf32>
    %692 = vector.shape_cast %691 : vector<2xf32> to vector<2x1xf32>
    %cst_175 = arith.constant 8.000000e+00 : f32
    %693 = vector.broadcast %cst_175 : f32 to vector<2x1xf32>
    %694 = arith.divf %692, %693 : vector<2x1xf32>
    %695 = vector.broadcast %687 : vector<2x1xf32> to vector<2x8xf32>
    %696 = arith.subf %683, %695 : vector<2x8xf32>
    %cst_176 = arith.constant 9.99999974E-6 : f32
    %697 = vector.broadcast %cst_176 : f32 to vector<2x1xf32>
    %698 = arith.addf %694, %697 : vector<2x1xf32>
    %699 = math.rsqrt %698 : vector<2x1xf32>
    %700 = vector.broadcast %699 : vector<2x1xf32> to vector<2x8xf32>
    %701 = arith.mulf %696, %700 : vector<2x8xf32>
    %c10_177 = arith.constant 10 : index
    %c0_178 = arith.constant 0 : index
    %702 = vector.load %arg22[%c10_177, %c0_178] : memref<16x8xf32, #tpu.memory_space<vmem>>, vector<2x8xf32>
    tpu.vector_store %arg22[%c10_177, %c0_178], %701 {strides = array<i32>} : memref<16x8xf32, #tpu.memory_space<vmem>>, vector<2x8xf32>,
    %703 = vector.extract_strided_slice %409 {offsets = [12, 0], sizes = [2, 24], strides = [1, 1]} : vector<16x24xf32> to vector<2x24xf32>
    %cst_179 = arith.constant dense<0.000000e+00> : vector<2x24xf32>
    %704 = tpu.matmul %683, %410, %cst_179 {dimension_numbers = #tpu.dot_dimension_numbers<[1], [0], [0], [1], [0, 0, 1, 1], [], []>} : vector<2x8xf32>, vector<8x24xf32>, vector<2x24xf32> -> vector<2x24xf32>
    %705 = vector.extract_strided_slice %703 {offsets = [0, 0], sizes = [2, 8], strides = [1, 1]} : vector<2x24xf32> to vector<2x8xf32>
    %706 = vector.extract_strided_slice %704 {offsets = [0, 0], sizes = [2, 8], strides = [1, 1]} : vector<2x24xf32> to vector<2x8xf32>
    %707 = arith.addf %705, %706 : vector<2x8xf32>
    %708 = arith.negf %707 : vector<2x8xf32>
    %709 = math.exp %708 : vector<2x8xf32>
    %cst_180 = arith.constant 1.000000e+00 : f32
    %710 = vector.broadcast %cst_180 : f32 to vector<2x8xf32>
    %711 = arith.addf %710, %709 : vector<2x8xf32>
    %712 = arith.divf %710, %711 : vector<2x8xf32>
    %713 = vector.extract_strided_slice %703 {offsets = [0, 8], sizes = [2, 8], strides = [1, 1]} : vector<2x24xf32> to vector<2x8xf32>
    %714 = vector.extract_strided_slice %704 {offsets = [0, 8], sizes = [2, 8], strides = [1, 1]} : vector<2x24xf32> to vector<2x8xf32>
    %715 = arith.addf %713, %714 : vector<2x8xf32>
    %716 = arith.negf %715 : vector<2x8xf32>
    %717 = math.exp %716 : vector<2x8xf32>
    %cst_181 = arith.constant 1.000000e+00 : f32
    %718 = vector.broadcast %cst_181 : f32 to vector<2x8xf32>
    %719 = arith.addf %718, %717 : vector<2x8xf32>
    %720 = arith.divf %718, %719 : vector<2x8xf32>
    %721 = vector.extract_strided_slice %703 {offsets = [0, 16], sizes = [2, 8], strides = [1, 1]} : vector<2x24xf32> to vector<2x8xf32>
    %722 = vector.extract_strided_slice %704 {offsets = [0, 16], sizes = [2, 8], strides = [1, 1]} : vector<2x24xf32> to vector<2x8xf32>
    %723 = arith.addf %722, %413 : vector<2x8xf32>
    %724 = arith.mulf %712, %723 : vector<2x8xf32>
    %725 = arith.addf %721, %724 : vector<2x8xf32>
    %726 = math.tanh %725 : vector<2x8xf32>
    %cst_182 = arith.constant 1.000000e+00 : f32
    %727 = vector.broadcast %cst_182 : f32 to vector<2x8xf32>
    %728 = arith.subf %727, %720 : vector<2x8xf32>
    %729 = arith.mulf %728, %726 : vector<2x8xf32>
    %730 = arith.mulf %720, %683 : vector<2x8xf32>
    %731 = arith.addf %729, %730 : vector<2x8xf32>
    %cst_183 = arith.constant dense<0.000000e+00> : vector<2xf32>
    %732 = vector.multi_reduction <add>, %731, %cst_183 [1] : vector<2x8xf32> to vector<2xf32>
    %733 = vector.shape_cast %732 : vector<2xf32> to vector<2x1xf32>
    %cst_184 = arith.constant 8.000000e+00 : f32
    %734 = vector.broadcast %cst_184 : f32 to vector<2x1xf32>
    %735 = arith.divf %733, %734 : vector<2x1xf32>
    %736 = vector.broadcast %735 : vector<2x1xf32> to vector<2x8xf32>
    %737 = arith.subf %731, %736 : vector<2x8xf32>
    %738 = arith.mulf %737, %737 : vector<2x8xf32>
    %cst_185 = arith.constant dense<0.000000e+00> : vector<2xf32>
    %739 = vector.multi_reduction <add>, %738, %cst_185 [1] : vector<2x8xf32> to vector<2xf32>
    %740 = vector.shape_cast %739 : vector<2xf32> to vector<2x1xf32>
    %cst_186 = arith.constant 8.000000e+00 : f32
    %741 = vector.broadcast %cst_186 : f32 to vector<2x1xf32>
    %742 = arith.divf %740, %741 : vector<2x1xf32>
    %743 = vector.broadcast %735 : vector<2x1xf32> to vector<2x8xf32>
    %744 = arith.subf %731, %743 : vector<2x8xf32>
    %cst_187 = arith.constant 9.99999974E-6 : f32
    %745 = vector.broadcast %cst_187 : f32 to vector<2x1xf32>
    %746 = arith.addf %742, %745 : vector<2x1xf32>
    %747 = math.rsqrt %746 : vector<2x1xf32>
    %748 = vector.broadcast %747 : vector<2x1xf32> to vector<2x8xf32>
    %749 = arith.mulf %744, %748 : vector<2x8xf32>
    %c12_188 = arith.constant 12 : index
    %c0_189 = arith.constant 0 : index
    %750 = vector.load %arg22[%c12_188, %c0_189] : memref<16x8xf32, #tpu.memory_space<vmem>>, vector<2x8xf32>
    tpu.vector_store %arg22[%c12_188, %c0_189], %749 {strides = array<i32>} : memref<16x8xf32, #tpu.memory_space<vmem>>, vector<2x8xf32>,
    %751 = vector.extract_strided_slice %409 {offsets = [14, 0], sizes = [2, 24], strides = [1, 1]} : vector<16x24xf32> to vector<2x24xf32>
    %cst_190 = arith.constant dense<0.000000e+00> : vector<2x24xf32>
    %752 = tpu.matmul %731, %410, %cst_190 {dimension_numbers = #tpu.dot_dimension_numbers<[1], [0], [0], [1], [0, 0, 1, 1], [], []>} : vector<2x8xf32>, vector<8x24xf32>, vector<2x24xf32> -> vector<2x24xf32>
    %753 = vector.extract_strided_slice %751 {offsets = [0, 0], sizes = [2, 8], strides = [1, 1]} : vector<2x24xf32> to vector<2x8xf32>
    %754 = vector.extract_strided_slice %752 {offsets = [0, 0], sizes = [2, 8], strides = [1, 1]} : vector<2x24xf32> to vector<2x8xf32>
    %755 = arith.addf %753, %754 : vector<2x8xf32>
    %756 = arith.negf %755 : vector<2x8xf32>
    %757 = math.exp %756 : vector<2x8xf32>
    %cst_191 = arith.constant 1.000000e+00 : f32
    %758 = vector.broadcast %cst_191 : f32 to vector<2x8xf32>
    %759 = arith.addf %758, %757 : vector<2x8xf32>
    %760 = arith.divf %758, %759 : vector<2x8xf32>
    %761 = vector.extract_strided_slice %751 {offsets = [0, 8], sizes = [2, 8], strides = [1, 1]} : vector<2x24xf32> to vector<2x8xf32>
    %762 = vector.extract_strided_slice %752 {offsets = [0, 8], sizes = [2, 8], strides = [1, 1]} : vector<2x24xf32> to vector<2x8xf32>
    %763 = arith.addf %761, %762 : vector<2x8xf32>
    %764 = arith.negf %763 : vector<2x8xf32>
    %765 = math.exp %764 : vector<2x8xf32>
    %cst_192 = arith.constant 1.000000e+00 : f32
    %766 = vector.broadcast %cst_192 : f32 to vector<2x8xf32>
    %767 = arith.addf %766, %765 : vector<2x8xf32>
    %768 = arith.divf %766, %767 : vector<2x8xf32>
    %769 = vector.extract_strided_slice %751 {offsets = [0, 16], sizes = [2, 8], strides = [1, 1]} : vector<2x24xf32> to vector<2x8xf32>
    %770 = vector.extract_strided_slice %752 {offsets = [0, 16], sizes = [2, 8], strides = [1, 1]} : vector<2x24xf32> to vector<2x8xf32>
    %771 = arith.addf %770, %413 : vector<2x8xf32>
    %772 = arith.mulf %760, %771 : vector<2x8xf32>
    %773 = arith.addf %769, %772 : vector<2x8xf32>
    %774 = math.tanh %773 : vector<2x8xf32>
    %cst_193 = arith.constant 1.000000e+00 : f32
    %775 = vector.broadcast %cst_193 : f32 to vector<2x8xf32>
    %776 = arith.subf %775, %768 : vector<2x8xf32>
    %777 = arith.mulf %776, %774 : vector<2x8xf32>
    %778 = arith.mulf %768, %731 : vector<2x8xf32>
    %779 = arith.addf %777, %778 : vector<2x8xf32>
    %cst_194 = arith.constant dense<0.000000e+00> : vector<2xf32>
    %780 = vector.multi_reduction <add>, %779, %cst_194 [1] : vector<2x8xf32> to vector<2xf32>
    %781 = vector.shape_cast %780 : vector<2xf32> to vector<2x1xf32>
    %cst_195 = arith.constant 8.000000e+00 : f32
    %782 = vector.broadcast %cst_195 : f32 to vector<2x1xf32>
    %783 = arith.divf %781, %782 : vector<2x1xf32>
    %784 = vector.broadcast %783 : vector<2x1xf32> to vector<2x8xf32>
    %785 = arith.subf %779, %784 : vector<2x8xf32>
    %786 = arith.mulf %785, %785 : vector<2x8xf32>
    %cst_196 = arith.constant dense<0.000000e+00> : vector<2xf32>
    %787 = vector.multi_reduction <add>, %786, %cst_196 [1] : vector<2x8xf32> to vector<2xf32>
    %788 = vector.shape_cast %787 : vector<2xf32> to vector<2x1xf32>
    %cst_197 = arith.constant 8.000000e+00 : f32
    %789 = vector.broadcast %cst_197 : f32 to vector<2x1xf32>
    %790 = arith.divf %788, %789 : vector<2x1xf32>
    %791 = vector.broadcast %783 : vector<2x1xf32> to vector<2x8xf32>
    %792 = arith.subf %779, %791 : vector<2x8xf32>
    %cst_198 = arith.constant 9.99999974E-6 : f32
    %793 = vector.broadcast %cst_198 : f32 to vector<2x1xf32>
    %794 = arith.addf %790, %793 : vector<2x1xf32>
    %795 = math.rsqrt %794 : vector<2x1xf32>
    %796 = vector.broadcast %795 : vector<2x1xf32> to vector<2x8xf32>
    %797 = arith.mulf %792, %796 : vector<2x8xf32>
    %c14_199 = arith.constant 14 : index
    %c0_200 = arith.constant 0 : index
    %798 = vector.load %arg22[%c14_199, %c0_200] : memref<16x8xf32, #tpu.memory_space<vmem>>, vector<2x8xf32>
    tpu.vector_store %arg22[%c14_199, %c0_200], %797 {strides = array<i32>} : memref<16x8xf32, #tpu.memory_space<vmem>>, vector<2x8xf32>,
    %c0_201 = arith.constant 0 : index
    %c0_202 = arith.constant 0 : index
    %799 = vector.load %arg22[%c0_201, %c0_202] : memref<16x8xf32, #tpu.memory_space<vmem>>, vector<16x8xf32>
    %c0_203 = arith.constant 0 : index
    %c0_204 = arith.constant 0 : index
    %800 = vector.load %arg10[%c0_203, %c0_204] : memref<8x2xf32, #tpu.memory_space<vmem>>, vector<8x2xf32>
    %cst_205 = arith.constant dense<0.000000e+00> : vector<16x2xf32>
    %801 = tpu.matmul %799, %800, %cst_205 {dimension_numbers = #tpu.dot_dimension_numbers<[1], [0], [0], [1], [0, 0, 1, 1], [], []>} : vector<16x8xf32>, vector<8x2xf32>, vector<16x2xf32> -> vector<16x2xf32>
    %c0_206 = arith.constant 0 : index
    %c0_207 = arith.constant 0 : index
    %802 = vector.load %arg11[%c0_206, %c0_207] : memref<1x2xf32, #tpu.memory_space<vmem>>, vector<1x2xf32>
    %803 = vector.broadcast %802 : vector<1x2xf32> to vector<16x2xf32>
    %804 = arith.addf %801, %803 : vector<16x2xf32>
    %cst_208 = arith.constant dense<0.000000e+00> : vector<16xf32>
    %805 = vector.multi_reduction <add>, %804, %cst_208 [1] : vector<16x2xf32> to vector<16xf32>
    %806 = vector.shape_cast %805 : vector<16xf32> to vector<16x1xf32>
    %cst_209 = arith.constant 2.000000e+00 : f32
    %807 = vector.broadcast %cst_209 : f32 to vector<16x1xf32>
    %808 = arith.divf %806, %807 : vector<16x1xf32>
    %809 = vector.broadcast %808 : vector<16x1xf32> to vector<16x2xf32>
    %810 = arith.subf %804, %809 : vector<16x2xf32>
    %811 = arith.mulf %810, %810 : vector<16x2xf32>
    %cst_210 = arith.constant dense<0.000000e+00> : vector<16xf32>
    %812 = vector.multi_reduction <add>, %811, %cst_210 [1] : vector<16x2xf32> to vector<16xf32>
    %813 = vector.shape_cast %812 : vector<16xf32> to vector<16x1xf32>
    %cst_211 = arith.constant 2.000000e+00 : f32
    %814 = vector.broadcast %cst_211 : f32 to vector<16x1xf32>
    %815 = arith.divf %813, %814 : vector<16x1xf32>
    %816 = vector.broadcast %808 : vector<16x1xf32> to vector<16x2xf32>
    %817 = arith.subf %804, %816 : vector<16x2xf32>
    %cst_212 = arith.constant 9.99999974E-6 : f32
    %818 = vector.broadcast %cst_212 : f32 to vector<16x1xf32>
    %819 = arith.addf %815, %818 : vector<16x1xf32>
    %820 = math.rsqrt %819 : vector<16x1xf32>
    %821 = vector.broadcast %820 : vector<16x1xf32> to vector<16x2xf32>
    %822 = arith.mulf %817, %821 : vector<16x2xf32>
    %c0_213 = arith.constant 0 : index
    %c0_214 = arith.constant 0 : index
    %823 = vector.load %arg12[%c0_213, %c0_214] : memref<1x2xf32, #tpu.memory_space<vmem>>, vector<1x2xf32>
    %824 = vector.broadcast %823 : vector<1x2xf32> to vector<16x2xf32>
    %825 = arith.mulf %822, %824 : vector<16x2xf32>
    %c0_215 = arith.constant 0 : index
    %c0_216 = arith.constant 0 : index
    %826 = vector.load %arg13[%c0_215, %c0_216] : memref<1x2xf32, #tpu.memory_space<vmem>>, vector<1x2xf32>
    %827 = vector.broadcast %826 : vector<1x2xf32> to vector<16x2xf32>
    %828 = arith.addf %825, %827 : vector<16x2xf32>
    %829 = math.tanh %828 : vector<16x2xf32>
    %c0_217 = arith.constant 0 : index
    %c0_218 = arith.constant 0 : index
    %830 = vector.load %arg14[%c0_217, %c0_218] : memref<1x2xf32, #tpu.memory_space<vmem>>, vector<1x2xf32>
    %831 = vector.broadcast %830 : vector<1x2xf32> to vector<16x2xf32>
    %832 = arith.mulf %829, %831 : vector<16x2xf32>
    %cst_219 = arith.constant dense<0.000000e+00> : vector<16xf32>
    %833 = vector.multi_reduction <add>, %832, %cst_219 [1] : vector<16x2xf32> to vector<16xf32>
    %834 = vector.shape_cast %833 : vector<16xf32> to vector<16x1xf32>
    %c0_220 = arith.constant 0 : index
    %c0_221 = arith.constant 0 : index
    %835 = vector.load %arg15[%c0_220, %c0_221] : memref<1x1xf32, #tpu.memory_space<vmem>>, vector<1x1xf32>
    %836 = vector.broadcast %835 : vector<1x1xf32> to vector<16x1xf32>
    %837 = arith.addf %834, %836 : vector<16x1xf32>
    %838 = vector.extract_strided_slice %837 {offsets = [0, 0], sizes = [2, 1], strides = [1, 1]} : vector<16x1xf32> to vector<2x1xf32>
    %839 = vector.extract_strided_slice %837 {offsets = [2, 0], sizes = [2, 1], strides = [1, 1]} : vector<16x1xf32> to vector<2x1xf32>
    %840 = arith.maximumf %838, %839 : vector<2x1xf32>
    %841 = vector.extract_strided_slice %837 {offsets = [4, 0], sizes = [2, 1], strides = [1, 1]} : vector<16x1xf32> to vector<2x1xf32>
    %842 = arith.maximumf %840, %841 : vector<2x1xf32>
    %843 = vector.extract_strided_slice %837 {offsets = [6, 0], sizes = [2, 1], strides = [1, 1]} : vector<16x1xf32> to vector<2x1xf32>
    %844 = arith.maximumf %842, %843 : vector<2x1xf32>
    %845 = vector.extract_strided_slice %837 {offsets = [8, 0], sizes = [2, 1], strides = [1, 1]} : vector<16x1xf32> to vector<2x1xf32>
    %846 = arith.maximumf %844, %845 : vector<2x1xf32>
    %847 = vector.extract_strided_slice %837 {offsets = [10, 0], sizes = [2, 1], strides = [1, 1]} : vector<16x1xf32> to vector<2x1xf32>
    %848 = arith.maximumf %846, %847 : vector<2x1xf32>
    %849 = vector.extract_strided_slice %837 {offsets = [12, 0], sizes = [2, 1], strides = [1, 1]} : vector<16x1xf32> to vector<2x1xf32>
    %850 = arith.maximumf %848, %849 : vector<2x1xf32>
    %851 = vector.extract_strided_slice %837 {offsets = [14, 0], sizes = [2, 1], strides = [1, 1]} : vector<16x1xf32> to vector<2x1xf32>
    %852 = arith.maximumf %850, %851 : vector<2x1xf32>
    %cst_222 = arith.constant 0.000000e+00 : f32
    %853 = vector.broadcast %cst_222 : f32 to vector<2x1xf32>
    %854 = vector.extract_strided_slice %837 {offsets = [0, 0], sizes = [2, 1], strides = [1, 1]} : vector<16x1xf32> to vector<2x1xf32>
    %855 = arith.subf %854, %852 : vector<2x1xf32>
    %856 = math.exp %855 : vector<2x1xf32>
    %857 = arith.addf %853, %856 : vector<2x1xf32>
    %858 = vector.extract_strided_slice %837 {offsets = [2, 0], sizes = [2, 1], strides = [1, 1]} : vector<16x1xf32> to vector<2x1xf32>
    %859 = arith.subf %858, %852 : vector<2x1xf32>
    %860 = math.exp %859 : vector<2x1xf32>
    %861 = arith.addf %857, %860 : vector<2x1xf32>
    %862 = vector.extract_strided_slice %837 {offsets = [4, 0], sizes = [2, 1], strides = [1, 1]} : vector<16x1xf32> to vector<2x1xf32>
    %863 = arith.subf %862, %852 : vector<2x1xf32>
    %864 = math.exp %863 : vector<2x1xf32>
    %865 = arith.addf %861, %864 : vector<2x1xf32>
    %866 = vector.extract_strided_slice %837 {offsets = [6, 0], sizes = [2, 1], strides = [1, 1]} : vector<16x1xf32> to vector<2x1xf32>
    %867 = arith.subf %866, %852 : vector<2x1xf32>
    %868 = math.exp %867 : vector<2x1xf32>
    %869 = arith.addf %865, %868 : vector<2x1xf32>
    %870 = vector.extract_strided_slice %837 {offsets = [8, 0], sizes = [2, 1], strides = [1, 1]} : vector<16x1xf32> to vector<2x1xf32>
    %871 = arith.subf %870, %852 : vector<2x1xf32>
    %872 = math.exp %871 : vector<2x1xf32>
    %873 = arith.addf %869, %872 : vector<2x1xf32>
    %874 = vector.extract_strided_slice %837 {offsets = [10, 0], sizes = [2, 1], strides = [1, 1]} : vector<16x1xf32> to vector<2x1xf32>
    %875 = arith.subf %874, %852 : vector<2x1xf32>
    %876 = math.exp %875 : vector<2x1xf32>
    %877 = arith.addf %873, %876 : vector<2x1xf32>
    %878 = vector.extract_strided_slice %837 {offsets = [12, 0], sizes = [2, 1], strides = [1, 1]} : vector<16x1xf32> to vector<2x1xf32>
    %879 = arith.subf %878, %852 : vector<2x1xf32>
    %880 = math.exp %879 : vector<2x1xf32>
    %881 = arith.addf %877, %880 : vector<2x1xf32>
    %882 = vector.extract_strided_slice %837 {offsets = [14, 0], sizes = [2, 1], strides = [1, 1]} : vector<16x1xf32> to vector<2x1xf32>
    %883 = arith.subf %882, %852 : vector<2x1xf32>
    %884 = math.exp %883 : vector<2x1xf32>
    %885 = arith.addf %881, %884 : vector<2x1xf32>
    %cst_223 = arith.constant 1.000000e+00 : f32
    %886 = vector.broadcast %cst_223 : f32 to vector<2x1xf32>
    %887 = arith.divf %886, %885 : vector<2x1xf32>
    %888 = arith.mulf %856, %887 : vector<2x1xf32>
    %c0_224 = arith.constant 0 : index
    %c0_225 = arith.constant 0 : index
    %889 = vector.load %arg23[%c0_224, %c0_225] : memref<16x1xf32, #tpu.memory_space<vmem>>, vector<2x1xf32>
    tpu.vector_store %arg23[%c0_224, %c0_225], %888 {strides = array<i32>} : memref<16x1xf32, #tpu.memory_space<vmem>>, vector<2x1xf32>,
    %890 = arith.mulf %860, %887 : vector<2x1xf32>
    %c2_226 = arith.constant 2 : index
    %c0_227 = arith.constant 0 : index
    %891 = vector.load %arg23[%c2_226, %c0_227] : memref<16x1xf32, #tpu.memory_space<vmem>>, vector<2x1xf32>
    tpu.vector_store %arg23[%c2_226, %c0_227], %890 {strides = array<i32>} : memref<16x1xf32, #tpu.memory_space<vmem>>, vector<2x1xf32>,
    %892 = arith.mulf %864, %887 : vector<2x1xf32>
    %c4_228 = arith.constant 4 : index
    %c0_229 = arith.constant 0 : index
    %893 = vector.load %arg23[%c4_228, %c0_229] : memref<16x1xf32, #tpu.memory_space<vmem>>, vector<2x1xf32>
    tpu.vector_store %arg23[%c4_228, %c0_229], %892 {strides = array<i32>} : memref<16x1xf32, #tpu.memory_space<vmem>>, vector<2x1xf32>,
    %894 = arith.mulf %868, %887 : vector<2x1xf32>
    %c6_230 = arith.constant 6 : index
    %c0_231 = arith.constant 0 : index
    %895 = vector.load %arg23[%c6_230, %c0_231] : memref<16x1xf32, #tpu.memory_space<vmem>>, vector<2x1xf32>
    tpu.vector_store %arg23[%c6_230, %c0_231], %894 {strides = array<i32>} : memref<16x1xf32, #tpu.memory_space<vmem>>, vector<2x1xf32>,
    %896 = arith.mulf %872, %887 : vector<2x1xf32>
    %c8_232 = arith.constant 8 : index
    %c0_233 = arith.constant 0 : index
    %897 = vector.load %arg23[%c8_232, %c0_233] : memref<16x1xf32, #tpu.memory_space<vmem>>, vector<2x1xf32>
    tpu.vector_store %arg23[%c8_232, %c0_233], %896 {strides = array<i32>} : memref<16x1xf32, #tpu.memory_space<vmem>>, vector<2x1xf32>,
    %898 = arith.mulf %876, %887 : vector<2x1xf32>
    %c10_234 = arith.constant 10 : index
    %c0_235 = arith.constant 0 : index
    %899 = vector.load %arg23[%c10_234, %c0_235] : memref<16x1xf32, #tpu.memory_space<vmem>>, vector<2x1xf32>
    tpu.vector_store %arg23[%c10_234, %c0_235], %898 {strides = array<i32>} : memref<16x1xf32, #tpu.memory_space<vmem>>, vector<2x1xf32>,
    %900 = arith.mulf %880, %887 : vector<2x1xf32>
    %c12_236 = arith.constant 12 : index
    %c0_237 = arith.constant 0 : index
    %901 = vector.load %arg23[%c12_236, %c0_237] : memref<16x1xf32, #tpu.memory_space<vmem>>, vector<2x1xf32>
    tpu.vector_store %arg23[%c12_236, %c0_237], %900 {strides = array<i32>} : memref<16x1xf32, #tpu.memory_space<vmem>>, vector<2x1xf32>,
    %902 = arith.mulf %884, %887 : vector<2x1xf32>
    %c14_238 = arith.constant 14 : index
    %c0_239 = arith.constant 0 : index
    %903 = vector.load %arg23[%c14_238, %c0_239] : memref<16x1xf32, #tpu.memory_space<vmem>>, vector<2x1xf32>
    tpu.vector_store %arg23[%c14_238, %c0_239], %902 {strides = array<i32>} : memref<16x1xf32, #tpu.memory_space<vmem>>, vector<2x1xf32>,
    %c0_240 = arith.constant 0 : index
    %c0_241 = arith.constant 0 : index
    %904 = vector.load %arg23[%c0_240, %c0_241] : memref<16x1xf32, #tpu.memory_space<vmem>>, vector<16x1xf32>
    %c0_242 = arith.constant 0 : index
    %c0_243 = arith.constant 0 : index
    %905 = vector.load %arg22[%c0_242, %c0_243] : memref<16x8xf32, #tpu.memory_space<vmem>>, vector<16x8xf32>
    %906 = vector.broadcast %904 : vector<16x1xf32> to vector<16x8xf32>
    %907 = arith.mulf %906, %905 : vector<16x8xf32>
    %cst_244 = arith.constant 0.000000e+00 : f32
    %908 = vector.broadcast %cst_244 : f32 to vector<16x8xf32>
    %909 = arith.maximumf %907, %908 : vector<16x8xf32>
    %c0_245 = arith.constant 0 : index
    %c0_246 = arith.constant 0 : index
    %910 = vector.load %arg19[%c0_245, %c0_246] : memref<16x8xf32, #tpu.memory_space<vmem>>, vector<16x8xf32>
    tpu.vector_store %arg19[%c0_245, %c0_246], %909 {strides = array<i32>} : memref<16x8xf32, #tpu.memory_space<vmem>>, vector<16x8xf32>,
    return
  }
  func.func @transform_0(%arg0: i32) -> (i32, i32) {
    %c0_i32 = arith.constant 0 : i32
    %c0_i32_0 = arith.constant 0 : i32
    %c0_i32_1 = arith.constant 0 : i32
    return %c0_i32, %c0_i32_0 : i32, i32
  }
  func.func @transform_1(%arg0: i32) -> (i32, i32) {
    %c0_i32 = arith.constant 0 : i32
    %c0_i32_0 = arith.constant 0 : i32
    %c0_i32_1 = arith.constant 0 : i32
    return %c0_i32, %c0_i32_0 : i32, i32
  }
  func.func @transform_2(%arg0: i32) -> (i32, i32) {
    %c0_i32 = arith.constant 0 : i32
    %c0_i32_0 = arith.constant 0 : i32
    %c0_i32_1 = arith.constant 0 : i32
    return %c0_i32, %c0_i32_0 : i32, i32
  }
  func.func @transform_3(%arg0: i32) -> (i32, i32) {
    %c0_i32 = arith.constant 0 : i32
    %c0_i32_0 = arith.constant 0 : i32
    %c0_i32_1 = arith.constant 0 : i32
    return %c0_i32, %c0_i32_0 : i32, i32
  }
  func.func @transform_4(%arg0: i32) -> (i32, i32) {
    %c0_i32 = arith.constant 0 : i32
    %c0_i32_0 = arith.constant 0 : i32
    %c0_i32_1 = arith.constant 0 : i32
    return %c0_i32, %c0_i32_0 : i32, i32
  }
  func.func @transform_5(%arg0: i32) -> (i32, i32) {
    %c0_i32 = arith.constant 0 : i32
    %c0_i32_0 = arith.constant 0 : i32
    %c0_i32_1 = arith.constant 0 : i32
    return %c0_i32, %c0_i32_0 : i32, i32
  }
  func.func @transform_6(%arg0: i32) -> (i32, i32) {
    %c0_i32 = arith.constant 0 : i32
    %c0_i32_0 = arith.constant 0 : i32
    %c0_i32_1 = arith.constant 0 : i32
    return %c0_i32, %c0_i32_0 : i32, i32
  }
  func.func @transform_7(%arg0: i32) -> (i32, i32) {
    %c0_i32 = arith.constant 0 : i32
    %c0_i32_0 = arith.constant 0 : i32
    %c0_i32_1 = arith.constant 0 : i32
    return %c0_i32, %c0_i32_0 : i32, i32
  }
  func.func @transform_8(%arg0: i32) -> (i32, i32) {
    %c0_i32 = arith.constant 0 : i32
    %c0_i32_0 = arith.constant 0 : i32
    %c0_i32_1 = arith.constant 0 : i32
    return %c0_i32, %c0_i32_0 : i32, i32
  }
  func.func @transform_9(%arg0: i32) -> (i32, i32) {
    %c0_i32 = arith.constant 0 : i32
    %c0_i32_0 = arith.constant 0 : i32
    %c0_i32_1 = arith.constant 0 : i32
    return %c0_i32, %c0_i32_0 : i32, i32
  }
  func.func @transform_10(%arg0: i32) -> (i32, i32) {
    %c0_i32 = arith.constant 0 : i32
    %c0_i32_0 = arith.constant 0 : i32
    %c0_i32_1 = arith.constant 0 : i32
    return %c0_i32, %c0_i32_0 : i32, i32
  }
  func.func @transform_11(%arg0: i32) -> (i32, i32) {
    %c0_i32 = arith.constant 0 : i32
    %c0_i32_0 = arith.constant 0 : i32
    %c0_i32_1 = arith.constant 0 : i32
    return %c0_i32, %c0_i32_0 : i32, i32
  }
  func.func @transform_12(%arg0: i32) -> (i32, i32) {
    %c0_i32 = arith.constant 0 : i32
    %c0_i32_0 = arith.constant 0 : i32
    %c0_i32_1 = arith.constant 0 : i32
    return %c0_i32, %c0_i32_0 : i32, i32
  }
  func.func @transform_13(%arg0: i32) -> (i32, i32) {
    %c0_i32 = arith.constant 0 : i32
    %c0_i32_0 = arith.constant 0 : i32
    %c0_i32_1 = arith.constant 0 : i32
    return %c0_i32, %c0_i32_0 : i32, i32
  }
  func.func @transform_14(%arg0: i32) -> (i32, i32) {
    %c0_i32 = arith.constant 0 : i32
    %c0_i32_0 = arith.constant 0 : i32
    %c0_i32_1 = arith.constant 0 : i32
    return %c0_i32, %c0_i32_0 : i32, i32
  }
  func.func @transform_15(%arg0: i32) -> (i32, i32) {
    %c0_i32 = arith.constant 0 : i32
    %c0_i32_0 = arith.constant 0 : i32
    %c0_i32_1 = arith.constant 0 : i32
    return %c0_i32, %c0_i32_0 : i32, i32
  }
  func.func @transform_16(%arg0: i32) -> (i32, i32) {
    %c0_i32 = arith.constant 0 : i32
    %c0_i32_0 = arith.constant 0 : i32
    %c0_i32_1 = arith.constant 0 : i32
    return %c0_i32, %c0_i32_0 : i32, i32
  }
  func.func @transform_17(%arg0: i32) -> (i32, i32) {
    %c0_i32 = arith.constant 0 : i32
    %c0_i32_0 = arith.constant 0 : i32
    %c0_i32_1 = arith.constant 0 : i32
    return %c0_i32, %c0_i32_0 : i32, i32
  }
  func.func @transform_18(%arg0: i32) -> (i32, i32) {
    %c0_i32 = arith.constant 0 : i32
    %c0_i32_0 = arith.constant 0 : i32
    %c0_i32_1 = arith.constant 0 : i32
    return %c0_i32, %c0_i32_0 : i32, i32
  }
  func.func @transform_19(%arg0: i32) -> (i32, i32) {
    %c0_i32 = arith.constant 0 : i32
    %c0_i32_0 = arith.constant 0 : i32
    %c0_i32_1 = arith.constant 0 : i32
    return %c0_i32, %c0_i32_0 : i32, i32
  }
}

</mosaic_0001>

<llo_original>
// kernel: tpu_custom_call.1
$region0: #{tpu_custom_call.1}
  #allocation0 [shape = 'u32[]', space=smem, size = 0x4, offset = 0x4, fixed_abs, tag = 'smem constant byte address 0x4 - core index']
  #allocation1 [shape = 'u32[72,128]{1,0:T(1,128)}', space=vmem, size = 0x9000, scoped, tag = 'internal scratch']
  #allocation2 [shape = 'f32[16,4]{1,0:T(8,128)}', space=vmem, size = 0x2000, scoped, tag = 'scratch operand']
  #allocation3 [shape = 'f32[16,8]{1,0:T(8,128)}', space=vmem, size = 0x2000, scoped, tag = 'scratch operand']
  #allocation4 [shape = 'f32[16,1]{1,0:T(8,128)}', space=vmem, size = 0x2000, scoped, tag = 'scratch operand']
  #allocation5 [shape = 'f32[1,1]{1,0:T(1,128)S(1)}', space=vmem, size = 0x200, scoped, tag = 'scoped memory for tpu_custom_call.1']
  %s0 = inlined_call_operand.vmem [shape: f32[16,4], index: 0, kind: input, shape index: {}]
  %s1 = inlined_call_operand.hbm [shape: f32[4,12], index: 1, kind: input, shape index: {}]
  %s2 = inlined_call_operand.hbm [shape: f32[4,12], index: 2, kind: input, shape index: {}]
  %s3 = inlined_call_operand.vmem [shape: f32[1,12], index: 3, kind: input, shape index: {}]
  %s4 = inlined_call_operand.vmem [shape: f32[1,4], index: 4, kind: input, shape index: {}]
  %s5 = inlined_call_operand.vmem [shape: f32[4,24], index: 5, kind: input, shape index: {}]
  %s6 = inlined_call_operand.vmem [shape: f32[8,24], index: 6, kind: input, shape index: {}]
  %s7 = inlined_call_operand.vmem [shape: f32[1,24], index: 7, kind: input, shape index: {}]
  %s8 = inlined_call_operand.vmem [shape: f32[1,8], index: 8, kind: input, shape index: {}]
  %s9 = inlined_call_operand.vmem [shape: f32[8,2], index: 9, kind: input, shape index: {}]
  %s10 = inlined_call_operand.vmem [shape: f32[1,2], index: 10, kind: input, shape index: {}]
  %s11 = inlined_call_operand.vmem [shape: f32[1,2], index: 11, kind: input, shape index: {}]
  %s12 = inlined_call_operand.vmem [shape: f32[1,2], index: 12, kind: input, shape index: {}]
  %s13 = inlined_call_operand.vmem [shape: f32[1,2], index: 13, kind: input, shape index: {}]
  %s14 = inlined_call_operand.<no memory space> [shape: f32[1,1], index: 14, kind: input, shape index: {}]
  %s15 = inlined_call_operand.vmem [shape: f32[8,8], index: 15, kind: input, shape index: {}]
  %s16 = inlined_call_operand.vmem [shape: f32[8,6], index: 16, kind: input, shape index: {}]
  %s17 = inlined_call_operand.vmem [shape: f32[1,6], index: 17, kind: input, shape index: {}]
  %s18 = inlined_call_operand.vmem [shape: f32[16,8], index: 18, kind: output, shape index: {0}]
  %s19 = inlined_call_operand.hbm [shape: f32[8,6], index: 19, kind: output, shape index: {1}]
  %20 = xla_tuple %s18, %s19
  %s21 = sld [smem:[#allocation0]]
  $region98: #{tpu_custom_call.1} parent=0
    _
  %s23 = ssub.s32 1, %s21
  %s24 = scalar_select 0, %s23, %s21
  %v25 = vstv %s14
  %26 = vst [vmem:[#allocation5] sm:$0x1] %v25
  $region1: #{tpu_custom_call.1} parent=0
    #allocation6 [shape = 'u8[2048]{0}', space=vmem, size = 0x800, scoped, tag = 'input window, operand 1, single buffered']
    #allocation7 [shape = 's32[1]{0}', space=sflag, size = 0x4, scoped, tag = 'scoped memory for tpu_custom_call.1']
    #allocation8 [shape = 's32[1]{0}', space=sflag, size = 0x4, scoped, tag = 'scoped memory for tpu_custom_call.1']
    #allocation9 [shape = 'u8[2048]{0}', space=vmem, size = 0x800, scoped, tag = 'input window, operand 2, single buffered']
    #allocation10 [shape = 's32[1]{0}', space=sflag, size = 0x4, scoped, tag = 'scoped memory for tpu_custom_call.1']
    #allocation11 [shape = 'u8[4096]{0}', space=vmem, size = 0x1000, scoped, tag = 'output window, operand 1, single buffered']
    %27 = vsyncpa [#allocation7], 0
    %28 = vsyncpa [#allocation10], 0
    %29 = vsyncpa [#allocation8], 0
    // Predicated region
    $region2: #{tpu_custom_call.1} parent=1 // pred_check
      _
    $region3: #{tpu_custom_call.1} parent=1 // pred_check_branch
      %31 = sbr.rel (0) target = $region5
    $region4: #{tpu_custom_call.1} parent=1 // pred_region
      _
    $region5: #{tpu_custom_call.1} parent=1 // pred_fallthru
      _
    // Predicated region
    $region6: #{tpu_custom_call.1} parent=1 // pred_check
      _
    $region7: #{tpu_custom_call.1} parent=1 // pred_check_branch
      %33 = sbr.rel (0) target = $region9
    $region8: #{tpu_custom_call.1} parent=1 // pred_region
      %35 = vsyncadd [#allocation7], 0
      %s37 = sshll.u32 %s1, 4
      %s38 = int_to_ptr.hbm [resolvable:$true] %s37
      %s39 = sshll.u32 [#allocation6], 4
      %s40 = int_to_ptr.vmem [resolvable:$true] %s39
      %42 = dma.hbm_to_vmem [thread:$0]  %s38, 64, %s40, [#allocation7]
    $region9: #{tpu_custom_call.1} parent=1 // pred_fallthru
      _
    // Predicated region
    $region10: #{tpu_custom_call.1} parent=1 // pred_check
      _
    $region11: #{tpu_custom_call.1} parent=1 // pred_check_branch
      %44 = sbr.rel (0) target = $region13
    $region12: #{tpu_custom_call.1} parent=1 // pred_region
      %46 = vsyncadd [#allocation10], 0
      %s48 = sshll.u32 %s2, 4
      %s49 = int_to_ptr.hbm [resolvable:$true] %s48
      %s50 = sshll.u32 [#allocation9], 4
      %s51 = int_to_ptr.vmem [resolvable:$true] %s50
      %53 = dma.hbm_to_vmem [thread:$0]  %s49, 64, %s51, [#allocation10]
    $region13: #{tpu_custom_call.1} parent=1 // pred_fallthru
      _
    // Predicated region
    $region14: #{tpu_custom_call.1} parent=1 // pred_check
      _
    $region15: #{tpu_custom_call.1} parent=1 // pred_check_branch
      %55 = sbr.rel (0) target = $region17
    $region16: #{tpu_custom_call.1} parent=1 // pred_region
      _
    $region17: #{tpu_custom_call.1} parent=1 // pred_fallthru
      _
    // Predicated region
    $region18: #{tpu_custom_call.1} parent=1 // pred_check
      _
    $region19: #{tpu_custom_call.1} parent=1 // pred_check_branch
      %57 = sbr.rel (0) target = $region21
    $region20: #{tpu_custom_call.1} parent=1 // pred_region
      _
    $region21: #{tpu_custom_call.1} parent=1 // pred_fallthru
      _
    // Predicated region
    $region22: #{tpu_custom_call.1} parent=1 // pred_check
      _
    $region23: #{tpu_custom_call.1} parent=1 // pred_check_branch
      %59 = sbr.rel (0) target = $region25
    $region24: #{tpu_custom_call.1} parent=1 // pred_region
      _
    $region25: #{tpu_custom_call.1} parent=1 // pred_fallthru
      _
    // Predicated region
    $region26: #{tpu_custom_call.1} parent=1 // pred_check
      _
    $region27: #{tpu_custom_call.1} parent=1 // pred_check_branch
      %61 = sbr.rel (0) target = $region29
    $region28: #{tpu_custom_call.1} parent=1 // pred_region
      _
    $region29: #{tpu_custom_call.1} parent=1 // pred_fallthru
      _
    // Predicated region
    $region30: #{tpu_custom_call.1} parent=1 // pred_check
      _
    $region31: #{tpu_custom_call.1} parent=1 // pred_check_branch
      %63 = sbr.rel (0) target = $region33
    $region32: #{tpu_custom_call.1} parent=1 // pred_region
      _
    $region33: #{tpu_custom_call.1} parent=1 // pred_fallthru
      _
    // Predicated region
    $region34: #{tpu_custom_call.1} parent=1 // pred_check
      _
    $region35: #{tpu_custom_call.1} parent=1 // pred_check_branch
      %65 = sbr.rel (0) target = $region37
    $region36: #{tpu_custom_call.1} parent=1 // pred_region
      _
    $region37: #{tpu_custom_call.1} parent=1 // pred_fallthru
      _
    // Predicated region
    $region38: #{tpu_custom_call.1} parent=1 // pred_check
      _
    $region39: #{tpu_custom_call.1} parent=1 // pred_check_branch
      %67 = sbr.rel (0) target = $region41
    $region40: #{tpu_custom_call.1} parent=1 // pred_region
      _
    $region41: #{tpu_custom_call.1} parent=1 // pred_fallthru
      _
    // Predicated region
    $region42: #{tpu_custom_call.1} parent=1 // pred_check
      _
    $region43: #{tpu_custom_call.1} parent=1 // pred_check_branch
      %69 = sbr.rel (0) target = $region45
    $region44: #{tpu_custom_call.1} parent=1 // pred_region
      _
    $region45: #{tpu_custom_call.1} parent=1 // pred_fallthru
      _
    // Predicated region
    $region46: #{tpu_custom_call.1} parent=1 // pred_check
      _
    $region47: #{tpu_custom_call.1} parent=1 // pred_check_branch
      %71 = sbr.rel (0) target = $region49
    $region48: #{tpu_custom_call.1} parent=1 // pred_region
      _
    $region49: #{tpu_custom_call.1} parent=1 // pred_fallthru
      _
    // Predicated region
    $region50: #{tpu_custom_call.1} parent=1 // pred_check
      _
    $region51: #{tpu_custom_call.1} parent=1 // pred_check_branch
      %73 = sbr.rel (0) target = $region53
    $region52: #{tpu_custom_call.1} parent=1 // pred_region
      _
    $region53: #{tpu_custom_call.1} parent=1 // pred_fallthru
      _
    // Predicated region
    $region54: #{tpu_custom_call.1} parent=1 // pred_check
      _
    $region55: #{tpu_custom_call.1} parent=1 // pred_check_branch
      %75 = sbr.rel (0) target = $region57
    $region56: #{tpu_custom_call.1} parent=1 // pred_region
      _
    $region57: #{tpu_custom_call.1} parent=1 // pred_fallthru
      _
    // Predicated region
    $region58: #{tpu_custom_call.1} parent=1 // pred_check
      _
    $region59: #{tpu_custom_call.1} parent=1 // pred_check_branch
      %77 = sbr.rel (0) target = $region61
    $region60: #{tpu_custom_call.1} parent=1 // pred_region
      _
    $region61: #{tpu_custom_call.1} parent=1 // pred_fallthru
      _
    // Predicated region
    $region62: #{tpu_custom_call.1} parent=1 // pred_check
      _
    $region63: #{tpu_custom_call.1} parent=1 // pred_check_branch
      %79 = sbr.rel (0) target = $region65
    $region64: #{tpu_custom_call.1} parent=1 // pred_region
      _
    $region65: #{tpu_custom_call.1} parent=1 // pred_fallthru
      _
    // Predicated region
    $region66: #{tpu_custom_call.1} parent=1 // pred_check
      _
    $region67: #{tpu_custom_call.1} parent=1 // pred_check_branch
      %81 = sbr.rel (0) target = $region69
    $region68: #{tpu_custom_call.1} parent=1 // pred_region
      _
    $region69: #{tpu_custom_call.1} parent=1 // pred_fallthru
      _
    // Predicated region
    $region70: #{tpu_custom_call.1} parent=1 // pred_check
      _
    $region71: #{tpu_custom_call.1} parent=1 // pred_check_branch
      %83 = sbr.rel (0) target = $region73
    $region72: #{tpu_custom_call.1} parent=1 // pred_region
      _
    $region73: #{tpu_custom_call.1} parent=1 // pred_fallthru
      _
    // Predicated region
    $region74: #{tpu_custom_call.1} parent=1 // pred_check
      _
    $region75: #{tpu_custom_call.1} parent=1 // pred_check_branch
      %85 = sbr.rel (0) target = $region77
    $region76: #{tpu_custom_call.1} parent=1 // pred_region
      %87 = dma.done [#allocation7], 64
    $region77: #{tpu_custom_call.1} parent=1 // pred_fallthru
      _
    // Predicated region
    $region78: #{tpu_custom_call.1} parent=1 // pred_check
      _
    $region79: #{tpu_custom_call.1} parent=1 // pred_check_branch
      %89 = sbr.rel (0) target = $region81
    $region80: #{tpu_custom_call.1} parent=1 // pred_region
      %91 = dma.done [#allocation10], 64
    $region81: #{tpu_custom_call.1} parent=1 // pred_fallthru
      _
    %v92 = vld [vmem:[%s15] sm:$0xff]
    %v93 = vld [vmem:[%s16] sm:$0xff]
    %v94 = vld [vmem:[%s17] sm:$0x1]
    %v96 = vperm.slane %v94, 0
    %vm98 = vcmask 64512
    %v100 = vsel %vm98, %v92, 0
    %102 = vmatpush.msra.mxu0 0.0
    %103 = vmatpush.msra.mxu0 0.0
    %104 = vmatpush.msra.mxu0 0.0
    %105 = vmatpush.msra.mxu0 0.0
    %106 = vmatpush.msra.mxu0 0.0
    %107 = vmatpush.msra.mxu0 0.0
    %108 = vmatpush.msra.mxu0 0.0
    %109 = vmatpush.msra.mxu0 0.0
    %110 = vmatpush.msra.mxu0 0.0
    %111 = vmatpush.msra.mxu0 0.0
    %112 = vmatpush.msra.mxu0 0.0
    %113 = vmatpush.msra.mxu0 0.0
    %114 = vmatpush.msra.mxu0 0.0
    %115 = vmatpush.msra.mxu0 0.0
    %116 = vmatpush.msra.mxu0 0.0
    %117 = vmatpush.msra.mxu0 %v93
    %118 = vmatmul.f32.gmra.mxu0 %v100
    %v119 = vpop.f32.mrf.mxu0
    %v120 = vadd.f32 %v96, %v119
    %121 = vdwg.mxu0
    %v122 = vmax.f32 %v120, 0.0
    %vm123 = vcmask 48128
    %124 = vst.msk [vmem:[#allocation11] sm:$0xff] %vm123, %v122
    %v125 = vld [vmem:[%s0] sm:$0xff]
    %v126 = vld [vmem:[%s0 + $0x8] sm:$0xff]
    %v127 = vld [vmem:[#allocation6] sm:$0xf]
    %v128 = vld [vmem:[%s3] sm:$0x1]
    %v130 = vperm.slane %v128, 0
    %vm132 = vcmask 31744
    %v134 = vsel %vm132, %v125, 0
    %v137 = vsel %vm132, %v126, 0
    %vm139 = vcmask 1043456
    %v141 = vsel %vm139, %v127, 0
    %143 = vmatpush.msra.mxu0 0.0
    %144 = vmatpush.msra.mxu0 0.0
    %145 = vmatpush.msra.mxu0 0.0
    %146 = vmatpush.msra.mxu0 0.0
    %147 = vmatpush.msra.mxu0 0.0
    %148 = vmatpush.msra.mxu0 0.0
    %149 = vmatpush.msra.mxu0 0.0
    %150 = vmatpush.msra.mxu0 0.0
    %151 = vmatpush.msra.mxu0 0.0
    %152 = vmatpush.msra.mxu0 0.0
    %153 = vmatpush.msra.mxu0 0.0
    %154 = vmatpush.msra.mxu0 0.0
    %155 = vmatpush.msra.mxu0 0.0
    %156 = vmatpush.msra.mxu0 0.0
    %157 = vmatpush.msra.mxu0 0.0
    %158 = vmatpush.msra.mxu0 %v141
    %159 = vmatmul.f32.gmra.mxu0 %v134
    %v160 = vpop.f32.mrf.mxu0
    %v161 = vadd.f32 %v130, %v160
    %162 = vmatmul.f32.gmra.mxu0 %v137
    %v163 = vpop.f32.mrf.mxu0
    %v164 = vadd.f32 %v130, %v163
    %165 = vdwg.mxu0
    %v166 = vld [vmem:[#allocation9] sm:$0xf]
    %v167 = vld [vmem:[%s4] sm:$0x1]
    %v169 = vperm.slane %v167, 0
    %v171 = vsel %vm132, 0.0, 0
    %v174 = vsel %vm139, %v166, 0
    %176 = vmatpush.msra.mxu0 0.0
    %177 = vmatpush.msra.mxu0 0.0
    %178 = vmatpush.msra.mxu0 0.0
    %179 = vmatpush.msra.mxu0 0.0
    %180 = vmatpush.msra.mxu0 0.0
    %181 = vmatpush.msra.mxu0 0.0
    %182 = vmatpush.msra.mxu0 0.0
    %183 = vmatpush.msra.mxu0 0.0
    %184 = vmatpush.msra.mxu0 0.0
    %185 = vmatpush.msra.mxu0 0.0
    %186 = vmatpush.msra.mxu0 0.0
    %187 = vmatpush.msra.mxu0 0.0
    %188 = vmatpush.msra.mxu0 0.0
    %189 = vmatpush.msra.mxu0 0.0
    %190 = vmatpush.msra.mxu0 0.0
    %191 = vmatpush.msra.mxu0 %v174
    %192 = vmatmul.f32.gmra.mxu0 %v171
    %v193 = vpop.f32.mrf.mxu0
    %v194 = vadd.f32 0.0, %v193
    %195 = vdwg.mxu0
    %v196 = vadd.f32 %v161, %v194
    %v197 = vxor.u32 %v196, 2147483648
    %v198 = vmul.f32 %v197, 1.442695
    %v199 = vpow.pop %v198
    %v200 = vadd.f32 %v199, 1.0
    %v201 = vrcp.pop %v200
    %v202 = vmul.f32 %v200, %v201
    %v203 = vsub.f32 1.0, %v202
    %v204 = vmul.f32 %v201, %v203
    %v205 = vadd.f32 %v201, %v204
    %vm206 = vweird.f32 %v200
    %vm207 = vweird.f32 %v201
    %vm208 = vmor %vm206, %vm207
    %v209 = vsel %vm208, %v201, %v205
    %v210 = vand.u32 2147483647, %v200
    %vm211 = vcmp.eq.f32.partialorder %v210, 8.507059e+37
    %v212 = vand.u32 %v200, 2147483648
    %v213 = vor.u32 1.1754944e-38, %v212
    %v214 = vsel %vm211, %v213, %v209
    %v215 = vmul.f32 1.0, %v214
    %216 = vrot.lane.b32.xlu0 %v169, 8
    %v217 = vpop.permute.xlu0 %216
    %v219 = vadd.f32 %v194, %v217
    %221 = vrot.lane.b32.xlu0 %v219, 120
    %v222 = vpop.permute.xlu0 %221
    %v224 = vmul.f32 %v215, %v222
    %226 = vrot.lane.b32.xlu0 %v224, 8
    %v227 = vpop.permute.xlu0 %226
    %v229 = vadd.f32 %v161, %v227
    %v230 = vtanh.pop %v229
    %v231 = vsub.f32 1.0, %v215
    %233 = vrot.lane.b32.xlu0 %v230, 124
    %v234 = vpop.permute.xlu0 %233
    %v236 = vmul.f32 %v231, %v234
    %v237 = vmul.f32 %v215, 0.0
    %v238 = vadd.f32 %v236, %v237
    %240 = vrot.lane.b32.xlu0 %v238, 124
    %v241 = vpop.permute.xlu0 %240
    %vm243 = vcmask 25600
    %v244 = vsel %vm243, %v241, 0.0
    %245 = vadd.xlane.f32.xlu0 %v244
    %v246 = vpop.xlane.xlu0 %245
    %v247 = vrcp.pop 4.0
    %v248 = vmul.f32 4.0, %v247
    %v249 = vsub.f32 1.0, %v248
    %v250 = vmul.f32 %v247, %v249
    %v251 = vadd.f32 %v247, %v250
    %vm252 = vweird.f32 %v247
    %v253 = vsel %vm252, %v247, %v251
    %v254 = vmul.f32 %v246, %v253
    %v255 = vsub.f32 %v238, %v254
    %v256 = vmul.f32 %v255, %v255
    %258 = vrot.lane.b32.xlu0 %v256, 124
    %v259 = vpop.permute.xlu0 %258
    %v261 = vsel %vm243, %v259, 0.0
    %262 = vadd.xlane.f32.xlu0 %v261
    %v263 = vpop.xlane.xlu0 %262
    %v264 = vmul.f32 %v263, %v253
    %v265 = vadd.f32 %v264, 1e-05
    %v266 = vrsqrt.pop %v265
    %v267 = vmul.f32 %v266, %v265
    %v268 = vmul.f32 %v267, %v266
    %v269 = vmul.f32 0.5, %v268
    %v270 = vsub.f32 1.5, %v269
    %v271 = vmul.f32 %v266, %v270
    %vm272 = vweird.f32 %v265
    %vm273 = vweird.f32 %v266
    %vm274 = vmor %vm272, %vm273
    %v275 = vsel %vm274, %v266, %v271
    %v276 = vmul.f32 %v255, %v275
    %278 = vrot.lane.b32.xlu0 %v276, 124
    %v279 = vpop.permute.xlu0 %278
    %281 = vst.msk [vmem:[#allocation2] sm:$0x3] %vm243, %v279
    %v282 = vsel %vm132, %v241, 0
    %284 = vmatpush.msra.mxu0 0.0
    %285 = vmatpush.msra.mxu0 0.0
    %286 = vmatpush.msra.mxu0 0.0
    %287 = vmatpush.msra.mxu0 0.0
    %288 = vmatpush.msra.mxu0 0.0
    %289 = vmatpush.msra.mxu0 0.0
    %290 = vmatpush.msra.mxu0 0.0
    %291 = vmatpush.msra.mxu0 0.0
    %292 = vmatpush.msra.mxu0 0.0
    %293 = vmatpush.msra.mxu0 0.0
    %294 = vmatpush.msra.mxu0 0.0
    %295 = vmatpush.msra.mxu0 0.0
    %296 = vmatpush.msra.mxu0 0.0
    %297 = vmatpush.msra.mxu0 0.0
    %298 = vmatpush.msra.mxu0 0.0
    %299 = vmatpush.msra.mxu0 %v174
    %300 = vmatmul.f32.gmra.mxu0 %v282
    %v301 = vpop.f32.mrf.mxu0
    %v302 = vadd.f32 0.0, %v301
    %303 = vdwg.mxu0
    %v305 = vrot.slane %v302, 6
    %v307 = vadd.f32 %v161, %v305
    %v308 = vxor.u32 %v307, 2147483648
    %v309 = vmul.f32 %v308, 1.442695
    %v310 = vpow.pop %v309
    %v311 = vadd.f32 %v310, 1.0
    %v312 = vrcp.pop %v311
    %v313 = vmul.f32 %v311, %v312
    %v314 = vsub.f32 1.0, %v313
    %v315 = vmul.f32 %v312, %v314
    %v316 = vadd.f32 %v312, %v315
    %vm317 = vweird.f32 %v311
    %vm318 = vweird.f32 %v312
    %vm319 = vmor %vm317, %vm318
    %v320 = vsel %vm319, %v312, %v316
    %v321 = vand.u32 2147483647, %v311
    %vm322 = vcmp.eq.f32.partialorder %v321, 8.507059e+37
    %v323 = vand.u32 %v311, 2147483648
    %v324 = vor.u32 1.1754944e-38, %v323
    %v325 = vsel %vm322, %v324, %v320
    %v326 = vmul.f32 1.0, %v325
    %v327 = vadd.f32 %v302, %v217
    %v329 = vrot.slane %v327, 6
    %330 = vrot.lane.b32.xlu0 %v329, 120
    %v331 = vpop.permute.xlu0 %330
    %v333 = vmul.f32 %v326, %v331
    %335 = vrot.lane.b32.xlu0 %v333, 8
    %v336 = vpop.permute.xlu0 %335
    %v338 = vadd.f32 %v161, %v336
    %v339 = vtanh.pop %v338
    %v340 = vsub.f32 1.0, %v326
    %342 = vrot.lane.b32.xlu0 %v339, 124
    %v343 = vpop.permute.xlu0 %342
    %v345 = vmul.f32 %v340, %v343
    %v346 = vrot.slane %v238, 6
    %v348 = vmul.f32 %v326, %v346
    %v349 = vadd.f32 %v345, %v348
    %351 = vrot.lane.b32.xlu0 %v349, 124
    %v352 = vpop.permute.xlu0 %351
    %vm354 = vcmask 27650
    %v355 = vsel %vm354, %v352, 0.0
    %356 = vadd.xlane.f32.xlu0 %v355
    %v357 = vpop.xlane.xlu0 %356
    %v358 = vmul.f32 %v357, %v253
    %v359 = vsub.f32 %v349, %v358
    %v360 = vmul.f32 %v359, %v359
    %362 = vrot.lane.b32.xlu0 %v360, 124
    %v363 = vpop.permute.xlu0 %362
    %v365 = vsel %vm354, %v363, 0.0
    %366 = vadd.xlane.f32.xlu0 %v365
    %v367 = vpop.xlane.xlu0 %366
    %v368 = vmul.f32 %v367, %v253
    %v369 = vadd.f32 %v368, 1e-05
    %v370 = vrsqrt.pop %v369
    %v371 = vmul.f32 %v370, %v369
    %v372 = vmul.f32 %v371, %v370
    %v373 = vmul.f32 0.5, %v372
    %v374 = vsub.f32 1.5, %v373
    %v375 = vmul.f32 %v370, %v374
    %vm376 = vweird.f32 %v369
    %vm377 = vweird.f32 %v370
    %vm378 = vmor %vm376, %vm377
    %v379 = vsel %vm378, %v370, %v375
    %v380 = vmul.f32 %v359, %v379
    %382 = vrot.lane.b32.xlu0 %v380, 124
    %v383 = vpop.permute.xlu0 %382
    %385 = vst.msk [vmem:[#allocation2] sm:$0xc] %vm354, %v383
    %v386 = vrot.slane %v349, 2
    %387 = vrot.lane.b32.xlu0 %v386, 124
    %v388 = vpop.permute.xlu0 %387
    %v389 = vsel %vm132, %v388, 0
    %391 = vmatpush.msra.mxu0 0.0
    %392 = vmatpush.msra.mxu0 0.0
    %393 = vmatpush.msra.mxu0 0.0
    %394 = vmatpush.msra.mxu0 0.0
    %395 = vmatpush.msra.mxu0 0.0
    %396 = vmatpush.msra.mxu0 0.0
    %397 = vmatpush.msra.mxu0 0.0
    %398 = vmatpush.msra.mxu0 0.0
    %399 = vmatpush.msra.mxu0 0.0
    %400 = vmatpush.msra.mxu0 0.0
    %401 = vmatpush.msra.mxu0 0.0
    %402 = vmatpush.msra.mxu0 0.0
    %403 = vmatpush.msra.mxu0 0.0
    %404 = vmatpush.msra.mxu0 0.0
    %405 = vmatpush.msra.mxu0 0.0
    %406 = vmatpush.msra.mxu0 %v174
    %407 = vmatmul.f32.gmra.mxu0 %v389
    %v408 = vpop.f32.mrf.mxu0
    %v409 = vadd.f32 0.0, %v408
    %410 = vdwg.mxu0
    %v412 = vrot.slane %v409, 4
    %v414 = vadd.f32 %v161, %v412
    %v415 = vxor.u32 %v414, 2147483648
    %v416 = vmul.f32 %v415, 1.442695
    %v417 = vpow.pop %v416
    %v418 = vadd.f32 %v417, 1.0
    %v419 = vrcp.pop %v418
    %v420 = vmul.f32 %v418, %v419
    %v421 = vsub.f32 1.0, %v420
    %v422 = vmul.f32 %v419, %v421
    %v423 = vadd.f32 %v419, %v422
    %vm424 = vweird.f32 %v418
    %vm425 = vweird.f32 %v419
    %vm426 = vmor %vm424, %vm425
    %v427 = vsel %vm426, %v419, %v423
    %v428 = vand.u32 2147483647, %v418
    %vm429 = vcmp.eq.f32.partialorder %v428, 8.507059e+37
    %v430 = vand.u32 %v418, 2147483648
    %v431 = vor.u32 1.1754944e-38, %v430
    %v432 = vsel %vm429, %v431, %v427
    %v433 = vmul.f32 1.0, %v432
    %v434 = vadd.f32 %v409, %v217
    %v436 = vrot.slane %v434, 4
    %437 = vrot.lane.b32.xlu0 %v436, 120
    %v438 = vpop.permute.xlu0 %437
    %v440 = vmul.f32 %v433, %v438
    %442 = vrot.lane.b32.xlu0 %v440, 8
    %v443 = vpop.permute.xlu0 %442
    %v445 = vadd.f32 %v161, %v443
    %v446 = vtanh.pop %v445
    %v447 = vsub.f32 1.0, %v433
    %449 = vrot.lane.b32.xlu0 %v446, 124
    %v450 = vpop.permute.xlu0 %449
    %v452 = vmul.f32 %v447, %v450
    %v453 = vrot.slane %v349, 6
    %v455 = vmul.f32 %v433, %v453
    %v456 = vadd.f32 %v452, %v455
    %458 = vrot.lane.b32.xlu0 %v456, 124
    %v459 = vpop.permute.xlu0 %458
    %vm461 = vcmask 29700
    %v462 = vsel %vm461, %v459, 0.0
    %463 = vadd.xlane.f32.xlu0 %v462
    %v464 = vpop.xlane.xlu0 %463
    %v465 = vmul.f32 %v464, %v253
    %v466 = vsub.f32 %v456, %v465
    %v467 = vmul.f32 %v466, %v466
    %469 = vrot.lane.b32.xlu0 %v467, 124
    %v470 = vpop.permute.xlu0 %469
    %v472 = vsel %vm461, %v470, 0.0
    %473 = vadd.xlane.f32.xlu0 %v472
    %v474 = vpop.xlane.xlu0 %473
    %v475 = vmul.f32 %v474, %v253
    %v476 = vadd.f32 %v475, 1e-05
    %v477 = vrsqrt.pop %v476
    %v478 = vmul.f32 %v477, %v476
    %v479 = vmul.f32 %v478, %v477
    %v480 = vmul.f32 0.5, %v479
    %v481 = vsub.f32 1.5, %v480
    %v482 = vmul.f32 %v477, %v481
    %vm483 = vweird.f32 %v476
    %vm484 = vweird.f32 %v477
    %vm485 = vmor %vm483, %vm484
    %v486 = vsel %vm485, %v477, %v482
    %v487 = vmul.f32 %v466, %v486
    %489 = vrot.lane.b32.xlu0 %v487, 124
    %v490 = vpop.permute.xlu0 %489
    %492 = vst.msk [vmem:[#allocation2] sm:$0x30] %vm461, %v490
    %v493 = vrot.slane %v456, 4
    %494 = vrot.lane.b32.xlu0 %v493, 124
    %v495 = vpop.permute.xlu0 %494
    %v496 = vsel %vm132, %v495, 0
    %498 = vmatpush.msra.mxu0 0.0
    %499 = vmatpush.msra.mxu0 0.0
    %500 = vmatpush.msra.mxu0 0.0
    %501 = vmatpush.msra.mxu0 0.0
    %502 = vmatpush.msra.mxu0 0.0
    %503 = vmatpush.msra.mxu0 0.0
    %504 = vmatpush.msra.mxu0 0.0
    %505 = vmatpush.msra.mxu0 0.0
    %506 = vmatpush.msra.mxu0 0.0
    %507 = vmatpush.msra.mxu0 0.0
    %508 = vmatpush.msra.mxu0 0.0
    %509 = vmatpush.msra.mxu0 0.0
    %510 = vmatpush.msra.mxu0 0.0
    %511 = vmatpush.msra.mxu0 0.0
    %512 = vmatpush.msra.mxu0 0.0
    %513 = vmatpush.msra.mxu0 %v174
    %514 = vmatmul.f32.gmra.mxu0 %v496
    %v515 = vpop.f32.mrf.mxu0
    %v516 = vadd.f32 0.0, %v515
    %517 = vdwg.mxu0
    %v519 = vrot.slane %v516, 2
    %v521 = vadd.f32 %v161, %v519
    %v522 = vxor.u32 %v521, 2147483648
    %v523 = vmul.f32 %v522, 1.442695
    %v524 = vpow.pop %v523
    %v525 = vadd.f32 %v524, 1.0
    %v526 = vrcp.pop %v525
    %v527 = vmul.f32 %v525, %v526
    %v528 = vsub.f32 1.0, %v527
    %v529 = vmul.f32 %v526, %v528
    %v530 = vadd.f32 %v526, %v529
    %vm531 = vweird.f32 %v525
    %vm532 = vweird.f32 %v526
    %vm533 = vmor %vm531, %vm532
    %v534 = vsel %vm533, %v526, %v530
    %v535 = vand.u32 2147483647, %v525
    %vm536 = vcmp.eq.f32.partialorder %v535, 8.507059e+37
    %v537 = vand.u32 %v525, 2147483648
    %v538 = vor.u32 1.1754944e-38, %v537
    %v539 = vsel %vm536, %v538, %v534
    %v540 = vmul.f32 1.0, %v539
    %v541 = vadd.f32 %v516, %v217
    %v543 = vrot.slane %v541, 2
    %544 = vrot.lane.b32.xlu0 %v543, 120
    %v545 = vpop.permute.xlu0 %544
    %v547 = vmul.f32 %v540, %v545
    %549 = vrot.lane.b32.xlu0 %v547, 8
    %v550 = vpop.permute.xlu0 %549
    %v552 = vadd.f32 %v161, %v550
    %v553 = vtanh.pop %v552
    %v554 = vsub.f32 1.0, %v540
    %556 = vrot.lane.b32.xlu0 %v553, 124
    %v557 = vpop.permute.xlu0 %556
    %v559 = vmul.f32 %v554, %v557
    %v560 = vrot.slane %v456, 6
    %v562 = vmul.f32 %v540, %v560
    %v563 = vadd.f32 %v559, %v562
    %565 = vrot.lane.b32.xlu0 %v563, 124
    %v566 = vpop.permute.xlu0 %565
    %vm568 = vcmask 31750
    %v569 = vsel %vm568, %v566, 0.0
    %570 = vadd.xlane.f32.xlu0 %v569
    %v571 = vpop.xlane.xlu0 %570
    %v572 = vmul.f32 %v571, %v253
    %v573 = vsub.f32 %v563, %v572
    %v574 = vmul.f32 %v573, %v573
    %576 = vrot.lane.b32.xlu0 %v574, 124
    %v577 = vpop.permute.xlu0 %576
    %v579 = vsel %vm568, %v577, 0.0
    %580 = vadd.xlane.f32.xlu0 %v579
    %v581 = vpop.xlane.xlu0 %580
    %v582 = vmul.f32 %v581, %v253
    %v583 = vadd.f32 %v582, 1e-05
    %v584 = vrsqrt.pop %v583
    %v585 = vmul.f32 %v584, %v583
    %v586 = vmul.f32 %v585, %v584
    %v587 = vmul.f32 0.5, %v586
    %v588 = vsub.f32 1.5, %v587
    %v589 = vmul.f32 %v584, %v588
    %vm590 = vweird.f32 %v583
    %vm591 = vweird.f32 %v584
    %vm592 = vmor %vm590, %vm591
    %v593 = vsel %vm592, %v584, %v589
    %v594 = vmul.f32 %v573, %v593
    %596 = vrot.lane.b32.xlu0 %v594, 124
    %v597 = vpop.permute.xlu0 %596
    %599 = vst.msk [vmem:[#allocation2] sm:$0xc0] %vm568, %v597
    %v600 = vrot.slane %v563, 6
    %601 = vrot.lane.b32.xlu0 %v600, 124
    %v602 = vpop.permute.xlu0 %601
    %v603 = vsel %vm132, %v602, 0
    %605 = vmatpush.msra.mxu0 0.0
    %606 = vmatpush.msra.mxu0 0.0
    %607 = vmatpush.msra.mxu0 0.0
    %608 = vmatpush.msra.mxu0 0.0
    %609 = vmatpush.msra.mxu0 0.0
    %610 = vmatpush.msra.mxu0 0.0
    %611 = vmatpush.msra.mxu0 0.0
    %612 = vmatpush.msra.mxu0 0.0
    %613 = vmatpush.msra.mxu0 0.0
    %614 = vmatpush.msra.mxu0 0.0
    %615 = vmatpush.msra.mxu0 0.0
    %616 = vmatpush.msra.mxu0 0.0
    %617 = vmatpush.msra.mxu0 0.0
    %618 = vmatpush.msra.mxu0 0.0
    %619 = vmatpush.msra.mxu0 0.0
    %620 = vmatpush.msra.mxu0 %v174
    %621 = vmatmul.f32.gmra.mxu0 %v603
    %v622 = vpop.f32.mrf.mxu0
    %v623 = vadd.f32 0.0, %v622
    %624 = vdwg.mxu0
    %v625 = vadd.f32 %v164, %v623
    %v626 = vxor.u32 %v625, 2147483648
    %v627 = vmul.f32 %v626, 1.442695
    %v628 = vpow.pop %v627
    %v629 = vadd.f32 %v628, 1.0
    %v630 = vrcp.pop %v629
    %v631 = vmul.f32 %v629, %v630
    %v632 = vsub.f32 1.0, %v631
    %v633 = vmul.f32 %v630, %v632
    %v634 = vadd.f32 %v630, %v633
    %vm635 = vweird.f32 %v629
    %vm636 = vweird.f32 %v630
    %vm637 = vmor %vm635, %vm636
    %v638 = vsel %vm637, %v630, %v634
    %v639 = vand.u32 2147483647, %v629
    %vm640 = vcmp.eq.f32.partialorder %v639, 8.507059e+37
    %v641 = vand.u32 %v629, 2147483648
    %v642 = vor.u32 1.1754944e-38, %v641
    %v643 = vsel %vm640, %v642, %v638
    %v644 = vmul.f32 1.0, %v643
    %v645 = vadd.f32 %v623, %v217
    %647 = vrot.lane.b32.xlu0 %v645, 120
    %v648 = vpop.permute.xlu0 %647
    %v650 = vmul.f32 %v644, %v648
    %652 = vrot.lane.b32.xlu0 %v650, 8
    %v653 = vpop.permute.xlu0 %652
    %v655 = vadd.f32 %v164, %v653
    %v656 = vtanh.pop %v655
    %v657 = vsub.f32 1.0, %v644
    %659 = vrot.lane.b32.xlu0 %v656, 124
    %v660 = vpop.permute.xlu0 %659
    %v662 = vmul.f32 %v657, %v660
    %v664 = vmul.f32 %v644, %v600
    %v665 = vadd.f32 %v662, %v664
    %667 = vrot.lane.b32.xlu0 %v665, 124
    %v668 = vpop.permute.xlu0 %667
    %v670 = vsel %vm243, %v668, 0.0
    %671 = vadd.xlane.f32.xlu0 %v670
    %v672 = vpop.xlane.xlu0 %671
    %v673 = vmul.f32 %v672, %v253
    %v674 = vsub.f32 %v665, %v673
    %v675 = vmul.f32 %v674, %v674
    %677 = vrot.lane.b32.xlu0 %v675, 124
    %v678 = vpop.permute.xlu0 %677
    %v680 = vsel %vm243, %v678, 0.0
    %681 = vadd.xlane.f32.xlu0 %v680
    %v682 = vpop.xlane.xlu0 %681
    %v683 = vmul.f32 %v682, %v253
    %v684 = vadd.f32 %v683, 1e-05
    %v685 = vrsqrt.pop %v684
    %v686 = vmul.f32 %v685, %v684
    %v687 = vmul.f32 %v686, %v685
    %v688 = vmul.f32 0.5, %v687
    %v689 = vsub.f32 1.5, %v688
    %v690 = vmul.f32 %v685, %v689
    %vm691 = vweird.f32 %v684
    %vm692 = vweird.f32 %v685
    %vm693 = vmor %vm691, %vm692
    %v694 = vsel %vm693, %v685, %v690
    %v695 = vmul.f32 %v674, %v694
    %697 = vrot.lane.b32.xlu0 %v695, 124
    %v698 = vpop.permute.xlu0 %697
    %700 = vst.msk [vmem:[#allocation2 + $0x8] sm:$0x3] %vm243, %v698
    %v701 = vsel %vm132, %v668, 0
    %703 = vmatpush.msra.mxu0 0.0
    %704 = vmatpush.msra.mxu0 0.0
    %705 = vmatpush.msra.mxu0 0.0
    %706 = vmatpush.msra.mxu0 0.0
    %707 = vmatpush.msra.mxu0 0.0
    %708 = vmatpush.msra.mxu0 0.0
    %709 = vmatpush.msra.mxu0 0.0
    %710 = vmatpush.msra.mxu0 0.0
    %711 = vmatpush.msra.mxu0 0.0
    %712 = vmatpush.msra.mxu0 0.0
    %713 = vmatpush.msra.mxu0 0.0
    %714 = vmatpush.msra.mxu0 0.0
    %715 = vmatpush.msra.mxu0 0.0
    %716 = vmatpush.msra.mxu0 0.0
    %717 = vmatpush.msra.mxu0 0.0
    %718 = vmatpush.msra.mxu0 %v174
    %719 = vmatmul.f32.gmra.mxu0 %v701
    %v720 = vpop.f32.mrf.mxu0
    %v721 = vadd.f32 0.0, %v720
    %722 = vdwg.mxu0
    %v724 = vrot.slane %v721, 6
    %v726 = vadd.f32 %v164, %v724
    %v727 = vxor.u32 %v726, 2147483648
    %v728 = vmul.f32 %v727, 1.442695
    %v729 = vpow.pop %v728
    %v730 = vadd.f32 %v729, 1.0
    %v731 = vrcp.pop %v730
    %v732 = vmul.f32 %v730, %v731
    %v733 = vsub.f32 1.0, %v732
    %v734 = vmul.f32 %v731, %v733
    %v735 = vadd.f32 %v731, %v734
    %vm736 = vweird.f32 %v730
    %vm737 = vweird.f32 %v731
    %vm738 = vmor %vm736, %vm737
    %v739 = vsel %vm738, %v731, %v735
    %v740 = vand.u32 2147483647, %v730
    %vm741 = vcmp.eq.f32.partialorder %v740, 8.507059e+37
    %v742 = vand.u32 %v730, 2147483648
    %v743 = vor.u32 1.1754944e-38, %v742
    %v744 = vsel %vm741, %v743, %v739
    %v745 = vmul.f32 1.0, %v744
    %v746 = vadd.f32 %v721, %v217
    %v748 = vrot.slane %v746, 6
    %749 = vrot.lane.b32.xlu0 %v748, 120
    %v750 = vpop.permute.xlu0 %749
    %v752 = vmul.f32 %v745, %v750
    %754 = vrot.lane.b32.xlu0 %v752, 8
    %v755 = vpop.permute.xlu0 %754
    %v757 = vadd.f32 %v164, %v755
    %v758 = vtanh.pop %v757
    %v759 = vsub.f32 1.0, %v745
    %761 = vrot.lane.b32.xlu0 %v758, 124
    %v762 = vpop.permute.xlu0 %761
    %v764 = vmul.f32 %v759, %v762
    %v765 = vrot.slane %v665, 6
    %v767 = vmul.f32 %v745, %v765
    %v768 = vadd.f32 %v764, %v767
    %770 = vrot.lane.b32.xlu0 %v768, 124
    %v771 = vpop.permute.xlu0 %770
    %v773 = vsel %vm354, %v771, 0.0
    %774 = vadd.xlane.f32.xlu0 %v773
    %v775 = vpop.xlane.xlu0 %774
    %v776 = vmul.f32 %v775, %v253
    %v777 = vsub.f32 %v768, %v776
    %v778 = vmul.f32 %v777, %v777
    %780 = vrot.lane.b32.xlu0 %v778, 124
    %v781 = vpop.permute.xlu0 %780
    %v783 = vsel %vm354, %v781, 0.0
    %784 = vadd.xlane.f32.xlu0 %v783
    %v785 = vpop.xlane.xlu0 %784
    %v786 = vmul.f32 %v785, %v253
    %v787 = vadd.f32 %v786, 1e-05
    %v788 = vrsqrt.pop %v787
    %v789 = vmul.f32 %v788, %v787
    %v790 = vmul.f32 %v789, %v788
    %v791 = vmul.f32 0.5, %v790
    %v792 = vsub.f32 1.5, %v791
    %v793 = vmul.f32 %v788, %v792
    %vm794 = vweird.f32 %v787
    %vm795 = vweird.f32 %v788
    %vm796 = vmor %vm794, %vm795
    %v797 = vsel %vm796, %v788, %v793
    %v798 = vmul.f32 %v777, %v797
    %800 = vrot.lane.b32.xlu0 %v798, 124
    %v801 = vpop.permute.xlu0 %800
    %803 = vst.msk [vmem:[#allocation2 + $0x8] sm:$0xc] %vm354, %v801
    %v804 = vrot.slane %v768, 2
    %805 = vrot.lane.b32.xlu0 %v804, 124
    %v806 = vpop.permute.xlu0 %805
    %v807 = vsel %vm132, %v806, 0
    %809 = vmatpush.msra.mxu0 0.0
    %810 = vmatpush.msra.mxu0 0.0
    %811 = vmatpush.msra.mxu0 0.0
    %812 = vmatpush.msra.mxu0 0.0
    %813 = vmatpush.msra.mxu0 0.0
    %814 = vmatpush.msra.mxu0 0.0
    %815 = vmatpush.msra.mxu0 0.0
    %816 = vmatpush.msra.mxu0 0.0
    %817 = vmatpush.msra.mxu0 0.0
    %818 = vmatpush.msra.mxu0 0.0
    %819 = vmatpush.msra.mxu0 0.0
    %820 = vmatpush.msra.mxu0 0.0
    %821 = vmatpush.msra.mxu0 0.0
    %822 = vmatpush.msra.mxu0 0.0
    %823 = vmatpush.msra.mxu0 0.0
    %824 = vmatpush.msra.mxu0 %v174
    %825 = vmatmul.f32.gmra.mxu0 %v807
    %v826 = vpop.f32.mrf.mxu0
    %v827 = vadd.f32 0.0, %v826
    %828 = vdwg.mxu0
    %v830 = vrot.slane %v827, 4
    %v832 = vadd.f32 %v164, %v830
    %v833 = vxor.u32 %v832, 2147483648
    %v834 = vmul.f32 %v833, 1.442695
    %v835 = vpow.pop %v834
    %v836 = vadd.f32 %v835, 1.0
    %v837 = vrcp.pop %v836
    %v838 = vmul.f32 %v836, %v837
    %v839 = vsub.f32 1.0, %v838
    %v840 = vmul.f32 %v837, %v839
    %v841 = vadd.f32 %v837, %v840
    %vm842 = vweird.f32 %v836
    %vm843 = vweird.f32 %v837
    %vm844 = vmor %vm842, %vm843
    %v845 = vsel %vm844, %v837, %v841
    %v846 = vand.u32 2147483647, %v836
    %vm847 = vcmp.eq.f32.partialorder %v846, 8.507059e+37
    %v848 = vand.u32 %v836, 2147483648
    %v849 = vor.u32 1.1754944e-38, %v848
    %v850 = vsel %vm847, %v849, %v845
    %v851 = vmul.f32 1.0, %v850
    %v852 = vadd.f32 %v827, %v217
    %v854 = vrot.slane %v852, 4
    %855 = vrot.lane.b32.xlu0 %v854, 120
    %v856 = vpop.permute.xlu0 %855
    %v858 = vmul.f32 %v851, %v856
    %860 = vrot.lane.b32.xlu0 %v858, 8
    %v861 = vpop.permute.xlu0 %860
    %v863 = vadd.f32 %v164, %v861
    %v864 = vtanh.pop %v863
    %v865 = vsub.f32 1.0, %v851
    %867 = vrot.lane.b32.xlu0 %v864, 124
    %v868 = vpop.permute.xlu0 %867
    %v870 = vmul.f32 %v865, %v868
    %v871 = vrot.slane %v768, 6
    %v873 = vmul.f32 %v851, %v871
    %v874 = vadd.f32 %v870, %v873
    %876 = vrot.lane.b32.xlu0 %v874, 124
    %v877 = vpop.permute.xlu0 %876
    %v879 = vsel %vm461, %v877, 0.0
    %880 = vadd.xlane.f32.xlu0 %v879
    %v881 = vpop.xlane.xlu0 %880
    %v882 = vmul.f32 %v881, %v253
    %v883 = vsub.f32 %v874, %v882
    %v884 = vmul.f32 %v883, %v883
    %886 = vrot.lane.b32.xlu0 %v884, 124
    %v887 = vpop.permute.xlu0 %886
    %v889 = vsel %vm461, %v887, 0.0
    %890 = vadd.xlane.f32.xlu0 %v889
    %v891 = vpop.xlane.xlu0 %890
    %v892 = vmul.f32 %v891, %v253
    %v893 = vadd.f32 %v892, 1e-05
    %v894 = vrsqrt.pop %v893
    %v895 = vmul.f32 %v894, %v893
    %v896 = vmul.f32 %v895, %v894
    %v897 = vmul.f32 0.5, %v896
    %v898 = vsub.f32 1.5, %v897
    %v899 = vmul.f32 %v894, %v898
    %vm900 = vweird.f32 %v893
    %vm901 = vweird.f32 %v894
    %vm902 = vmor %vm900, %vm901
    %v903 = vsel %vm902, %v894, %v899
    %v904 = vmul.f32 %v883, %v903
    %906 = vrot.lane.b32.xlu0 %v904, 124
    %v907 = vpop.permute.xlu0 %906
    %909 = vst.msk [vmem:[#allocation2 + $0x8] sm:$0x30] %vm461, %v907
    %v910 = vrot.slane %v874, 4
    %911 = vrot.lane.b32.xlu0 %v910, 124
    %v912 = vpop.permute.xlu0 %911
    %v913 = vsel %vm132, %v912, 0
    %915 = vmatpush.msra.mxu0 0.0
    %916 = vmatpush.msra.mxu0 0.0
    %917 = vmatpush.msra.mxu0 0.0
    %918 = vmatpush.msra.mxu0 0.0
    %919 = vmatpush.msra.mxu0 0.0
    %920 = vmatpush.msra.mxu0 0.0
    %921 = vmatpush.msra.mxu0 0.0
    %922 = vmatpush.msra.mxu0 0.0
    %923 = vmatpush.msra.mxu0 0.0
    %924 = vmatpush.msra.mxu0 0.0
    %925 = vmatpush.msra.mxu0 0.0
    %926 = vmatpush.msra.mxu0 0.0
    %927 = vmatpush.msra.mxu0 0.0
    %928 = vmatpush.msra.mxu0 0.0
    %929 = vmatpush.msra.mxu0 0.0
    %930 = vmatpush.msra.mxu0 %v174
    %931 = vmatmul.f32.gmra.mxu0 %v913
    %v932 = vpop.f32.mrf.mxu0
    %v933 = vadd.f32 0.0, %v932
    %934 = vdwg.mxu0
    %v936 = vrot.slane %v933, 2
    %v938 = vadd.f32 %v164, %v936
    %v939 = vxor.u32 %v938, 2147483648
    %v940 = vmul.f32 %v939, 1.442695
    %v941 = vpow.pop %v940
    %v942 = vadd.f32 %v941, 1.0
    %v943 = vrcp.pop %v942
    %v944 = vmul.f32 %v942, %v943
    %v945 = vsub.f32 1.0, %v944
    %v946 = vmul.f32 %v943, %v945
    %v947 = vadd.f32 %v943, %v946
    %vm948 = vweird.f32 %v942
    %vm949 = vweird.f32 %v943
    %vm950 = vmor %vm948, %vm949
    %v951 = vsel %vm950, %v943, %v947
    %v952 = vand.u32 2147483647, %v942
    %vm953 = vcmp.eq.f32.partialorder %v952, 8.507059e+37
    %v954 = vand.u32 %v942, 2147483648
    %v955 = vor.u32 1.1754944e-38, %v954
    %v956 = vsel %vm953, %v955, %v951
    %v957 = vmul.f32 1.0, %v956
    %v958 = vadd.f32 %v933, %v217
    %v960 = vrot.slane %v958, 2
    %961 = vrot.lane.b32.xlu0 %v960, 120
    %v962 = vpop.permute.xlu0 %961
    %v964 = vmul.f32 %v957, %v962
    %966 = vrot.lane.b32.xlu0 %v964, 8
    %v967 = vpop.permute.xlu0 %966
    %v969 = vadd.f32 %v164, %v967
    %v970 = vtanh.pop %v969
    %v971 = vsub.f32 1.0, %v957
    %973 = vrot.lane.b32.xlu0 %v970, 124
    %v974 = vpop.permute.xlu0 %973
    %v976 = vmul.f32 %v971, %v974
    %v977 = vrot.slane %v874, 6
    %v979 = vmul.f32 %v957, %v977
    %v980 = vadd.f32 %v976, %v979
    %982 = vrot.lane.b32.xlu0 %v980, 124
    %v983 = vpop.permute.xlu0 %982
    %v985 = vsel %vm568, %v983, 0.0
    %986 = vadd.xlane.f32.xlu0 %v985
    %v987 = vpop.xlane.xlu0 %986
    %v988 = vmul.f32 %v987, %v253
    %v989 = vsub.f32 %v980, %v988
    %v990 = vmul.f32 %v989, %v989
    %992 = vrot.lane.b32.xlu0 %v990, 124
    %v993 = vpop.permute.xlu0 %992
    %v995 = vsel %vm568, %v993, 0.0
    %996 = vadd.xlane.f32.xlu0 %v995
    %v997 = vpop.xlane.xlu0 %996
    %v998 = vmul.f32 %v997, %v253
    %v999 = vadd.f32 %v998, 1e-05
    %v1000 = vrsqrt.pop %v999
    %v1001 = vmul.f32 %v1000, %v999
    %v1002 = vmul.f32 %v1001, %v1000
    %v1003 = vmul.f32 0.5, %v1002
    %v1004 = vsub.f32 1.5, %v1003
    %v1005 = vmul.f32 %v1000, %v1004
    %vm1006 = vweird.f32 %v999
    %vm1007 = vweird.f32 %v1000
    %vm1008 = vmor %vm1006, %vm1007
    %v1009 = vsel %vm1008, %v1000, %v1005
    %v1010 = vmul.f32 %v989, %v1009
    %1012 = vrot.lane.b32.xlu0 %v1010, 124
    %v1013 = vpop.permute.xlu0 %1012
    %1015 = vst.msk [vmem:[#allocation2 + $0x8] sm:$0xc0] %vm568, %v1013
    %v1016 = vld [vmem:[#allocation2] sm:$0xff]
    %v1017 = vld [vmem:[#allocation2 + $0x8] sm:$0xff]
    %v1018 = vld [vmem:[%s5] sm:$0xf]
    %v1019 = vld [vmem:[%s7] sm:$0x1]
    %v1021 = vperm.slane %v1019, 0
    %v1024 = vsel %vm132, %v1016, 0
    %v1027 = vsel %vm132, %v1017, 0
    %v1030 = vsel %vm139, %v1018, 0
    %1032 = vmatpush.msra.mxu0 0.0
    %1033 = vmatpush.msra.mxu0 0.0
    %1034 = vmatpush.msra.mxu0 0.0
    %1035 = vmatpush.msra.mxu0 0.0
    %1036 = vmatpush.msra.mxu0 0.0
    %1037 = vmatpush.msra.mxu0 0.0
    %1038 = vmatpush.msra.mxu0 0.0
    %1039 = vmatpush.msra.mxu0 0.0
    %1040 = vmatpush.msra.mxu0 0.0
    %1041 = vmatpush.msra.mxu0 0.0
    %1042 = vmatpush.msra.mxu0 0.0
    %1043 = vmatpush.msra.mxu0 0.0
    %1044 = vmatpush.msra.mxu0 0.0
    %1045 = vmatpush.msra.mxu0 0.0
    %1046 = vmatpush.msra.mxu0 0.0
    %1047 = vmatpush.msra.mxu0 %v1030
    %1048 = vmatmul.f32.gmra.mxu0 %v1024
    %v1049 = vpop.f32.mrf.mxu0
    %v1050 = vadd.f32 %v1021, %v1049
    %1051 = vmatmul.f32.gmra.mxu0 %v1027
    %v1052 = vpop.f32.mrf.mxu0
    %v1053 = vadd.f32 %v1021, %v1052
    %1054 = vdwg.mxu0
    %v1055 = vld [vmem:[%s6] sm:$0xff]
    %v1056 = vld [vmem:[%s8] sm:$0x1]
    %v1058 = vperm.slane %v1056, 0
    %v1059 = vsel %vm98, 0.0, 0
    %1061 = vmatpush.msra.mxu0 0.0
    %1062 = vmatpush.msra.mxu0 0.0
    %1063 = vmatpush.msra.mxu0 0.0
    %1064 = vmatpush.msra.mxu0 0.0
    %1065 = vmatpush.msra.mxu0 0.0
    %1066 = vmatpush.msra.mxu0 0.0
    %1067 = vmatpush.msra.mxu0 0.0
    %1068 = vmatpush.msra.mxu0 0.0
    %1069 = vmatpush.msra.mxu0 0.0
    %1070 = vmatpush.msra.mxu0 0.0
    %1071 = vmatpush.msra.mxu0 0.0
    %1072 = vmatpush.msra.mxu0 0.0
    %1073 = vmatpush.msra.mxu0 0.0
    %1074 = vmatpush.msra.mxu0 0.0
    %1075 = vmatpush.msra.mxu0 0.0
    %1076 = vmatpush.msra.mxu0 %v1055
    %1077 = vmatmul.f32.gmra.mxu0 %v1059
    %v1078 = vpop.f32.mrf.mxu0
    %v1079 = vadd.f32 0.0, %v1078
    %1080 = vdwg.mxu0
    %v1081 = vadd.f32 %v1050, %v1079
    %v1082 = vxor.u32 %v1081, 2147483648
    %v1083 = vmul.f32 %v1082, 1.442695
    %v1084 = vpow.pop %v1083
    %v1085 = vadd.f32 %v1084, 1.0
    %v1086 = vrcp.pop %v1085
    %v1087 = vmul.f32 %v1085, %v1086
    %v1088 = vsub.f32 1.0, %v1087
    %v1089 = vmul.f32 %v1086, %v1088
    %v1090 = vadd.f32 %v1086, %v1089
    %vm1091 = vweird.f32 %v1085
    %vm1092 = vweird.f32 %v1086
    %vm1093 = vmor %vm1091, %vm1092
    %v1094 = vsel %vm1093, %v1086, %v1090
    %v1095 = vand.u32 2147483647, %v1085
    %vm1096 = vcmp.eq.f32.partialorder %v1095, 8.507059e+37
    %v1097 = vand.u32 %v1085, 2147483648
    %v1098 = vor.u32 1.1754944e-38, %v1097
    %v1099 = vsel %vm1096, %v1098, %v1094
    %v1100 = vmul.f32 1.0, %v1099
    %1101 = vrot.lane.b32.xlu0 %v1058, 16
    %v1102 = vpop.permute.xlu0 %1101
    %v1104 = vadd.f32 %v1079, %v1102
    %1106 = vrot.lane.b32.xlu0 %v1104, 112
    %v1107 = vpop.permute.xlu0 %1106
    %v1109 = vmul.f32 %v1100, %v1107
    %1111 = vrot.lane.b32.xlu0 %v1109, 16
    %v1112 = vpop.permute.xlu0 %1111
    %v1114 = vadd.f32 %v1050, %v1112
    %v1115 = vtanh.pop %v1114
    %v1116 = vsub.f32 1.0, %v1100
    %1118 = vrot.lane.b32.xlu0 %v1115, 120
    %v1119 = vpop.permute.xlu0 %1118
    %v1121 = vmul.f32 %v1116, %v1119
    %v1122 = vmul.f32 %v1100, 0.0
    %v1123 = vadd.f32 %v1121, %v1122
    %1125 = vrot.lane.b32.xlu0 %v1123, 120
    %v1126 = vpop.permute.xlu0 %1125
    %vm1128 = vcmask 58368
    %v1129 = vsel %vm1128, %v1126, 0.0
    %1130 = vadd.xlane.f32.xlu0 %v1129
    %v1131 = vpop.xlane.xlu0 %1130
    %v1132 = vrcp.pop 8.0
    %v1133 = vmul.f32 8.0, %v1132
    %v1134 = vsub.f32 1.0, %v1133
    %v1135 = vmul.f32 %v1132, %v1134
    %v1136 = vadd.f32 %v1132, %v1135
    %vm1137 = vweird.f32 %v1132
    %v1138 = vsel %vm1137, %v1132, %v1136
    %v1139 = vmul.f32 %v1131, %v1138
    %v1140 = vsub.f32 %v1123, %v1139
    %v1141 = vmul.f32 %v1140, %v1140
    %1143 = vrot.lane.b32.xlu0 %v1141, 120
    %v1144 = vpop.permute.xlu0 %1143
    %v1146 = vsel %vm1128, %v1144, 0.0
    %1147 = vadd.xlane.f32.xlu0 %v1146
    %v1148 = vpop.xlane.xlu0 %1147
    %v1149 = vmul.f32 %v1148, %v1138
    %v1150 = vadd.f32 %v1149, 1e-05
    %v1151 = vrsqrt.pop %v1150
    %v1152 = vmul.f32 %v1151, %v1150
    %v1153 = vmul.f32 %v1152, %v1151
    %v1154 = vmul.f32 0.5, %v1153
    %v1155 = vsub.f32 1.5, %v1154
    %v1156 = vmul.f32 %v1151, %v1155
    %vm1157 = vweird.f32 %v1150
    %vm1158 = vweird.f32 %v1151
    %vm1159 = vmor %vm1157, %vm1158
    %v1160 = vsel %vm1159, %v1151, %v1156
    %v1161 = vmul.f32 %v1140, %v1160
    %1163 = vrot.lane.b32.xlu0 %v1161, 120
    %v1164 = vpop.permute.xlu0 %1163
    %1166 = vst.msk [vmem:[#allocation3] sm:$0x3] %vm1128, %v1164
    %v1167 = vsel %vm98, %v1126, 0
    %1169 = vmatpush.msra.mxu0 0.0
    %1170 = vmatpush.msra.mxu0 0.0
    %1171 = vmatpush.msra.mxu0 0.0
    %1172 = vmatpush.msra.mxu0 0.0
    %1173 = vmatpush.msra.mxu0 0.0
    %1174 = vmatpush.msra.mxu0 0.0
    %1175 = vmatpush.msra.mxu0 0.0
    %1176 = vmatpush.msra.mxu0 0.0
    %1177 = vmatpush.msra.mxu0 0.0
    %1178 = vmatpush.msra.mxu0 0.0
    %1179 = vmatpush.msra.mxu0 0.0
    %1180 = vmatpush.msra.mxu0 0.0
    %1181 = vmatpush.msra.mxu0 0.0
    %1182 = vmatpush.msra.mxu0 0.0
    %1183 = vmatpush.msra.mxu0 0.0
    %1184 = vmatpush.msra.mxu0 %v1055
    %1185 = vmatmul.f32.gmra.mxu0 %v1167
    %v1186 = vpop.f32.mrf.mxu0
    %v1187 = vadd.f32 0.0, %v1186
    %1188 = vdwg.mxu0
    %v1190 = vrot.slane %v1187, 6
    %v1192 = vadd.f32 %v1050, %v1190
    %v1193 = vxor.u32 %v1192, 2147483648
    %v1194 = vmul.f32 %v1193, 1.442695
    %v1195 = vpow.pop %v1194
    %v1196 = vadd.f32 %v1195, 1.0
    %v1197 = vrcp.pop %v1196
    %v1198 = vmul.f32 %v1196, %v1197
    %v1199 = vsub.f32 1.0, %v1198
    %v1200 = vmul.f32 %v1197, %v1199
    %v1201 = vadd.f32 %v1197, %v1200
    %vm1202 = vweird.f32 %v1196
    %vm1203 = vweird.f32 %v1197
    %vm1204 = vmor %vm1202, %vm1203
    %v1205 = vsel %vm1204, %v1197, %v1201
    %v1206 = vand.u32 2147483647, %v1196
    %vm1207 = vcmp.eq.f32.partialorder %v1206, 8.507059e+37
    %v1208 = vand.u32 %v1196, 2147483648
    %v1209 = vor.u32 1.1754944e-38, %v1208
    %v1210 = vsel %vm1207, %v1209, %v1205
    %v1211 = vmul.f32 1.0, %v1210
    %v1212 = vadd.f32 %v1187, %v1102
    %v1214 = vrot.slane %v1212, 6
    %1215 = vrot.lane.b32.xlu0 %v1214, 112
    %v1216 = vpop.permute.xlu0 %1215
    %v1218 = vmul.f32 %v1211, %v1216
    %1220 = vrot.lane.b32.xlu0 %v1218, 16
    %v1221 = vpop.permute.xlu0 %1220
    %v1223 = vadd.f32 %v1050, %v1221
    %v1224 = vtanh.pop %v1223
    %v1225 = vsub.f32 1.0, %v1211
    %1227 = vrot.lane.b32.xlu0 %v1224, 120
    %v1228 = vpop.permute.xlu0 %1227
    %v1230 = vmul.f32 %v1225, %v1228
    %v1231 = vrot.slane %v1123, 6
    %v1233 = vmul.f32 %v1211, %v1231
    %v1234 = vadd.f32 %v1230, %v1233
    %1236 = vrot.lane.b32.xlu0 %v1234, 120
    %v1237 = vpop.permute.xlu0 %1236
    %vm1239 = vcmask 60418
    %v1240 = vsel %vm1239, %v1237, 0.0
    %1241 = vadd.xlane.f32.xlu0 %v1240
    %v1242 = vpop.xlane.xlu0 %1241
    %v1243 = vmul.f32 %v1242, %v1138
    %v1244 = vsub.f32 %v1234, %v1243
    %v1245 = vmul.f32 %v1244, %v1244
    %1247 = vrot.lane.b32.xlu0 %v1245, 120
    %v1248 = vpop.permute.xlu0 %1247
    %v1250 = vsel %vm1239, %v1248, 0.0
    %1251 = vadd.xlane.f32.xlu0 %v1250
    %v1252 = vpop.xlane.xlu0 %1251
    %v1253 = vmul.f32 %v1252, %v1138
    %v1254 = vadd.f32 %v1253, 1e-05
    %v1255 = vrsqrt.pop %v1254
    %v1256 = vmul.f32 %v1255, %v1254
    %v1257 = vmul.f32 %v1256, %v1255
    %v1258 = vmul.f32 0.5, %v1257
    %v1259 = vsub.f32 1.5, %v1258
    %v1260 = vmul.f32 %v1255, %v1259
    %vm1261 = vweird.f32 %v1254
    %vm1262 = vweird.f32 %v1255
    %vm1263 = vmor %vm1261, %vm1262
    %v1264 = vsel %vm1263, %v1255, %v1260
    %v1265 = vmul.f32 %v1244, %v1264
    %1267 = vrot.lane.b32.xlu0 %v1265, 120
    %v1268 = vpop.permute.xlu0 %1267
    %1270 = vst.msk [vmem:[#allocation3] sm:$0xc] %vm1239, %v1268
    %v1271 = vrot.slane %v1234, 2
    %1272 = vrot.lane.b32.xlu0 %v1271, 120
    %v1273 = vpop.permute.xlu0 %1272
    %v1274 = vsel %vm98, %v1273, 0
    %1276 = vmatpush.msra.mxu0 0.0
    %1277 = vmatpush.msra.mxu0 0.0
    %1278 = vmatpush.msra.mxu0 0.0
    %1279 = vmatpush.msra.mxu0 0.0
    %1280 = vmatpush.msra.mxu0 0.0
    %1281 = vmatpush.msra.mxu0 0.0
    %1282 = vmatpush.msra.mxu0 0.0
    %1283 = vmatpush.msra.mxu0 0.0
    %1284 = vmatpush.msra.mxu0 0.0
    %1285 = vmatpush.msra.mxu0 0.0
    %1286 = vmatpush.msra.mxu0 0.0
    %1287 = vmatpush.msra.mxu0 0.0
    %1288 = vmatpush.msra.mxu0 0.0
    %1289 = vmatpush.msra.mxu0 0.0
    %1290 = vmatpush.msra.mxu0 0.0
    %1291 = vmatpush.msra.mxu0 %v1055
    %1292 = vmatmul.f32.gmra.mxu0 %v1274
    %v1293 = vpop.f32.mrf.mxu0
    %v1294 = vadd.f32 0.0, %v1293
    %1295 = vdwg.mxu0
    %v1297 = vrot.slane %v1294, 4
    %v1299 = vadd.f32 %v1050, %v1297
    %v1300 = vxor.u32 %v1299, 2147483648
    %v1301 = vmul.f32 %v1300, 1.442695
    %v1302 = vpow.pop %v1301
    %v1303 = vadd.f32 %v1302, 1.0
    %v1304 = vrcp.pop %v1303
    %v1305 = vmul.f32 %v1303, %v1304
    %v1306 = vsub.f32 1.0, %v1305
    %v1307 = vmul.f32 %v1304, %v1306
    %v1308 = vadd.f32 %v1304, %v1307
    %vm1309 = vweird.f32 %v1303
    %vm1310 = vweird.f32 %v1304
    %vm1311 = vmor %vm1309, %vm1310
    %v1312 = vsel %vm1311, %v1304, %v1308
    %v1313 = vand.u32 2147483647, %v1303
    %vm1314 = vcmp.eq.f32.partialorder %v1313, 8.507059e+37
    %v1315 = vand.u32 %v1303, 2147483648
    %v1316 = vor.u32 1.1754944e-38, %v1315
    %v1317 = vsel %vm1314, %v1316, %v1312
    %v1318 = vmul.f32 1.0, %v1317
    %v1319 = vadd.f32 %v1294, %v1102
    %v1321 = vrot.slane %v1319, 4
    %1322 = vrot.lane.b32.xlu0 %v1321, 112
    %v1323 = vpop.permute.xlu0 %1322
    %v1325 = vmul.f32 %v1318, %v1323
    %1327 = vrot.lane.b32.xlu0 %v1325, 16
    %v1328 = vpop.permute.xlu0 %1327
    %v1330 = vadd.f32 %v1050, %v1328
    %v1331 = vtanh.pop %v1330
    %v1332 = vsub.f32 1.0, %v1318
    %1334 = vrot.lane.b32.xlu0 %v1331, 120
    %v1335 = vpop.permute.xlu0 %1334
    %v1337 = vmul.f32 %v1332, %v1335
    %v1338 = vrot.slane %v1234, 6
    %v1340 = vmul.f32 %v1318, %v1338
    %v1341 = vadd.f32 %v1337, %v1340
    %1343 = vrot.lane.b32.xlu0 %v1341, 120
    %v1344 = vpop.permute.xlu0 %1343
    %vm1346 = vcmask 62468
    %v1347 = vsel %vm1346, %v1344, 0.0
    %1348 = vadd.xlane.f32.xlu0 %v1347
    %v1349 = vpop.xlane.xlu0 %1348
    %v1350 = vmul.f32 %v1349, %v1138
    %v1351 = vsub.f32 %v1341, %v1350
    %v1352 = vmul.f32 %v1351, %v1351
    %1354 = vrot.lane.b32.xlu0 %v1352, 120
    %v1355 = vpop.permute.xlu0 %1354
    %v1357 = vsel %vm1346, %v1355, 0.0
    %1358 = vadd.xlane.f32.xlu0 %v1357
    %v1359 = vpop.xlane.xlu0 %1358
    %v1360 = vmul.f32 %v1359, %v1138
    %v1361 = vadd.f32 %v1360, 1e-05
    %v1362 = vrsqrt.pop %v1361
    %v1363 = vmul.f32 %v1362, %v1361
    %v1364 = vmul.f32 %v1363, %v1362
    %v1365 = vmul.f32 0.5, %v1364
    %v1366 = vsub.f32 1.5, %v1365
    %v1367 = vmul.f32 %v1362, %v1366
    %vm1368 = vweird.f32 %v1361
    %vm1369 = vweird.f32 %v1362
    %vm1370 = vmor %vm1368, %vm1369
    %v1371 = vsel %vm1370, %v1362, %v1367
    %v1372 = vmul.f32 %v1351, %v1371
    %1374 = vrot.lane.b32.xlu0 %v1372, 120
    %v1375 = vpop.permute.xlu0 %1374
    %1377 = vst.msk [vmem:[#allocation3] sm:$0x30] %vm1346, %v1375
    %v1378 = vrot.slane %v1341, 4
    %1379 = vrot.lane.b32.xlu0 %v1378, 120
    %v1380 = vpop.permute.xlu0 %1379
    %v1381 = vsel %vm98, %v1380, 0
    %1383 = vmatpush.msra.mxu0 0.0
    %1384 = vmatpush.msra.mxu0 0.0
    %1385 = vmatpush.msra.mxu0 0.0
    %1386 = vmatpush.msra.mxu0 0.0
    %1387 = vmatpush.msra.mxu0 0.0
    %1388 = vmatpush.msra.mxu0 0.0
    %1389 = vmatpush.msra.mxu0 0.0
    %1390 = vmatpush.msra.mxu0 0.0
    %1391 = vmatpush.msra.mxu0 0.0
    %1392 = vmatpush.msra.mxu0 0.0
    %1393 = vmatpush.msra.mxu0 0.0
    %1394 = vmatpush.msra.mxu0 0.0
    %1395 = vmatpush.msra.mxu0 0.0
    %1396 = vmatpush.msra.mxu0 0.0
    %1397 = vmatpush.msra.mxu0 0.0
    %1398 = vmatpush.msra.mxu0 %v1055
    %1399 = vmatmul.f32.gmra.mxu0 %v1381
    %v1400 = vpop.f32.mrf.mxu0
    %v1401 = vadd.f32 0.0, %v1400
    %1402 = vdwg.mxu0
    %v1404 = vrot.slane %v1401, 2
    %v1406 = vadd.f32 %v1050, %v1404
    %v1407 = vxor.u32 %v1406, 2147483648
    %v1408 = vmul.f32 %v1407, 1.442695
    %v1409 = vpow.pop %v1408
    %v1410 = vadd.f32 %v1409, 1.0
    %v1411 = vrcp.pop %v1410
    %v1412 = vmul.f32 %v1410, %v1411
    %v1413 = vsub.f32 1.0, %v1412
    %v1414 = vmul.f32 %v1411, %v1413
    %v1415 = vadd.f32 %v1411, %v1414
    %vm1416 = vweird.f32 %v1410
    %vm1417 = vweird.f32 %v1411
    %vm1418 = vmor %vm1416, %vm1417
    %v1419 = vsel %vm1418, %v1411, %v1415
    %v1420 = vand.u32 2147483647, %v1410
    %vm1421 = vcmp.eq.f32.partialorder %v1420, 8.507059e+37
    %v1422 = vand.u32 %v1410, 2147483648
    %v1423 = vor.u32 1.1754944e-38, %v1422
    %v1424 = vsel %vm1421, %v1423, %v1419
    %v1425 = vmul.f32 1.0, %v1424
    %v1426 = vadd.f32 %v1401, %v1102
    %v1428 = vrot.slane %v1426, 2
    %1429 = vrot.lane.b32.xlu0 %v1428, 112
    %v1430 = vpop.permute.xlu0 %1429
    %v1432 = vmul.f32 %v1425, %v1430
    %1434 = vrot.lane.b32.xlu0 %v1432, 16
    %v1435 = vpop.permute.xlu0 %1434
    %v1437 = vadd.f32 %v1050, %v1435
    %v1438 = vtanh.pop %v1437
    %v1439 = vsub.f32 1.0, %v1425
    %1441 = vrot.lane.b32.xlu0 %v1438, 120
    %v1442 = vpop.permute.xlu0 %1441
    %v1444 = vmul.f32 %v1439, %v1442
    %v1445 = vrot.slane %v1341, 6
    %v1447 = vmul.f32 %v1425, %v1445
    %v1448 = vadd.f32 %v1444, %v1447
    %1450 = vrot.lane.b32.xlu0 %v1448, 120
    %v1451 = vpop.permute.xlu0 %1450
    %vm1453 = vcmask 64518
    %v1454 = vsel %vm1453, %v1451, 0.0
    %1455 = vadd.xlane.f32.xlu0 %v1454
    %v1456 = vpop.xlane.xlu0 %1455
    %v1457 = vmul.f32 %v1456, %v1138
    %v1458 = vsub.f32 %v1448, %v1457
    %v1459 = vmul.f32 %v1458, %v1458
    %1461 = vrot.lane.b32.xlu0 %v1459, 120
    %v1462 = vpop.permute.xlu0 %1461
    %v1464 = vsel %vm1453, %v1462, 0.0
    %1465 = vadd.xlane.f32.xlu0 %v1464
    %v1466 = vpop.xlane.xlu0 %1465
    %v1467 = vmul.f32 %v1466, %v1138
    %v1468 = vadd.f32 %v1467, 1e-05
    %v1469 = vrsqrt.pop %v1468
    %v1470 = vmul.f32 %v1469, %v1468
    %v1471 = vmul.f32 %v1470, %v1469
    %v1472 = vmul.f32 0.5, %v1471
    %v1473 = vsub.f32 1.5, %v1472
    %v1474 = vmul.f32 %v1469, %v1473
    %vm1475 = vweird.f32 %v1468
    %vm1476 = vweird.f32 %v1469
    %vm1477 = vmor %vm1475, %vm1476
    %v1478 = vsel %vm1477, %v1469, %v1474
    %v1479 = vmul.f32 %v1458, %v1478
    %1481 = vrot.lane.b32.xlu0 %v1479, 120
    %v1482 = vpop.permute.xlu0 %1481
    %1484 = vst.msk [vmem:[#allocation3] sm:$0xc0] %vm1453, %v1482
    %v1485 = vrot.slane %v1448, 6
    %1486 = vrot.lane.b32.xlu0 %v1485, 120
    %v1487 = vpop.permute.xlu0 %1486
    %v1488 = vsel %vm98, %v1487, 0
    %1490 = vmatpush.msra.mxu0 0.0
    %1491 = vmatpush.msra.mxu0 0.0
    %1492 = vmatpush.msra.mxu0 0.0
    %1493 = vmatpush.msra.mxu0 0.0
    %1494 = vmatpush.msra.mxu0 0.0
    %1495 = vmatpush.msra.mxu0 0.0
    %1496 = vmatpush.msra.mxu0 0.0
    %1497 = vmatpush.msra.mxu0 0.0
    %1498 = vmatpush.msra.mxu0 0.0
    %1499 = vmatpush.msra.mxu0 0.0
    %1500 = vmatpush.msra.mxu0 0.0
    %1501 = vmatpush.msra.mxu0 0.0
    %1502 = vmatpush.msra.mxu0 0.0
    %1503 = vmatpush.msra.mxu0 0.0
    %1504 = vmatpush.msra.mxu0 0.0
    %1505 = vmatpush.msra.mxu0 %v1055
    %1506 = vmatmul.f32.gmra.mxu0 %v1488
    %v1507 = vpop.f32.mrf.mxu0
    %v1508 = vadd.f32 0.0, %v1507
    %1509 = vdwg.mxu0
    %v1510 = vadd.f32 %v1053, %v1508
    %v1511 = vxor.u32 %v1510, 2147483648
    %v1512 = vmul.f32 %v1511, 1.442695
    %v1513 = vpow.pop %v1512
    %v1514 = vadd.f32 %v1513, 1.0
    %v1515 = vrcp.pop %v1514
    %v1516 = vmul.f32 %v1514, %v1515
    %v1517 = vsub.f32 1.0, %v1516
    %v1518 = vmul.f32 %v1515, %v1517
    %v1519 = vadd.f32 %v1515, %v1518
    %vm1520 = vweird.f32 %v1514
    %vm1521 = vweird.f32 %v1515
    %vm1522 = vmor %vm1520, %vm1521
    %v1523 = vsel %vm1522, %v1515, %v1519
    %v1524 = vand.u32 2147483647, %v1514
    %vm1525 = vcmp.eq.f32.partialorder %v1524, 8.507059e+37
    %v1526 = vand.u32 %v1514, 2147483648
    %v1527 = vor.u32 1.1754944e-38, %v1526
    %v1528 = vsel %vm1525, %v1527, %v1523
    %v1529 = vmul.f32 1.0, %v1528
    %v1530 = vadd.f32 %v1508, %v1102
    %1532 = vrot.lane.b32.xlu0 %v1530, 112
    %v1533 = vpop.permute.xlu0 %1532
    %v1535 = vmul.f32 %v1529, %v1533
    %1537 = vrot.lane.b32.xlu0 %v1535, 16
    %v1538 = vpop.permute.xlu0 %1537
    %v1540 = vadd.f32 %v1053, %v1538
    %v1541 = vtanh.pop %v1540
    %v1542 = vsub.f32 1.0, %v1529
    %1544 = vrot.lane.b32.xlu0 %v1541, 120
    %v1545 = vpop.permute.xlu0 %1544
    %v1547 = vmul.f32 %v1542, %v1545
    %v1549 = vmul.f32 %v1529, %v1485
    %v1550 = vadd.f32 %v1547, %v1549
    %1552 = vrot.lane.b32.xlu0 %v1550, 120
    %v1553 = vpop.permute.xlu0 %1552
    %v1555 = vsel %vm1128, %v1553, 0.0
    %1556 = vadd.xlane.f32.xlu0 %v1555
    %v1557 = vpop.xlane.xlu0 %1556
    %v1558 = vmul.f32 %v1557, %v1138
    %v1559 = vsub.f32 %v1550, %v1558
    %v1560 = vmul.f32 %v1559, %v1559
    %1562 = vrot.lane.b32.xlu0 %v1560, 120
    %v1563 = vpop.permute.xlu0 %1562
    %v1565 = vsel %vm1128, %v1563, 0.0
    %1566 = vadd.xlane.f32.xlu0 %v1565
    %v1567 = vpop.xlane.xlu0 %1566
    %v1568 = vmul.f32 %v1567, %v1138
    %v1569 = vadd.f32 %v1568, 1e-05
    %v1570 = vrsqrt.pop %v1569
    %v1571 = vmul.f32 %v1570, %v1569
    %v1572 = vmul.f32 %v1571, %v1570
    %v1573 = vmul.f32 0.5, %v1572
    %v1574 = vsub.f32 1.5, %v1573
    %v1575 = vmul.f32 %v1570, %v1574
    %vm1576 = vweird.f32 %v1569
    %vm1577 = vweird.f32 %v1570
    %vm1578 = vmor %vm1576, %vm1577
    %v1579 = vsel %vm1578, %v1570, %v1575
    %v1580 = vmul.f32 %v1559, %v1579
    %1582 = vrot.lane.b32.xlu0 %v1580, 120
    %v1583 = vpop.permute.xlu0 %1582
    %1585 = vst.msk [vmem:[#allocation3 + $0x8] sm:$0x3] %vm1128, %v1583
    %v1586 = vsel %vm98, %v1553, 0
    %1588 = vmatpush.msra.mxu0 0.0
    %1589 = vmatpush.msra.mxu0 0.0
    %1590 = vmatpush.msra.mxu0 0.0
    %1591 = vmatpush.msra.mxu0 0.0
    %1592 = vmatpush.msra.mxu0 0.0
    %1593 = vmatpush.msra.mxu0 0.0
    %1594 = vmatpush.msra.mxu0 0.0
    %1595 = vmatpush.msra.mxu0 0.0
    %1596 = vmatpush.msra.mxu0 0.0
    %1597 = vmatpush.msra.mxu0 0.0
    %1598 = vmatpush.msra.mxu0 0.0
    %1599 = vmatpush.msra.mxu0 0.0
    %1600 = vmatpush.msra.mxu0 0.0
    %1601 = vmatpush.msra.mxu0 0.0
    %1602 = vmatpush.msra.mxu0 0.0
    %1603 = vmatpush.msra.mxu0 %v1055
    %1604 = vmatmul.f32.gmra.mxu0 %v1586
    %v1605 = vpop.f32.mrf.mxu0
    %v1606 = vadd.f32 0.0, %v1605
    %1607 = vdwg.mxu0
    %v1609 = vrot.slane %v1606, 6
    %v1611 = vadd.f32 %v1053, %v1609
    %v1612 = vxor.u32 %v1611, 2147483648
    %v1613 = vmul.f32 %v1612, 1.442695
    %v1614 = vpow.pop %v1613
    %v1615 = vadd.f32 %v1614, 1.0
    %v1616 = vrcp.pop %v1615
    %v1617 = vmul.f32 %v1615, %v1616
    %v1618 = vsub.f32 1.0, %v1617
    %v1619 = vmul.f32 %v1616, %v1618
    %v1620 = vadd.f32 %v1616, %v1619
    %vm1621 = vweird.f32 %v1615
    %vm1622 = vweird.f32 %v1616
    %vm1623 = vmor %vm1621, %vm1622
    %v1624 = vsel %vm1623, %v1616, %v1620
    %v1625 = vand.u32 2147483647, %v1615
    %vm1626 = vcmp.eq.f32.partialorder %v1625, 8.507059e+37
    %v1627 = vand.u32 %v1615, 2147483648
    %v1628 = vor.u32 1.1754944e-38, %v1627
    %v1629 = vsel %vm1626, %v1628, %v1624
    %v1630 = vmul.f32 1.0, %v1629
    %v1631 = vadd.f32 %v1606, %v1102
    %v1633 = vrot.slane %v1631, 6
    %1634 = vrot.lane.b32.xlu0 %v1633, 112
    %v1635 = vpop.permute.xlu0 %1634
    %v1637 = vmul.f32 %v1630, %v1635
    %1639 = vrot.lane.b32.xlu0 %v1637, 16
    %v1640 = vpop.permute.xlu0 %1639
    %v1642 = vadd.f32 %v1053, %v1640
    %v1643 = vtanh.pop %v1642
    %v1644 = vsub.f32 1.0, %v1630
    %1646 = vrot.lane.b32.xlu0 %v1643, 120
    %v1647 = vpop.permute.xlu0 %1646
    %v1649 = vmul.f32 %v1644, %v1647
    %v1650 = vrot.slane %v1550, 6
    %v1652 = vmul.f32 %v1630, %v1650
    %v1653 = vadd.f32 %v1649, %v1652
    %1655 = vrot.lane.b32.xlu0 %v1653, 120
    %v1656 = vpop.permute.xlu0 %1655
    %v1658 = vsel %vm1239, %v1656, 0.0
    %1659 = vadd.xlane.f32.xlu0 %v1658
    %v1660 = vpop.xlane.xlu0 %1659
    %v1661 = vmul.f32 %v1660, %v1138
    %v1662 = vsub.f32 %v1653, %v1661
    %v1663 = vmul.f32 %v1662, %v1662
    %1665 = vrot.lane.b32.xlu0 %v1663, 120
    %v1666 = vpop.permute.xlu0 %1665
    %v1668 = vsel %vm1239, %v1666, 0.0
    %1669 = vadd.xlane.f32.xlu0 %v1668
    %v1670 = vpop.xlane.xlu0 %1669
    %v1671 = vmul.f32 %v1670, %v1138
    %v1672 = vadd.f32 %v1671, 1e-05
    %v1673 = vrsqrt.pop %v1672
    %v1674 = vmul.f32 %v1673, %v1672
    %v1675 = vmul.f32 %v1674, %v1673
    %v1676 = vmul.f32 0.5, %v1675
    %v1677 = vsub.f32 1.5, %v1676
    %v1678 = vmul.f32 %v1673, %v1677
    %vm1679 = vweird.f32 %v1672
    %vm1680 = vweird.f32 %v1673
    %vm1681 = vmor %vm1679, %vm1680
    %v1682 = vsel %vm1681, %v1673, %v1678
    %v1683 = vmul.f32 %v1662, %v1682
    %1685 = vrot.lane.b32.xlu0 %v1683, 120
    %v1686 = vpop.permute.xlu0 %1685
    %1688 = vst.msk [vmem:[#allocation3 + $0x8] sm:$0xc] %vm1239, %v1686
    %v1689 = vrot.slane %v1653, 2
    %1690 = vrot.lane.b32.xlu0 %v1689, 120
    %v1691 = vpop.permute.xlu0 %1690
    %v1692 = vsel %vm98, %v1691, 0
    %1694 = vmatpush.msra.mxu0 0.0
    %1695 = vmatpush.msra.mxu0 0.0
    %1696 = vmatpush.msra.mxu0 0.0
    %1697 = vmatpush.msra.mxu0 0.0
    %1698 = vmatpush.msra.mxu0 0.0
    %1699 = vmatpush.msra.mxu0 0.0
    %1700 = vmatpush.msra.mxu0 0.0
    %1701 = vmatpush.msra.mxu0 0.0
    %1702 = vmatpush.msra.mxu0 0.0
    %1703 = vmatpush.msra.mxu0 0.0
    %1704 = vmatpush.msra.mxu0 0.0
    %1705 = vmatpush.msra.mxu0 0.0
    %1706 = vmatpush.msra.mxu0 0.0
    %1707 = vmatpush.msra.mxu0 0.0
    %1708 = vmatpush.msra.mxu0 0.0
    %1709 = vmatpush.msra.mxu0 %v1055
    %1710 = vmatmul.f32.gmra.mxu0 %v1692
    %v1711 = vpop.f32.mrf.mxu0
    %v1712 = vadd.f32 0.0, %v1711
    %1713 = vdwg.mxu0
    %v1715 = vrot.slane %v1712, 4
    %v1717 = vadd.f32 %v1053, %v1715
    %v1718 = vxor.u32 %v1717, 2147483648
    %v1719 = vmul.f32 %v1718, 1.442695
    %v1720 = vpow.pop %v1719
    %v1721 = vadd.f32 %v1720, 1.0
    %v1722 = vrcp.pop %v1721
    %v1723 = vmul.f32 %v1721, %v1722
    %v1724 = vsub.f32 1.0, %v1723
    %v1725 = vmul.f32 %v1722, %v1724
    %v1726 = vadd.f32 %v1722, %v1725
    %vm1727 = vweird.f32 %v1721
    %vm1728 = vweird.f32 %v1722
    %vm1729 = vmor %vm1727, %vm1728
    %v1730 = vsel %vm1729, %v1722, %v1726
    %v1731 = vand.u32 2147483647, %v1721
    %vm1732 = vcmp.eq.f32.partialorder %v1731, 8.507059e+37
    %v1733 = vand.u32 %v1721, 2147483648
    %v1734 = vor.u32 1.1754944e-38, %v1733
    %v1735 = vsel %vm1732, %v1734, %v1730
    %v1736 = vmul.f32 1.0, %v1735
    %v1737 = vadd.f32 %v1712, %v1102
    %v1739 = vrot.slane %v1737, 4
    %1740 = vrot.lane.b32.xlu0 %v1739, 112
    %v1741 = vpop.permute.xlu0 %1740
    %v1743 = vmul.f32 %v1736, %v1741
    %1745 = vrot.lane.b32.xlu0 %v1743, 16
    %v1746 = vpop.permute.xlu0 %1745
    %v1748 = vadd.f32 %v1053, %v1746
    %v1749 = vtanh.pop %v1748
    %v1750 = vsub.f32 1.0, %v1736
    %1752 = vrot.lane.b32.xlu0 %v1749, 120
    %v1753 = vpop.permute.xlu0 %1752
    %v1755 = vmul.f32 %v1750, %v1753
    %v1756 = vrot.slane %v1653, 6
    %v1758 = vmul.f32 %v1736, %v1756
    %v1759 = vadd.f32 %v1755, %v1758
    %1761 = vrot.lane.b32.xlu0 %v1759, 120
    %v1762 = vpop.permute.xlu0 %1761
    %v1764 = vsel %vm1346, %v1762, 0.0
    %1765 = vadd.xlane.f32.xlu0 %v1764
    %v1766 = vpop.xlane.xlu0 %1765
    %v1767 = vmul.f32 %v1766, %v1138
    %v1768 = vsub.f32 %v1759, %v1767
    %v1769 = vmul.f32 %v1768, %v1768
    %1771 = vrot.lane.b32.xlu0 %v1769, 120
    %v1772 = vpop.permute.xlu0 %1771
    %v1774 = vsel %vm1346, %v1772, 0.0
    %1775 = vadd.xlane.f32.xlu0 %v1774
    %v1776 = vpop.xlane.xlu0 %1775
    %v1777 = vmul.f32 %v1776, %v1138
    %v1778 = vadd.f32 %v1777, 1e-05
    %v1779 = vrsqrt.pop %v1778
    %v1780 = vmul.f32 %v1779, %v1778
    %v1781 = vmul.f32 %v1780, %v1779
    %v1782 = vmul.f32 0.5, %v1781
    %v1783 = vsub.f32 1.5, %v1782
    %v1784 = vmul.f32 %v1779, %v1783
    %vm1785 = vweird.f32 %v1778
    %vm1786 = vweird.f32 %v1779
    %vm1787 = vmor %vm1785, %vm1786
    %v1788 = vsel %vm1787, %v1779, %v1784
    %v1789 = vmul.f32 %v1768, %v1788
    %1791 = vrot.lane.b32.xlu0 %v1789, 120
    %v1792 = vpop.permute.xlu0 %1791
    %1794 = vst.msk [vmem:[#allocation3 + $0x8] sm:$0x30] %vm1346, %v1792
    %v1795 = vrot.slane %v1759, 4
    %1796 = vrot.lane.b32.xlu0 %v1795, 120
    %v1797 = vpop.permute.xlu0 %1796
    %v1798 = vsel %vm98, %v1797, 0
    %1800 = vmatpush.msra.mxu0 0.0
    %1801 = vmatpush.msra.mxu0 0.0
    %1802 = vmatpush.msra.mxu0 0.0
    %1803 = vmatpush.msra.mxu0 0.0
    %1804 = vmatpush.msra.mxu0 0.0
    %1805 = vmatpush.msra.mxu0 0.0
    %1806 = vmatpush.msra.mxu0 0.0
    %1807 = vmatpush.msra.mxu0 0.0
    %1808 = vmatpush.msra.mxu0 0.0
    %1809 = vmatpush.msra.mxu0 0.0
    %1810 = vmatpush.msra.mxu0 0.0
    %1811 = vmatpush.msra.mxu0 0.0
    %1812 = vmatpush.msra.mxu0 0.0
    %1813 = vmatpush.msra.mxu0 0.0
    %1814 = vmatpush.msra.mxu0 0.0
    %1815 = vmatpush.msra.mxu0 %v1055
    %1816 = vmatmul.f32.gmra.mxu0 %v1798
    %v1817 = vpop.f32.mrf.mxu0
    %v1818 = vadd.f32 0.0, %v1817
    %1819 = vdwg.mxu0
    %v1821 = vrot.slane %v1818, 2
    %v1823 = vadd.f32 %v1053, %v1821
    %v1824 = vxor.u32 %v1823, 2147483648
    %v1825 = vmul.f32 %v1824, 1.442695
    %v1826 = vpow.pop %v1825
    %v1827 = vadd.f32 %v1826, 1.0
    %v1828 = vrcp.pop %v1827
    %v1829 = vmul.f32 %v1827, %v1828
    %v1830 = vsub.f32 1.0, %v1829
    %v1831 = vmul.f32 %v1828, %v1830
    %v1832 = vadd.f32 %v1828, %v1831
    %vm1833 = vweird.f32 %v1827
    %vm1834 = vweird.f32 %v1828
    %vm1835 = vmor %vm1833, %vm1834
    %v1836 = vsel %vm1835, %v1828, %v1832
    %v1837 = vand.u32 2147483647, %v1827
    %vm1838 = vcmp.eq.f32.partialorder %v1837, 8.507059e+37
    %v1839 = vand.u32 %v1827, 2147483648
    %v1840 = vor.u32 1.1754944e-38, %v1839
    %v1841 = vsel %vm1838, %v1840, %v1836
    %v1842 = vmul.f32 1.0, %v1841
    %v1843 = vadd.f32 %v1818, %v1102
    %v1845 = vrot.slane %v1843, 2
    %1846 = vrot.lane.b32.xlu0 %v1845, 112
    %v1847 = vpop.permute.xlu0 %1846
    %v1849 = vmul.f32 %v1842, %v1847
    %1851 = vrot.lane.b32.xlu0 %v1849, 16
    %v1852 = vpop.permute.xlu0 %1851
    %v1854 = vadd.f32 %v1053, %v1852
    %v1855 = vtanh.pop %v1854
    %v1856 = vsub.f32 1.0, %v1842
    %1858 = vrot.lane.b32.xlu0 %v1855, 120
    %v1859 = vpop.permute.xlu0 %1858
    %v1861 = vmul.f32 %v1856, %v1859
    %v1862 = vrot.slane %v1759, 6
    %v1864 = vmul.f32 %v1842, %v1862
    %v1865 = vadd.f32 %v1861, %v1864
    %1867 = vrot.lane.b32.xlu0 %v1865, 120
    %v1868 = vpop.permute.xlu0 %1867
    %v1870 = vsel %vm1453, %v1868, 0.0
    %1871 = vadd.xlane.f32.xlu0 %v1870
    %v1872 = vpop.xlane.xlu0 %1871
    %v1873 = vmul.f32 %v1872, %v1138
    %v1874 = vsub.f32 %v1865, %v1873
    %v1875 = vmul.f32 %v1874, %v1874
    %1877 = vrot.lane.b32.xlu0 %v1875, 120
    %v1878 = vpop.permute.xlu0 %1877
    %v1880 = vsel %vm1453, %v1878, 0.0
    %1881 = vadd.xlane.f32.xlu0 %v1880
    %v1882 = vpop.xlane.xlu0 %1881
    %v1883 = vmul.f32 %v1882, %v1138
    %v1884 = vadd.f32 %v1883, 1e-05
    %v1885 = vrsqrt.pop %v1884
    %v1886 = vmul.f32 %v1885, %v1884
    %v1887 = vmul.f32 %v1886, %v1885
    %v1888 = vmul.f32 0.5, %v1887
    %v1889 = vsub.f32 1.5, %v1888
    %v1890 = vmul.f32 %v1885, %v1889
    %vm1891 = vweird.f32 %v1884
    %vm1892 = vweird.f32 %v1885
    %vm1893 = vmor %vm1891, %vm1892
    %v1894 = vsel %vm1893, %v1885, %v1890
    %v1895 = vmul.f32 %v1874, %v1894
    %1897 = vrot.lane.b32.xlu0 %v1895, 120
    %v1898 = vpop.permute.xlu0 %1897
    %1900 = vst.msk [vmem:[#allocation3 + $0x8] sm:$0xc0] %vm1453, %v1898
    %v1901 = vld [vmem:[#allocation3] sm:$0xff]
    %v1902 = vld [vmem:[#allocation3 + $0x8] sm:$0xff]
    %v1903 = vld [vmem:[%s9] sm:$0xff]
    %v1904 = vld [vmem:[%s10] sm:$0x1]
    %v1906 = vperm.slane %v1904, 0
    %v1909 = vsel %vm98, %v1901, 0
    %v1912 = vsel %vm98, %v1902, 0
    %1914 = vmatpush.msra.mxu0 0.0
    %1915 = vmatpush.msra.mxu0 0.0
    %1916 = vmatpush.msra.mxu0 0.0
    %1917 = vmatpush.msra.mxu0 0.0
    %1918 = vmatpush.msra.mxu0 0.0
    %1919 = vmatpush.msra.mxu0 0.0
    %1920 = vmatpush.msra.mxu0 0.0
    %1921 = vmatpush.msra.mxu0 0.0
    %1922 = vmatpush.msra.mxu0 0.0
    %1923 = vmatpush.msra.mxu0 0.0
    %1924 = vmatpush.msra.mxu0 0.0
    %1925 = vmatpush.msra.mxu0 0.0
    %1926 = vmatpush.msra.mxu0 0.0
    %1927 = vmatpush.msra.mxu0 0.0
    %1928 = vmatpush.msra.mxu0 0.0
    %1929 = vmatpush.msra.mxu0 %v1903
    %1930 = vmatmul.f32.gmra.mxu0 %v1909
    %v1931 = vpop.f32.mrf.mxu0
    %v1932 = vadd.f32 %v1906, %v1931
    %1933 = vmatmul.f32.gmra.mxu0 %v1912
    %v1934 = vpop.f32.mrf.mxu0
    %v1935 = vadd.f32 %v1906, %v1934
    %1936 = vdwg.mxu0
    %vm1937 = vcmask 15360
    %v1938 = vsel %vm1937, %v1932, 0.0
    %1939 = vadd.xlane.f32.xlu0 %v1938
    %v1940 = vpop.xlane.xlu0 %1939
    %v1941 = vsel %vm1937, %v1935, 0.0
    %1942 = vadd.xlane.f32.xlu0 %v1941
    %v1943 = vpop.xlane.xlu0 %1942
    %v1944 = vrcp.pop 2.0
    %v1945 = vmul.f32 2.0, %v1944
    %v1946 = vsub.f32 1.0, %v1945
    %v1947 = vmul.f32 %v1944, %v1946
    %v1948 = vadd.f32 %v1944, %v1947
    %vm1949 = vweird.f32 %v1944
    %v1950 = vsel %vm1949, %v1944, %v1948
    %v1951 = vmul.f32 %v1940, %v1950
    %v1952 = vmul.f32 %v1943, %v1950
    %v1953 = vsub.f32 %v1932, %v1951
    %v1954 = vsub.f32 %v1935, %v1952
    %v1955 = vmul.f32 %v1953, %v1953
    %v1956 = vmul.f32 %v1954, %v1954
    %v1957 = vsel %vm1937, %v1955, 0.0
    %1958 = vadd.xlane.f32.xlu0 %v1957
    %v1959 = vpop.xlane.xlu0 %1958
    %v1960 = vsel %vm1937, %v1956, 0.0
    %1961 = vadd.xlane.f32.xlu0 %v1960
    %v1962 = vpop.xlane.xlu0 %1961
    %v1963 = vmul.f32 %v1959, %v1950
    %v1964 = vmul.f32 %v1962, %v1950
    %v1965 = vadd.f32 %v1963, 1e-05
    %v1966 = vadd.f32 %v1964, 1e-05
    %v1967 = vrsqrt.pop %v1965
    %v1968 = vmul.f32 %v1967, %v1965
    %v1969 = vmul.f32 %v1968, %v1967
    %v1970 = vmul.f32 0.5, %v1969
    %v1971 = vsub.f32 1.5, %v1970
    %v1972 = vmul.f32 %v1967, %v1971
    %vm1973 = vweird.f32 %v1965
    %vm1974 = vweird.f32 %v1967
    %vm1975 = vmor %vm1973, %vm1974
    %v1976 = vsel %vm1975, %v1967, %v1972
    %v1977 = vrsqrt.pop %v1966
    %v1978 = vmul.f32 %v1977, %v1966
    %v1979 = vmul.f32 %v1978, %v1977
    %v1980 = vmul.f32 0.5, %v1979
    %v1981 = vsub.f32 1.5, %v1980
    %v1982 = vmul.f32 %v1977, %v1981
    %vm1983 = vweird.f32 %v1966
    %vm1984 = vweird.f32 %v1977
    %vm1985 = vmor %vm1983, %vm1984
    %v1986 = vsel %vm1985, %v1977, %v1982
    %v1987 = vmul.f32 %v1953, %v1976
    %v1988 = vmul.f32 %v1954, %v1986
    %v1989 = vld [vmem:[%s11] sm:$0x1]
    %v1991 = vperm.slane %v1989, 0
    %v1993 = vmul.f32 %v1987, %v1991
    %v1994 = vmul.f32 %v1988, %v1991
    %v1995 = vld [vmem:[%s12] sm:$0x1]
    %v1997 = vperm.slane %v1995, 0
    %v1999 = vadd.f32 %v1993, %v1997
    %v2000 = vadd.f32 %v1994, %v1997
    %v2001 = vtanh.pop %v1999
    %v2002 = vtanh.pop %v2000
    %v2003 = vld [vmem:[%s13] sm:$0x1]
    %v2005 = vperm.slane %v2003, 0
    %v2007 = vmul.f32 %v2001, %v2005
    %v2008 = vmul.f32 %v2002, %v2005
    %v2009 = vsel %vm1937, %v2007, 0.0
    %2010 = vadd.xlane.f32.xlu0 %v2009
    %v2011 = vpop.xlane.xlu0 %2010
    %v2012 = vsel %vm1937, %v2008, 0.0
    %2013 = vadd.xlane.f32.xlu0 %v2012
    %v2014 = vpop.xlane.xlu0 %2013
    %v2015 = vld [vmem:[#allocation5] sm:$0x1]
    %v2017 = vperm.slane %v2015, 0
    %v2019 = vadd.f32 %v2011, %v2017
    %v2020 = vadd.f32 %v2014, %v2017
    %v2022 = vrot.slane %v2019, 2
    %v2024 = vmax.f32 %v2019, %v2022
    %v2025 = vrot.slane %v2019, 4
    %v2027 = vmax.f32 %v2024, %v2025
    %v2028 = vrot.slane %v2019, 6
    %v2030 = vmax.f32 %v2027, %v2028
    %v2031 = vmax.f32 %v2030, %v2020
    %v2033 = vrot.slane %v2020, 2
    %v2035 = vmax.f32 %v2031, %v2033
    %v2036 = vrot.slane %v2020, 4
    %v2038 = vmax.f32 %v2035, %v2036
    %v2039 = vrot.slane %v2020, 6
    %v2041 = vmax.f32 %v2038, %v2039
    %v2042 = vsub.f32 %v2019, %v2041
    %v2043 = vmul.f32 %v2042, 1.442695
    %v2044 = vpow.pop %v2043
    %v2045 = vadd.f32 %v2044, 0.0
    %v2047 = vrot.slane %v2041, 6
    %v2049 = vsub.f32 %v2019, %v2047
    %v2050 = vmul.f32 %v2049, 1.442695
    %v2051 = vpow.pop %v2050
    %v2053 = vrot.slane %v2051, 2
    %v2055 = vadd.f32 %v2045, %v2053
    %v2056 = vrot.slane %v2041, 4
    %v2058 = vsub.f32 %v2019, %v2056
    %v2059 = vmul.f32 %v2058, 1.442695
    %v2060 = vpow.pop %v2059
    %v2062 = vrot.slane %v2060, 4
    %v2064 = vadd.f32 %v2055, %v2062
    %v2065 = vrot.slane %v2041, 2
    %v2067 = vsub.f32 %v2019, %v2065
    %v2068 = vmul.f32 %v2067, 1.442695
    %v2069 = vpow.pop %v2068
    %v2071 = vrot.slane %v2069, 6
    %v2073 = vadd.f32 %v2064, %v2071
    %v2074 = vsub.f32 %v2020, %v2041
    %v2075 = vmul.f32 %v2074, 1.442695
    %v2076 = vpow.pop %v2075
    %v2077 = vadd.f32 %v2073, %v2076
    %v2078 = vsub.f32 %v2020, %v2047
    %v2079 = vmul.f32 %v2078, 1.442695
    %v2080 = vpow.pop %v2079
    %v2082 = vrot.slane %v2080, 2
    %v2084 = vadd.f32 %v2077, %v2082
    %v2085 = vsub.f32 %v2020, %v2056
    %v2086 = vmul.f32 %v2085, 1.442695
    %v2087 = vpow.pop %v2086
    %v2089 = vrot.slane %v2087, 4
    %v2091 = vadd.f32 %v2084, %v2089
    %v2092 = vsub.f32 %v2020, %v2065
    %v2093 = vmul.f32 %v2092, 1.442695
    %v2094 = vpow.pop %v2093
    %v2096 = vrot.slane %v2094, 6
    %v2098 = vadd.f32 %v2091, %v2096
    %v2099 = vrcp.pop %v2098
    %v2100 = vmul.f32 %v2098, %v2099
    %v2101 = vsub.f32 1.0, %v2100
    %v2102 = vmul.f32 %v2099, %v2101
    %v2103 = vadd.f32 %v2099, %v2102
    %vm2104 = vweird.f32 %v2098
    %vm2105 = vweird.f32 %v2099
    %vm2106 = vmor %vm2104, %vm2105
    %v2107 = vsel %vm2106, %v2099, %v2103
    %v2108 = vand.u32 2147483647, %v2098
    %vm2109 = vcmp.eq.f32.partialorder %v2108, 8.507059e+37
    %v2110 = vand.u32 %v2098, 2147483648
    %v2111 = vor.u32 1.1754944e-38, %v2110
    %v2112 = vsel %vm2109, %v2111, %v2107
    %v2113 = vmul.f32 1.0, %v2112
    %v2114 = vmul.f32 %v2044, %v2113
    %vm2115 = vcmask 1024
    %2116 = vst.msk [vmem:[#allocation4] sm:$0x3] %vm2115, %v2114
    %v2118 = vrot.slane %v2113, 6
    %v2120 = vmul.f32 %v2051, %v2118
    %vm2121 = vcmask 3074
    %2122 = vst.msk [vmem:[#allocation4] sm:$0xc] %vm2121, %v2120
    %v2123 = vrot.slane %v2113, 4
    %v2125 = vmul.f32 %v2060, %v2123
    %vm2126 = vcmask 5124
    %2127 = vst.msk [vmem:[#allocation4] sm:$0x30] %vm2126, %v2125
    %v2128 = vrot.slane %v2113, 2
    %v2130 = vmul.f32 %v2069, %v2128
    %vm2131 = vcmask 7174
    %2132 = vst.msk [vmem:[#allocation4] sm:$0xc0] %vm2131, %v2130
    %v2133 = vmul.f32 %v2076, %v2113
    %2134 = vst.msk [vmem:[#allocation4 + $0x8] sm:$0x3] %vm2115, %v2133
    %v2135 = vmul.f32 %v2080, %v2118
    %2136 = vst.msk [vmem:[#allocation4 + $0x8] sm:$0xc] %vm2121, %v2135
    %v2137 = vmul.f32 %v2087, %v2123
    %2138 = vst.msk [vmem:[#allocation4 + $0x8] sm:$0x30] %vm2126, %v2137
    %v2139 = vmul.f32 %v2094, %v2128
    %2140 = vst.msk [vmem:[#allocation4 + $0x8] sm:$0xc0] %vm2131, %v2139
    %v2141 = vld [vmem:[#allocation4] sm:$0xff]
    %v2142 = vld [vmem:[#allocation4 + $0x8] sm:$0xff]
    %v2143 = vld [vmem:[#allocation3] sm:$0xff]
    %v2144 = vld [vmem:[#allocation3 + $0x8] sm:$0xff]
    %2146 = vset.pattern.permute.xlu0 0
    %2147 = vperm.xlu0 %2146, %v2141
    %v2148 = vpop.permute.xlu0 %2147
    %2151 = vset.pattern.permute.xlu0 0
    %2152 = vperm.xlu0 %2151, %v2142
    %v2153 = vpop.permute.xlu0 %2152
    %v2155 = vmul.f32 %v2148, %v2143
    %v2156 = vmul.f32 %v2153, %v2144
    %v2157 = vmax.f32 %v2155, 0.0
    %v2158 = vmax.f32 %v2156, 0.0
    %2159 = vst.msk [vmem:[%s18] sm:$0xff] %vm98, %v2157
    %2160 = vst.msk [vmem:[%s18 + $0x8] sm:$0xff] %vm98, %v2158
    // Predicated region
    $region82: #{tpu_custom_call.1} parent=1 // pred_check
      _
    $region83: #{tpu_custom_call.1} parent=1 // pred_check_branch
      %2162 = sbr.rel (0) target = $region85
    $region84: #{tpu_custom_call.1} parent=1 // pred_region
      _
    $region85: #{tpu_custom_call.1} parent=1 // pred_fallthru
      _
    // Predicated region
    $region86: #{tpu_custom_call.1} parent=1 // pred_check
      _
    $region87: #{tpu_custom_call.1} parent=1 // pred_check_branch
      %2164 = sbr.rel (0) target = $region89
    $region88: #{tpu_custom_call.1} parent=1 // pred_region
      %2166 = vsyncadd [#allocation8], 0
      %s2168 = sshll.u32 [#allocation11], 4
      %s2169 = int_to_ptr.vmem [resolvable:$true] %s2168
      %s2170 = sshll.u32 %s19, 4
      %s2171 = int_to_ptr.hbm [resolvable:$true] %s2170
      %2173 = dma.vmem_to_hbm [thread:$0]  %s2169, 128, %s2171, [#allocation8]
    $region89: #{tpu_custom_call.1} parent=1 // pred_fallthru
      _
    // Predicated region
    $region90: #{tpu_custom_call.1} parent=1 // pred_check
      _
    $region91: #{tpu_custom_call.1} parent=1 // pred_check_branch
      %2175 = sbr.rel (0) target = $region93
    $region92: #{tpu_custom_call.1} parent=1 // pred_region
      _
    $region93: #{tpu_custom_call.1} parent=1 // pred_fallthru
      _
    // Predicated region
    $region94: #{tpu_custom_call.1} parent=1 // pred_check
      _
    $region95: #{tpu_custom_call.1} parent=1 // pred_check_branch
      %2177 = sbr.rel (0) target = $region97
    $region96: #{tpu_custom_call.1} parent=1 // pred_region
      %2179 = dma.done [#allocation8], 128
    $region97: #{tpu_custom_call.1} parent=1 // pred_fallthru
      _
    %2180 = vsyncpa [#allocation7], 1
    %2181 = vsyncpa [#allocation10], 1
    %2182 = vsyncpa [#allocation8], 1

</llo_original>
